<compile_context>
chip_gen: v5e
topology: v5e:2x2
jax: 0.10.0
libtpu: 0.0.40
codegen_flags: <defaults>
</compile_context>

<pallas_src>
import jax
import jax.numpy as jnp
from jax.experimental import pallas as pl
from jax.experimental.pallas import tpu as pltpu

D_IN = 65
D_OUT = 60
D_IN_PAD = 128    # 65 -> 128 lane-dense input
D_OUT_PAD = 128   # 60 -> 128 lane-dense output


def mlp_kernel(x_ref,
               w1_ref, b1_ref,
               w2_ref, b2_ref,
               w3_ref, b3_ref,
               w4_ref, b4_ref,
               o_ref):
    mm_dt = w1_ref.dtype   # matmul-input dtype (bf16 by default)
    ep_dt = b1_ref.dtype   # epilogue (bias + ReLU) dtype (bf16 on v6e/v7x, f32 on v5e)

    # Layer 1: (tb, 128) @ (128, 512); x already padded + cast in the wrapper.
    h = jnp.dot(x_ref[...], w1_ref[...], preferred_element_type=jnp.float32)
    h = jnp.maximum(h.astype(ep_dt) + b1_ref[...], 0).astype(mm_dt)
    # Layer 2: (tb, 512) @ (512, 256)
    h = jnp.dot(h, w2_ref[...], preferred_element_type=jnp.float32)
    h = jnp.maximum(h.astype(ep_dt) + b2_ref[...], 0).astype(mm_dt)
    # Layer 3: (tb, 256) @ (256, 128)
    h = jnp.dot(h, w3_ref[...], preferred_element_type=jnp.float32)
    h = jnp.maximum(h.astype(ep_dt) + b3_ref[...], 0).astype(mm_dt)
    # Layer 4: (tb, 128) @ (128, 128) + b4 (no activation; cols >= 60 are zero pad)
    h = jnp.dot(h, w4_ref[...], preferred_element_type=jnp.float32)
    o_ref[...] = (h + b4_ref[...]).astype(o_ref.dtype)


def prepare_params(params, *, matmul_dtype=jnp.bfloat16,
                   epilogue_dtype=jnp.bfloat16):
    """One-time layout plumbing: pad 65->128 (w1 rows) / 60->128 (w4, b4 cols)
    and cast weights (and layer-1..3 biases) to the kernel dtypes. Call once
    at init, not per forward."""
    (w1, b1), (w2, b2), (w3, b3), (w4, b4) = params
    w1p = jnp.zeros((D_IN_PAD, 512), matmul_dtype).at[:D_IN, :].set(
        w1.astype(matmul_dtype))
    w2p = w2.astype(matmul_dtype)
    w3p = w3.astype(matmul_dtype)
    w4p = jnp.zeros((128, D_OUT_PAD), matmul_dtype).at[:, :D_OUT].set(
        w4.astype(matmul_dtype))
    b1p = b1.reshape(1, 512).astype(epilogue_dtype)
    b2p = b2.reshape(1, 256).astype(epilogue_dtype)
    b3p = b3.reshape(1, 128).astype(epilogue_dtype)
    # Final bias/add stays f32 (output dtype); padded cols are zero -> inert.
    b4p = jnp.zeros((1, D_OUT_PAD), jnp.float32).at[:, :D_OUT].set(
        b4.reshape(1, D_OUT).astype(jnp.float32))
    return (w1p, b1p, w2p, b2p, w3p, b3p, w4p, b4p)


def _pick_tb(batch):
    """Batch tile: multiple of 256 (fills v6e/v7x MXU rows), >= 2 grid steps
    once batch exceeds one tile (keeps both v7x TCs busy), capped at 2048 to
    amortize per-step overhead without VMEM pressure."""
    tiles256 = pl.cdiv(max(int(batch), 1), 256)
    half = pl.cdiv(tiles256, 2) * 256
    return int(min(2048, max(256, half)))


def trajectory_prediction_net(x, prepared_params, *, tb=None,
                              vmem_limit_bytes=None):
    """x: (B, 65) float32.  Returns (B, 60) float32 (== .view(-1, 30*2))."""
    w1p, b1p, w2p, b2p, w3p, b3p, w4p, b4p = prepared_params
    B, d_in = x.shape
    assert d_in == D_IN
    mm_dt = w1p.dtype

    if tb is None:
        tb = _pick_tb(B)
    Bp = pl.cdiv(B, tb) * tb

    # Pad batch to a tile multiple and 65 -> 128 lanes, and cast to the matmul
    # dtype in one op (halves the per-step activation DMA vs f32 and removes
    # the in-kernel cast of x).
    xp = jnp.zeros((Bp, D_IN_PAD), mm_dt).at[:B, :D_IN].set(x.astype(mm_dt))

    # Weights / biases are small (< 0.5 MiB at bf16) -> each stays a single
    # full block resident in VMEM; only the activation tile moves per step.
    def full_spec(arr):
        return pl.BlockSpec(arr.shape, lambda i: (0, 0))

    cp_kwargs = dict(dimension_semantics=("parallel",))
    # Rough per-step VMEM footprint (double-buffered I/O tiles + resident
    # weights + largest f32 intermediate); only raise the scoped limit if the
    # default would actually be exceeded, and never blanket-reserve on v7x.
    in_itemsize = jnp.dtype(mm_dt).itemsize
    weight_bytes = sum(int(a.size) * jnp.dtype(a.dtype).itemsize
                       for a in (w1p, b1p, w2p, b2p, w3p, b3p, w4p, b4p))
    footprint = (2 * tb * D_IN_PAD * in_itemsize      # x tile, double-buffered
                 + 2 * tb * D_OUT_PAD * 4             # out tile, double-buffered
                 + 2 * weight_bytes                   # resident weights (2 bufs)
                 + tb * 512 * 4)                      # largest f32 intermediate
    if vmem_limit_bytes is None and footprint > 30 * 1024 * 1024:
        vmem_limit_bytes = min(int(footprint * 3 // 2), 100 * 1024 * 1024)
    if vmem_limit_bytes is not None:
        cp_kwargs["vmem_limit_bytes"] = int(vmem_limit_bytes)

    out = pl.pallas_call(
        mlp_kernel,
        out_shape=jax.ShapeDtypeStruct((Bp, D_OUT_PAD), jnp.float32),
        grid=(Bp // tb,),
        in_specs=[
            pl.BlockSpec((tb, D_IN_PAD), lambda i: (i, 0)),   # x tile
            full_spec(w1p), full_spec(b1p),
            full_spec(w2p), full_spec(b2p),
            full_spec(w3p), full_spec(b3p),
            full_spec(w4p), full_spec(b4p),
        ],
        out_specs=pl.BlockSpec((tb, D_OUT_PAD), lambda i: (i, 0)),
        compiler_params=pltpu.CompilerParams(**cp_kwargs),
    )(xp, w1p, b1p, w2p, b2p, w3p, b3p, w4p, b4p)

    # Drop the batch / feature padding; already (B, 60) == .view(-1, 30*2).
    return out[:B, :D_OUT].reshape(-1, 30 * 2)


def init_params(key):
    """Deterministic synthetic parameters matching nn.Linear shapes.

    PyTorch nn.Linear(in, out) has weight (out, in); we store the transpose
    (in, out) and a (1, out) bias row, all in f32 (cast once in prepare_params)."""
    dims = [(D_IN, 512), (512, 256), (256, 128), (128, D_OUT)]
    params = []
    for (fan_in, fan_out) in dims:
        key, kw, kb = jax.random.split(key, 3)
        bound = 1.0 / jnp.sqrt(jnp.float32(fan_in))
        w = jax.random.uniform(kw, (fan_in, fan_out), jnp.float32,
                               minval=-bound, maxval=bound)
        b = jax.random.uniform(kb, (1, fan_out), jnp.float32,
                               minval=-bound, maxval=bound)
        params.append((w, b))
    return params


def reference_forward(x, params, *, matmul_dtype=jnp.bfloat16,
                      epilogue_dtype=jnp.bfloat16):
    """Pure-JAX reference using the same precision policy as the kernel.
    Note: bf16 matmuls differ from the f32 PyTorch model by ~1e-2 rel error;
    pass matmul_dtype=epilogue_dtype=jnp.float32 for full-f32 parity."""
    h = x
    n = len(params)
    for li, (w, b) in enumerate(params):
        h = jnp.dot(h.astype(matmul_dtype), w.astype(matmul_dtype),
                    preferred_element_type=jnp.float32)
        if li < n - 1:
            h = jnp.maximum(h.astype(epilogue_dtype)
                            + b.reshape(1, -1).astype(epilogue_dtype), 0)
        else:
            h = h + b.reshape(1, -1)
    return h.astype(jnp.float32).reshape(-1, 30 * 2)


if __name__ == "__main__":
    key = jax.random.PRNGKey(0)
    key, kx = jax.random.split(key)
    params = init_params(key)
    prepared = prepare_params(params)   # one-time pad + bf16 cast

    # Small, non-tile-multiple batch: exercises the pad path and gives a
    # 2-step grid (tb=256, Bp=512) so the parallel axis is actually multi-step.
    batch = 300
    x = jax.random.normal(kx, (batch, D_IN), jnp.float32)

    out = trajectory_prediction_net(x, prepared)
    out = jax.block_until_ready(out)

    ref = reference_forward(x, params)
    assert out.shape == (batch, D_OUT)
    assert jnp.allclose(out, ref, atol=2e-2, rtol=2e-2), "mismatch vs reference"

    print("KERNEL_OK")
</pallas_src>

<mosaic_0001>
module attributes {stable_mosaic.version = 11 : i64} {
  func.func @mlp_kernel(%arg0: i32, %arg1: memref<256x128xbf16, #tpu.memory_space<vmem>>, %arg2: memref<128x512xbf16, #tpu.memory_space<vmem>>, %arg3: memref<1x512xbf16, #tpu.memory_space<vmem>>, %arg4: memref<512x256xbf16, #tpu.memory_space<vmem>>, %arg5: memref<1x256xbf16, #tpu.memory_space<vmem>>, %arg6: memref<256x128xbf16, #tpu.memory_space<vmem>>, %arg7: memref<1x128xbf16, #tpu.memory_space<vmem>>, %arg8: memref<128x128xbf16, #tpu.memory_space<vmem>>, %arg9: memref<1x128xf32, #tpu.memory_space<vmem>>, %arg10: memref<256x128xf32, #tpu.memory_space<vmem>>) attributes {dimension_semantics = [#tpu.dimension_semantics<parallel>], iteration_bounds = array<i64: 2>, scalar_prefetch = 0 : i64, scratch_operands = 0 : i64, tpu.core_type = #tpu.core_type<tc>, window_params = [{transform_indices = @transform_0, window_bounds = array<i64: 256, 128>}, {pipeline_mode = #tpu.pipeline_mode<synchronous>, transform_indices = @transform_1, window_bounds = array<i64: 128, 512>}, {pipeline_mode = #tpu.pipeline_mode<synchronous>, transform_indices = @transform_2, window_bounds = array<i64: 1, 512>}, {pipeline_mode = #tpu.pipeline_mode<synchronous>, transform_indices = @transform_3, window_bounds = array<i64: 512, 256>}, {pipeline_mode = #tpu.pipeline_mode<synchronous>, transform_indices = @transform_4, window_bounds = array<i64: 1, 256>}, {pipeline_mode = #tpu.pipeline_mode<synchronous>, transform_indices = @transform_5, window_bounds = array<i64: 256, 128>}, {pipeline_mode = #tpu.pipeline_mode<synchronous>, transform_indices = @transform_6, window_bounds = array<i64: 1, 128>}, {pipeline_mode = #tpu.pipeline_mode<synchronous>, transform_indices = @transform_7, window_bounds = array<i64: 128, 128>}, {pipeline_mode = #tpu.pipeline_mode<synchronous>, transform_indices = @transform_8, window_bounds = array<i64: 1, 128>}, {transform_indices = @transform_9, window_bounds = array<i64: 256, 128>}]} {
    %c0 = arith.constant 0 : index
    %c0_0 = arith.constant 0 : index
    %0 = vector.load %arg1[%c0, %c0_0] : memref<256x128xbf16, #tpu.memory_space<vmem>>, vector<256x128xbf16>
    %c0_1 = arith.constant 0 : index
    %c0_2 = arith.constant 0 : index
    %1 = vector.load %arg2[%c0_1, %c0_2] : memref<128x512xbf16, #tpu.memory_space<vmem>>, vector<128x512xbf16>
    %cst = arith.constant dense<0.000000e+00> : vector<256x512xf32>
    %2 = tpu.matmul %0, %1, %cst {dimension_numbers = #tpu.dot_dimension_numbers<[1], [0], [0], [1], [0, 0, 1, 1], [], []>} : vector<256x128xbf16>, vector<128x512xbf16>, vector<256x512xf32> -> vector<256x512xf32>
    %3 = arith.truncf %2 : vector<256x512xf32> to vector<256x512xbf16>
    %c0_3 = arith.constant 0 : index
    %c0_4 = arith.constant 0 : index
    %4 = vector.load %arg3[%c0_3, %c0_4] : memref<1x512xbf16, #tpu.memory_space<vmem>>, vector<1x512xbf16>
    %5 = vector.broadcast %4 : vector<1x512xbf16> to vector<256x512xbf16>
    %6 = arith.addf %3, %5 : vector<256x512xbf16>
    %cst_5 = arith.constant 0.000000e+00 : bf16
    %7 = vector.broadcast %cst_5 : bf16 to vector<256x512xbf16>
    %8 = arith.maximumf %6, %7 : vector<256x512xbf16>
    %c0_6 = arith.constant 0 : index
    %c0_7 = arith.constant 0 : index
    %9 = vector.load %arg4[%c0_6, %c0_7] : memref<512x256xbf16, #tpu.memory_space<vmem>>, vector<512x256xbf16>
    %cst_8 = arith.constant dense<0.000000e+00> : vector<256x256xf32>
    %10 = tpu.matmul %8, %9, %cst_8 {dimension_numbers = #tpu.dot_dimension_numbers<[1], [0], [0], [1], [0, 0, 1, 1], [], []>} : vector<256x512xbf16>, vector<512x256xbf16>, vector<256x256xf32> -> vector<256x256xf32>
    %11 = arith.truncf %10 : vector<256x256xf32> to vector<256x256xbf16>
    %c0_9 = arith.constant 0 : index
    %c0_10 = arith.constant 0 : index
    %12 = vector.load %arg5[%c0_9, %c0_10] : memref<1x256xbf16, #tpu.memory_space<vmem>>, vector<1x256xbf16>
    %13 = vector.broadcast %12 : vector<1x256xbf16> to vector<256x256xbf16>
    %14 = arith.addf %11, %13 : vector<256x256xbf16>
    %cst_11 = arith.constant 0.000000e+00 : bf16
    %15 = vector.broadcast %cst_11 : bf16 to vector<256x256xbf16>
    %16 = arith.maximumf %14, %15 : vector<256x256xbf16>
    %c0_12 = arith.constant 0 : index
    %c0_13 = arith.constant 0 : index
    %17 = vector.load %arg6[%c0_12, %c0_13] : memref<256x128xbf16, #tpu.memory_space<vmem>>, vector<256x128xbf16>
    %cst_14 = arith.constant dense<0.000000e+00> : vector<256x128xf32>
    %18 = tpu.matmul %16, %17, %cst_14 {dimension_numbers = #tpu.dot_dimension_numbers<[1], [0], [0], [1], [0, 0, 1, 1], [], []>} : vector<256x256xbf16>, vector<256x128xbf16>, vector<256x128xf32> -> vector<256x128xf32>
    %19 = arith.truncf %18 : vector<256x128xf32> to vector<256x128xbf16>
    %c0_15 = arith.constant 0 : index
    %c0_16 = arith.constant 0 : index
    %20 = vector.load %arg7[%c0_15, %c0_16] : memref<1x128xbf16, #tpu.memory_space<vmem>>, vector<1x128xbf16>
    %21 = vector.broadcast %20 : vector<1x128xbf16> to vector<256x128xbf16>
    %22 = arith.addf %19, %21 : vector<256x128xbf16>
    %cst_17 = arith.constant 0.000000e+00 : bf16
    %23 = vector.broadcast %cst_17 : bf16 to vector<256x128xbf16>
    %24 = arith.maximumf %22, %23 : vector<256x128xbf16>
    %c0_18 = arith.constant 0 : index
    %c0_19 = arith.constant 0 : index
    %25 = vector.load %arg8[%c0_18, %c0_19] : memref<128x128xbf16, #tpu.memory_space<vmem>>, vector<128x128xbf16>
    %cst_20 = arith.constant dense<0.000000e+00> : vector<256x128xf32>
    %26 = tpu.matmul %24, %25, %cst_20 {dimension_numbers = #tpu.dot_dimension_numbers<[1], [0], [0], [1], [0, 0, 1, 1], [], []>} : vector<256x128xbf16>, vector<128x128xbf16>, vector<256x128xf32> -> vector<256x128xf32>
    %c0_21 = arith.constant 0 : index
    %c0_22 = arith.constant 0 : index
    %27 = vector.load %arg9[%c0_21, %c0_22] : memref<1x128xf32, #tpu.memory_space<vmem>>, vector<1x128xf32>
    %28 = vector.broadcast %27 : vector<1x128xf32> to vector<256x128xf32>
    %29 = arith.addf %26, %28 : vector<256x128xf32>
    %c0_23 = arith.constant 0 : index
    %c0_24 = arith.constant 0 : index
    %30 = vector.load %arg10[%c0_23, %c0_24] : memref<256x128xf32, #tpu.memory_space<vmem>>, vector<256x128xf32>
    tpu.vector_store %arg10[%c0_23, %c0_24], %29 {strides = array<i32>} : memref<256x128xf32, #tpu.memory_space<vmem>>, vector<256x128xf32>,
    return
  }
  func.func @transform_0(%arg0: i32) -> (i32, i32) {
    %c0_i32 = arith.constant 0 : i32
    %c0_i32_0 = arith.constant 0 : i32
    return %arg0, %c0_i32 : i32, i32
  }
  func.func @transform_1(%arg0: i32) -> (i32, i32) {
    %c0_i32 = arith.constant 0 : i32
    %c0_i32_0 = arith.constant 0 : i32
    %c0_i32_1 = arith.constant 0 : i32
    return %c0_i32, %c0_i32_0 : i32, i32
  }
  func.func @transform_2(%arg0: i32) -> (i32, i32) {
    %c0_i32 = arith.constant 0 : i32
    %c0_i32_0 = arith.constant 0 : i32
    %c0_i32_1 = arith.constant 0 : i32
    return %c0_i32, %c0_i32_0 : i32, i32
  }
  func.func @transform_3(%arg0: i32) -> (i32, i32) {
    %c0_i32 = arith.constant 0 : i32
    %c0_i32_0 = arith.constant 0 : i32
    %c0_i32_1 = arith.constant 0 : i32
    return %c0_i32, %c0_i32_0 : i32, i32
  }
  func.func @transform_4(%arg0: i32) -> (i32, i32) {
    %c0_i32 = arith.constant 0 : i32
    %c0_i32_0 = arith.constant 0 : i32
    %c0_i32_1 = arith.constant 0 : i32
    return %c0_i32, %c0_i32_0 : i32, i32
  }
  func.func @transform_5(%arg0: i32) -> (i32, i32) {
    %c0_i32 = arith.constant 0 : i32
    %c0_i32_0 = arith.constant 0 : i32
    %c0_i32_1 = arith.constant 0 : i32
    return %c0_i32, %c0_i32_0 : i32, i32
  }
  func.func @transform_6(%arg0: i32) -> (i32, i32) {
    %c0_i32 = arith.constant 0 : i32
    %c0_i32_0 = arith.constant 0 : i32
    %c0_i32_1 = arith.constant 0 : i32
    return %c0_i32, %c0_i32_0 : i32, i32
  }
  func.func @transform_7(%arg0: i32) -> (i32, i32) {
    %c0_i32 = arith.constant 0 : i32
    %c0_i32_0 = arith.constant 0 : i32
    %c0_i32_1 = arith.constant 0 : i32
    return %c0_i32, %c0_i32_0 : i32, i32
  }
  func.func @transform_8(%arg0: i32) -> (i32, i32) {
    %c0_i32 = arith.constant 0 : i32
    %c0_i32_0 = arith.constant 0 : i32
    %c0_i32_1 = arith.constant 0 : i32
    return %c0_i32, %c0_i32_0 : i32, i32
  }
  func.func @transform_9(%arg0: i32) -> (i32, i32) {
    %c0_i32 = arith.constant 0 : i32
    %c0_i32_0 = arith.constant 0 : i32
    return %arg0, %c0_i32 : i32, i32
  }
}

</mosaic_0001>

<llo_original>
// kernel: tpu_custom_call.1
$region0: #{tpu_custom_call.1}
  #allocation0 [shape = 'u32[]', space=smem, size = 0x4, offset = 0x4, fixed_abs, tag = 'smem constant byte address 0x4 - core index']
  #allocation1 [shape = 'u32[72,128]{1,0:T(1,128)}', space=vmem, size = 0x9000, scoped, tag = 'internal scratch']
  %s0 = inlined_call_operand.hbm [shape: bf16[512,128], index: 0, kind: input, shape index: {}]
  %s1 = inlined_call_operand.hbm [shape: bf16[128,512], index: 1, kind: input, shape index: {}]
  %s2 = inlined_call_operand.hbm [shape: bf16[1,512], index: 2, kind: input, shape index: {}]
  %s3 = inlined_call_operand.hbm [shape: bf16[512,256], index: 3, kind: input, shape index: {}]
  %s4 = inlined_call_operand.vmem [shape: bf16[1,256], index: 4, kind: input, shape index: {}]
  %s5 = inlined_call_operand.hbm [shape: bf16[256,128], index: 5, kind: input, shape index: {}]
  %s6 = inlined_call_operand.vmem [shape: bf16[1,128], index: 6, kind: input, shape index: {}]
  %s7 = inlined_call_operand.hbm [shape: bf16[128,128], index: 7, kind: input, shape index: {}]
  %s8 = inlined_call_operand.vmem [shape: f32[1,128], index: 8, kind: input, shape index: {}]
  %s9 = inlined_call_operand.hbm [shape: f32[512,128], index: 9, kind: output, shape index: {}]
  %s10 = sld [smem:[#allocation0]]
  $region93: #{tpu_custom_call.1} parent=0
    _
  %s12 = ssub.s32 1, %s10
  %s13 = scalar_select 0, %s12, %s10
  $region1: #{tpu_custom_call.1} parent=0
    #allocation2 [shape = 'u8[131072]{0}', space=vmem, size = 0x20000, scoped, tag = 'input window, operand 0']
    #allocation3 [shape = 's32[2]{0}', space=sflag, size = 0x8, scoped, tag = 'scoped memory for tpu_custom_call.1']
    #allocation4 [shape = 's32[2]{0}', space=sflag, size = 0x8, scoped, tag = 'scoped memory for tpu_custom_call.1']
    #allocation5 [shape = 'u8[131072]{0}', space=vmem, size = 0x20000, scoped, tag = 'input window, operand 1, single buffered']
    #allocation6 [shape = 's32[1]{0}', space=sflag, size = 0x4, scoped, tag = 'scoped memory for tpu_custom_call.1']
    #allocation7 [shape = 'u8[2048]{0}', space=vmem, size = 0x800, scoped, tag = 'input window, operand 2, single buffered']
    #allocation8 [shape = 'u8[262144]{0}', space=vmem, size = 0x40000, scoped, tag = 'input window, operand 3, single buffered']
    #allocation9 [shape = 's32[1]{0}', space=sflag, size = 0x4, scoped, tag = 'scoped memory for tpu_custom_call.1']
    #allocation10 [shape = 'u8[65536]{0}', space=vmem, size = 0x10000, scoped, tag = 'input window, operand 5, single buffered']
    #allocation11 [shape = 'u8[32768]{0}', space=vmem, size = 0x8000, scoped, tag = 'input window, operand 7, single buffered']
    #allocation12 [shape = 's32[1]{0}', space=sflag, size = 0x4, scoped, tag = 'scoped memory for tpu_custom_call.1']
    #allocation13 [shape = 'u8[262144]{0}', space=vmem, size = 0x40000, scoped, tag = 'output window, operand 0']
    %14 = vsyncpa [#allocation3], 0
    %s15 = scalar_lea.sflag [#allocation3], 1
    %16 = vsyncpa %s15, 0
    %17 = vsyncpa [#allocation6], 0
    %18 = vsyncpa [#allocation9], 0
    %19 = vsyncpa [#allocation12], 0
    %20 = vsyncpa [#allocation4], 0
    %s21 = scalar_lea.sflag [#allocation4], 1
    %22 = vsyncpa %s21, 0
    loop: start=0, step=1, limit=4
    $region2: #{tpu_custom_call.1} parent=1 // loop_pre_header
      _
    $region3: #{tpu_custom_call.1} parent=1 // loop_header
      %s24 = sphi 0, %s28
      %p25 = scmp.ge.s32.totalorder %s24, 4
      %s34 = sphi 0, %s36
      %s37 = sphi 0, %s34
      %s38 = sphi 0, %s37
      %s54 = sphi 0, %s38
      %s58 = sphi 0, %s58
      %s60 = sphi 0, %s58
      %s61 = sphi 0, %s60
      %s75 = sphi 0, %s61
      %s79 = sphi 0, %s79
      %s81 = sphi 0, %s79
      %s82 = sphi 0, %s81
      %s96 = sphi 0, %s82
      %s100 = sphi 0, %s100
      %s102 = sphi 0, %s100
      %s103 = sphi 0, %s102
      %s117 = sphi 0, %s103
      %s121 = sphi 0, %s121
      %s123 = sphi 0, %s121
      %s124 = sphi 0, %s123
      %s138 = sphi 0, %s124
      %s142 = sphi 0, %s142
      %s144 = sphi 0, %s142
      %s145 = sphi 0, %s144
      %s159 = sphi 0, %s145
      %s163 = sphi 0, %s163
      %s165 = sphi 0, %s163
      %s166 = sphi 0, %s165
      %s180 = sphi 0, %s166
      %s184 = sphi 0, %s184
      %s186 = sphi 0, %s184
      %s187 = sphi 0, %s186
      %s201 = sphi 0, %s187
      %s205 = sphi 0, %s205
      %s207 = sphi 0, %s205
      %s208 = sphi 0, %s207
      %s222 = sphi 0, %s208
      %s228 = sphi 0, %s230
      %s231 = sphi 0, %s228
      %s232 = sphi 0, %s231
      %s248 = sphi 0, %s232
    $region4: #{tpu_custom_call.1} parent=1 // loop_header_branch
      %27 = sbr.rel (%p25) target = $region8
    $region5: #{tpu_custom_call.1} parent=1 // loop_body
      %s29 = ssub.s32 %s24, 1
      %s30 = ssub.s32 %s24, 2
      %s31 = sadd.s32 %s24, 1
      %s32 = ssub.s32 %s24, %s31
      %p33 = scmp.eq.s32.totalorder %s32, 0
      %s35 = sadd.s32 %s34, 1
      %s36 = scalar_select %p33, %s34, %s35
      %p39 = pneg %p33
      %p40 = scmp.eq.s32.totalorder %s24, 1
      %p41 = por %p39, %p40
      %p42 = scmp.ne.s32.totalorder %s34, %s37
      %p43 = scmp.eq.s32.totalorder %s24, 0
      %p44 = por %p42, %p43
      %p45 = scmp.ne.s32.totalorder %s34, %s37
      %p46 = scmp.eq.s32.totalorder %s29, 1
      %p47 = por %p45, %p46
      %p48 = scmp.ne.s32.totalorder %s37, %s38
      %p49 = scmp.eq.s32.totalorder %s29, 0
      %p50 = por %p48, %p49
      %p51 = scmp.ne.s32.totalorder %s37, %s38
      %p52 = scmp.eq.s32.totalorder %s30, 1
      %p53 = por %p51, %p52
      %p55 = scmp.ne.s32.totalorder %s38, %s54
      %p56 = scmp.eq.s32.totalorder %s30, 0
      %p57 = por %p55, %p56
      %s59 = sadd.s32 %s58, 1
      %p62 = scmp.eq.s32.totalorder %s24, 1
      %p63 = scmp.ne.s32.totalorder %s58, %s60
      %p64 = scmp.eq.s32.totalorder %s24, 0
      %p65 = por %p63, %p64
      %p66 = scmp.ne.s32.totalorder %s58, %s60
      %p67 = scmp.eq.s32.totalorder %s29, 1
      %p68 = por %p66, %p67
      %p69 = scmp.ne.s32.totalorder %s60, %s61
      %p70 = scmp.eq.s32.totalorder %s29, 0
      %p71 = por %p69, %p70
      %p72 = scmp.ne.s32.totalorder %s60, %s61
      %p73 = scmp.eq.s32.totalorder %s30, 1
      %p74 = por %p72, %p73
      %p76 = scmp.ne.s32.totalorder %s61, %s75
      %p77 = scmp.eq.s32.totalorder %s30, 0
      %p78 = por %p76, %p77
      %s80 = sadd.s32 %s79, 1
      %p83 = scmp.eq.s32.totalorder %s24, 1
      %p84 = scmp.ne.s32.totalorder %s79, %s81
      %p85 = scmp.eq.s32.totalorder %s24, 0
      %p86 = por %p84, %p85
      %p87 = scmp.ne.s32.totalorder %s79, %s81
      %p88 = scmp.eq.s32.totalorder %s29, 1
      %p89 = por %p87, %p88
      %p90 = scmp.ne.s32.totalorder %s81, %s82
      %p91 = scmp.eq.s32.totalorder %s29, 0
      %p92 = por %p90, %p91
      %p93 = scmp.ne.s32.totalorder %s81, %s82
      %p94 = scmp.eq.s32.totalorder %s30, 1
      %p95 = por %p93, %p94
      %p97 = scmp.ne.s32.totalorder %s82, %s96
      %p98 = scmp.eq.s32.totalorder %s30, 0
      %p99 = por %p97, %p98
      %s101 = sadd.s32 %s100, 1
      %p104 = scmp.eq.s32.totalorder %s24, 1
      %p105 = scmp.ne.s32.totalorder %s100, %s102
      %p106 = scmp.eq.s32.totalorder %s24, 0
      %p107 = por %p105, %p106
      %p108 = scmp.ne.s32.totalorder %s100, %s102
      %p109 = scmp.eq.s32.totalorder %s29, 1
      %p110 = por %p108, %p109
      %p111 = scmp.ne.s32.totalorder %s102, %s103
      %p112 = scmp.eq.s32.totalorder %s29, 0
      %p113 = por %p111, %p112
      %p114 = scmp.ne.s32.totalorder %s102, %s103
      %p115 = scmp.eq.s32.totalorder %s30, 1
      %p116 = por %p114, %p115
      %p118 = scmp.ne.s32.totalorder %s103, %s117
      %p119 = scmp.eq.s32.totalorder %s30, 0
      %p120 = por %p118, %p119
      %s122 = sadd.s32 %s121, 1
      %p125 = scmp.eq.s32.totalorder %s24, 1
      %p126 = scmp.ne.s32.totalorder %s121, %s123
      %p127 = scmp.eq.s32.totalorder %s24, 0
      %p128 = por %p126, %p127
      %p129 = scmp.ne.s32.totalorder %s121, %s123
      %p130 = scmp.eq.s32.totalorder %s29, 1
      %p131 = por %p129, %p130
      %p132 = scmp.ne.s32.totalorder %s123, %s124
      %p133 = scmp.eq.s32.totalorder %s29, 0
      %p134 = por %p132, %p133
      %p135 = scmp.ne.s32.totalorder %s123, %s124
      %p136 = scmp.eq.s32.totalorder %s30, 1
      %p137 = por %p135, %p136
      %p139 = scmp.ne.s32.totalorder %s124, %s138
      %p140 = scmp.eq.s32.totalorder %s30, 0
      %p141 = por %p139, %p140
      %s143 = sadd.s32 %s142, 1
      %p146 = scmp.eq.s32.totalorder %s24, 1
      %p147 = scmp.ne.s32.totalorder %s142, %s144
      %p148 = scmp.eq.s32.totalorder %s24, 0
      %p149 = por %p147, %p148
      %p150 = scmp.ne.s32.totalorder %s142, %s144
      %p151 = scmp.eq.s32.totalorder %s29, 1
      %p152 = por %p150, %p151
      %p153 = scmp.ne.s32.totalorder %s144, %s145
      %p154 = scmp.eq.s32.totalorder %s29, 0
      %p155 = por %p153, %p154
      %p156 = scmp.ne.s32.totalorder %s144, %s145
      %p157 = scmp.eq.s32.totalorder %s30, 1
      %p158 = por %p156, %p157
      %p160 = scmp.ne.s32.totalorder %s145, %s159
      %p161 = scmp.eq.s32.totalorder %s30, 0
      %p162 = por %p160, %p161
      %s164 = sadd.s32 %s163, 1
      %p167 = scmp.eq.s32.totalorder %s24, 1
      %p168 = scmp.ne.s32.totalorder %s163, %s165
      %p169 = scmp.eq.s32.totalorder %s24, 0
      %p170 = por %p168, %p169
      %p171 = scmp.ne.s32.totalorder %s163, %s165
      %p172 = scmp.eq.s32.totalorder %s29, 1
      %p173 = por %p171, %p172
      %p174 = scmp.ne.s32.totalorder %s165, %s166
      %p175 = scmp.eq.s32.totalorder %s29, 0
      %p176 = por %p174, %p175
      %p177 = scmp.ne.s32.totalorder %s165, %s166
      %p178 = scmp.eq.s32.totalorder %s30, 1
      %p179 = por %p177, %p178
      %p181 = scmp.ne.s32.totalorder %s166, %s180
      %p182 = scmp.eq.s32.totalorder %s30, 0
      %p183 = por %p181, %p182
      %s185 = sadd.s32 %s184, 1
      %p188 = scmp.eq.s32.totalorder %s24, 1
      %p189 = scmp.ne.s32.totalorder %s184, %s186
      %p190 = scmp.eq.s32.totalorder %s24, 0
      %p191 = por %p189, %p190
      %p192 = scmp.ne.s32.totalorder %s184, %s186
      %p193 = scmp.eq.s32.totalorder %s29, 1
      %p194 = por %p192, %p193
      %p195 = scmp.ne.s32.totalorder %s186, %s187
      %p196 = scmp.eq.s32.totalorder %s29, 0
      %p197 = por %p195, %p196
      %p198 = scmp.ne.s32.totalorder %s186, %s187
      %p199 = scmp.eq.s32.totalorder %s30, 1
      %p200 = por %p198, %p199
      %p202 = scmp.ne.s32.totalorder %s187, %s201
      %p203 = scmp.eq.s32.totalorder %s30, 0
      %p204 = por %p202, %p203
      %s206 = sadd.s32 %s205, 1
      %p209 = scmp.eq.s32.totalorder %s24, 1
      %p210 = scmp.ne.s32.totalorder %s205, %s207
      %p211 = scmp.eq.s32.totalorder %s24, 0
      %p212 = por %p210, %p211
      %p213 = scmp.ne.s32.totalorder %s205, %s207
      %p214 = scmp.eq.s32.totalorder %s29, 1
      %p215 = por %p213, %p214
      %p216 = scmp.ne.s32.totalorder %s207, %s208
      %p217 = scmp.eq.s32.totalorder %s29, 0
      %p218 = por %p216, %p217
      %p219 = scmp.ne.s32.totalorder %s207, %s208
      %p220 = scmp.eq.s32.totalorder %s30, 1
      %p221 = por %p219, %p220
      %p223 = scmp.ne.s32.totalorder %s208, %s222
      %p224 = scmp.eq.s32.totalorder %s30, 0
      %p225 = por %p223, %p224
      %s226 = ssub.s32 %s24, %s31
      %p227 = scmp.eq.s32.totalorder %s226, 0
      %s229 = sadd.s32 %s228, 1
      %s230 = scalar_select %p227, %s228, %s229
      %p233 = pneg %p227
      %p234 = scmp.eq.s32.totalorder %s24, 1
      %p235 = por %p233, %p234
      %p236 = scmp.ne.s32.totalorder %s228, %s231
      %p237 = scmp.eq.s32.totalorder %s24, 0
      %p238 = por %p236, %p237
      %p239 = scmp.ne.s32.totalorder %s228, %s231
      %p240 = scmp.eq.s32.totalorder %s29, 1
      %p241 = por %p239, %p240
      %p242 = scmp.ne.s32.totalorder %s231, %s232
      %p243 = scmp.eq.s32.totalorder %s29, 0
      %p244 = por %p242, %p243
      %p245 = scmp.ne.s32.totalorder %s231, %s232
      %p246 = scmp.eq.s32.totalorder %s30, 1
      %p247 = por %p245, %p246
      %p249 = scmp.ne.s32.totalorder %s232, %s248
      %p250 = scmp.eq.s32.totalorder %s30, 0
      %p251 = por %p249, %p250
      %p252 = scmp.le.s32.totalorder 1, %s24
      %p253 = scmp.lt.s32.totalorder %s24, 3
      %p254 = pnand %p252, %p253
      %p255 = pneg %p254
      // Predicated region
      $region9: #{tpu_custom_call.1} parent=5 // pred_check
        _
      $region10: #{tpu_custom_call.1} parent=5 // pred_check_branch
        %257 = sbr.rel (%p254) target = $region12
      $region11: #{tpu_custom_call.1} parent=5 // pred_region
        %s258 = ssub.s32 %s24, 1
        // Predicated region
        $region13: #{tpu_custom_call.1} parent=11 // pred_check
          %p259 = pneg %p71
        $region14: #{tpu_custom_call.1} parent=11 // pred_check_branch
          %261 = sbr.rel (%p259) target = $region16
        $region15: #{tpu_custom_call.1} parent=11 // pred_region
          %263 = vsyncadd [#allocation6], 0
          %s264 = sshll.u32 %s1, 4
          %s265 = int_to_ptr.hbm [resolvable:$true] %s264
          %s266 = sshll.u32 [#allocation5], 4
          %s267 = int_to_ptr.vmem [resolvable:$true] %s266
          %272 = dma.hbm_to_vmem [thread:$0]  %s265, 4096, %s267, [#allocation6], 256, 256, 16
        $region16: #{tpu_custom_call.1} parent=11 // pred_fallthru
          _
        // Predicated region
        $region17: #{tpu_custom_call.1} parent=11 // pred_check
          %p273 = pneg %p92
        $region18: #{tpu_custom_call.1} parent=11 // pred_check_branch
          %275 = sbr.rel (%p273) target = $region20
        $region19: #{tpu_custom_call.1} parent=11 // pred_region
          %277 = vsyncadd [#allocation6], 0
          %s279 = sshll.u32 %s2, 4
          %s280 = int_to_ptr.hbm [resolvable:$true] %s279
          %s281 = sshll.u32 [#allocation7], 4
          %s282 = int_to_ptr.vmem [resolvable:$true] %s281
          %284 = dma.hbm_to_vmem [thread:$0]  %s280, 64, %s282, [#allocation6]
        $region20: #{tpu_custom_call.1} parent=11 // pred_fallthru
          _
        // Predicated region
        $region21: #{tpu_custom_call.1} parent=11 // pred_check
          %p285 = pneg %p113
        $region22: #{tpu_custom_call.1} parent=11 // pred_check_branch
          %287 = sbr.rel (%p285) target = $region24
        $region23: #{tpu_custom_call.1} parent=11 // pred_region
          %289 = vsyncadd [#allocation9], 0
          %s290 = sshll.u32 %s3, 4
          %s291 = int_to_ptr.hbm [resolvable:$true] %s290
          %s292 = sshll.u32 [#allocation8], 4
          %s293 = int_to_ptr.vmem [resolvable:$true] %s292
          %298 = dma.hbm_to_vmem [thread:$0]  %s291, 8192, %s293, [#allocation9], 128, 128, 8
        $region24: #{tpu_custom_call.1} parent=11 // pred_fallthru
          _
        // Predicated region
        $region25: #{tpu_custom_call.1} parent=11 // pred_check
          %p299 = pneg %p134
        $region26: #{tpu_custom_call.1} parent=11 // pred_check_branch
          %301 = sbr.rel (%p299) target = $region28
        $region27: #{tpu_custom_call.1} parent=11 // pred_region
          _
        $region28: #{tpu_custom_call.1} parent=11 // pred_fallthru
          _
        // Predicated region
        $region29: #{tpu_custom_call.1} parent=11 // pred_check
          %p302 = pneg %p155
        $region30: #{tpu_custom_call.1} parent=11 // pred_check_branch
          %304 = sbr.rel (%p302) target = $region32
        $region31: #{tpu_custom_call.1} parent=11 // pred_region
          %306 = vsyncadd [#allocation9], 0
          %s307 = sshll.u32 %s5, 4
          %s308 = int_to_ptr.hbm [resolvable:$true] %s307
          %s309 = sshll.u32 [#allocation10], 4
          %s310 = int_to_ptr.vmem [resolvable:$true] %s309
          %315 = dma.hbm_to_vmem [thread:$0]  %s308, 2048, %s310, [#allocation9], 64, 64, 4
        $region32: #{tpu_custom_call.1} parent=11 // pred_fallthru
          _
        // Predicated region
        $region33: #{tpu_custom_call.1} parent=11 // pred_check
          %p316 = pneg %p176
        $region34: #{tpu_custom_call.1} parent=11 // pred_check_branch
          %318 = sbr.rel (%p316) target = $region36
        $region35: #{tpu_custom_call.1} parent=11 // pred_region
          _
        $region36: #{tpu_custom_call.1} parent=11 // pred_fallthru
          _
        // Predicated region
        $region37: #{tpu_custom_call.1} parent=11 // pred_check
          %p319 = pneg %p197
        $region38: #{tpu_custom_call.1} parent=11 // pred_check_branch
          %321 = sbr.rel (%p319) target = $region40
        $region39: #{tpu_custom_call.1} parent=11 // pred_region
          %323 = vsyncadd [#allocation12], 0
          %s324 = sshll.u32 %s7, 4
          %s325 = int_to_ptr.hbm [resolvable:$true] %s324
          %s326 = sshll.u32 [#allocation11], 4
          %s327 = int_to_ptr.vmem [resolvable:$true] %s326
          %332 = dma.hbm_to_vmem [thread:$0]  %s325, 1024, %s327, [#allocation12], 64, 64, 4
        $region40: #{tpu_custom_call.1} parent=11 // pred_fallthru
          _
        // Predicated region
        $region41: #{tpu_custom_call.1} parent=11 // pred_check
          %p333 = pneg %p218
        $region42: #{tpu_custom_call.1} parent=11 // pred_check_branch
          %335 = sbr.rel (%p333) target = $region44
        $region43: #{tpu_custom_call.1} parent=11 // pred_region
          _
        $region44: #{tpu_custom_call.1} parent=11 // pred_fallthru
          _
      $region12: #{tpu_custom_call.1} parent=5 // pred_fallthru
        _
      %p336 = scmp.lt.s32.totalorder %s24, 2
      // Predicated region
      $region45: #{tpu_custom_call.1} parent=5 // pred_check
        %p337 = pneg %p336
      $region46: #{tpu_custom_call.1} parent=5 // pred_check_branch
        %339 = sbr.rel (%p337) target = $region48
      $region47: #{tpu_custom_call.1} parent=5 // pred_region
        // Predicated region
        $region49: #{tpu_custom_call.1} parent=47 // pred_check
          %p340 = pneg %p44
        $region50: #{tpu_custom_call.1} parent=47 // pred_check_branch
          %342 = sbr.rel (%p340) target = $region52
        $region51: #{tpu_custom_call.1} parent=47 // pred_region
          %s343 = sand.u32 %s34, 1
          %s344 = scalar_lea.sflag [#allocation3], %s343
          %s345 = sand.u32 %s34, 1
          %s346 = smul.addr %s345, 128
          %s347 = scalar_lea.vmem [#allocation2], %s346
          %s348 = smul.u32 32, %s24
          %350 = vsyncadd %s344, 0
          %s351 = smul.addr %s348, 4
          %s352 = scalar_lea.hbm %s0, %s351
          %s353 = sshll.u32 %s352, 4
          %s354 = int_to_ptr.hbm [resolvable:$true] %s353
          %s355 = sshll.u32 %s347, 4
          %s356 = int_to_ptr.vmem [resolvable:$true] %s355
          %361 = dma.hbm_to_vmem [thread:$0]  %s354, 2048, %s356, %s344, 64, 64, 4
        $region52: #{tpu_custom_call.1} parent=47 // pred_fallthru
          _
      $region48: #{tpu_custom_call.1} parent=5 // pred_fallthru
        _
      %p362 = scmp.le.s32.totalorder 1, %s24
      %p363 = scmp.lt.s32.totalorder %s24, 3
      %p364 = pnand %p362, %p363
      %p365 = pneg %p364
      // Predicated region
      $region53: #{tpu_custom_call.1} parent=5 // pred_check
        _
      $region54: #{tpu_custom_call.1} parent=5 // pred_check_branch
        %367 = sbr.rel (%p364) target = $region56
      $region55: #{tpu_custom_call.1} parent=5 // pred_region
        %s368 = ssub.s32 %s24, 1
        %s369 = sand.u32 %s37, 1
        %s370 = scalar_lea.sflag [#allocation3], %s369
        %s371 = sand.u32 %s37, 1
        %s372 = smul.addr %s371, 128
        %s373 = scalar_lea.vmem [#allocation2], %s372
        // Predicated region
        $region57: #{tpu_custom_call.1} parent=55 // pred_check
          %p374 = pneg %p50
        $region58: #{tpu_custom_call.1} parent=55 // pred_check_branch
          %376 = sbr.rel (%p374) target = $region60
        $region59: #{tpu_custom_call.1} parent=55 // pred_region
          %378 = dma.done %s370, 2048
        $region60: #{tpu_custom_call.1} parent=55 // pred_fallthru
          _
        // Predicated region
        $region61: #{tpu_custom_call.1} parent=55 // pred_check
          %p379 = pneg %p71
        $region62: #{tpu_custom_call.1} parent=55 // pred_check_branch
          %381 = sbr.rel (%p379) target = $region64
        $region63: #{tpu_custom_call.1} parent=55 // pred_region
          %383 = dma.done [#allocation6], 4096
        $region64: #{tpu_custom_call.1} parent=55 // pred_fallthru
          _
        // Predicated region
        $region65: #{tpu_custom_call.1} parent=55 // pred_check
          %p384 = pneg %p92
        $region66: #{tpu_custom_call.1} parent=55 // pred_check_branch
          %386 = sbr.rel (%p384) target = $region68
        $region67: #{tpu_custom_call.1} parent=55 // pred_region
          %388 = dma.done [#allocation6], 64
        $region68: #{tpu_custom_call.1} parent=55 // pred_fallthru
          _
        // Predicated region
        $region69: #{tpu_custom_call.1} parent=55 // pred_check
          %p389 = pneg %p113
        $region70: #{tpu_custom_call.1} parent=55 // pred_check_branch
          %391 = sbr.rel (%p389) target = $region72
        $region71: #{tpu_custom_call.1} parent=55 // pred_region
          %393 = dma.done [#allocation9], 8192
        $region72: #{tpu_custom_call.1} parent=55 // pred_fallthru
          _
        // Predicated region
        $region73: #{tpu_custom_call.1} parent=55 // pred_check
          %p394 = pneg %p155
        $region74: #{tpu_custom_call.1} parent=55 // pred_check_branch
          %396 = sbr.rel (%p394) target = $region76
        $region75: #{tpu_custom_call.1} parent=55 // pred_region
          %398 = dma.done [#allocation9], 2048
        $region76: #{tpu_custom_call.1} parent=55 // pred_fallthru
          _
        // Predicated region
        $region77: #{tpu_custom_call.1} parent=55 // pred_check
          %p399 = pneg %p197
        $region78: #{tpu_custom_call.1} parent=55 // pred_check_branch
          %401 = sbr.rel (%p399) target = $region80
        $region79: #{tpu_custom_call.1} parent=55 // pred_region
          %403 = dma.done [#allocation12], 1024
        $region80: #{tpu_custom_call.1} parent=55 // pred_fallthru
          _
        %s404 = sand.u32 %s37, 1
        %s405 = scalar_lea.sflag [#allocation3], %s404
        %s406 = sand.u32 %s37, 1
        %s407 = smul.addr %s406, 128
        %s408 = scalar_lea.vmem [#allocation2], %s407
        %p409 = pneg %p50
        %p410 = pneg %p47
        %p411 = pneg %p71
        %p412 = pneg %p68
        %p413 = pneg %p92
        %p414 = pneg %p89
        %p415 = pneg %p113
        %p416 = pneg %p110
        %p417 = pneg %p134
        %p418 = pneg %p131
        %p419 = pneg %p155
        %p420 = pneg %p152
        %p421 = pneg %p176
        %p422 = pneg %p173
        %p423 = pneg %p197
        %p424 = pneg %p194
        %p425 = pneg %p218
        %p426 = pneg %p215
        %p427 = pneg %p244
        %p428 = pneg %p241
        %s429 = sand.u32 %s231, 1
        %s430 = scalar_lea.sflag [#allocation4], %s429
        %s431 = sand.u32 %s231, 1
        %s432 = smul.addr %s431, 256
        %s433 = scalar_lea.vmem [#allocation13], %s432
        %s434 = smul.u32 32, %s29
        %s435 = smul.u32 32, %s29
        %v436 = vld [vmem:[%s373] sm:$0xf]
        %v437 = vld [vmem:[%s373 + $0x4] sm:$0xf]
        %v438 = vld [vmem:[%s373 + $0x8] sm:$0xf]
        %v439 = vld [vmem:[%s373 + $0xc] sm:$0xf]
        %v440 = vld [vmem:[%s373 + $0x10] sm:$0xf]
        %v441 = vld [vmem:[%s373 + $0x14] sm:$0xf]
        %v442 = vld [vmem:[%s373 + $0x18] sm:$0xf]
        %v443 = vld [vmem:[%s373 + $0x1c] sm:$0xf]
        %v444 = vld [vmem:[%s373 + $0x20] sm:$0xf]
        %v445 = vld [vmem:[%s373 + $0x24] sm:$0xf]
        %v446 = vld [vmem:[%s373 + $0x28] sm:$0xf]
        %v447 = vld [vmem:[%s373 + $0x2c] sm:$0xf]
        %v448 = vld [vmem:[%s373 + $0x30] sm:$0xf]
        %v449 = vld [vmem:[%s373 + $0x34] sm:$0xf]
        %v450 = vld [vmem:[%s373 + $0x38] sm:$0xf]
        %v451 = vld [vmem:[%s373 + $0x3c] sm:$0xf]
        %v452 = vld [vmem:[%s373 + $0x40] sm:$0xf]
        %v453 = vld [vmem:[%s373 + $0x44] sm:$0xf]
        %v454 = vld [vmem:[%s373 + $0x48] sm:$0xf]
        %v455 = vld [vmem:[%s373 + $0x4c] sm:$0xf]
        %v456 = vld [vmem:[%s373 + $0x50] sm:$0xf]
        %v457 = vld [vmem:[%s373 + $0x54] sm:$0xf]
        %v458 = vld [vmem:[%s373 + $0x58] sm:$0xf]
        %v459 = vld [vmem:[%s373 + $0x5c] sm:$0xf]
        %v460 = vld [vmem:[%s373 + $0x60] sm:$0xf]
        %v461 = vld [vmem:[%s373 + $0x64] sm:$0xf]
        %v462 = vld [vmem:[%s373 + $0x68] sm:$0xf]
        %v463 = vld [vmem:[%s373 + $0x6c] sm:$0xf]
        %v464 = vld [vmem:[%s373 + $0x70] sm:$0xf]
        %v465 = vld [vmem:[%s373 + $0x74] sm:$0xf]
        %v466 = vld [vmem:[%s373 + $0x78] sm:$0xf]
        %v467 = vld [vmem:[%s373 + $0x7c] sm:$0xf]
        %v468 = vld [vmem:[#allocation5] sm:$0xff]
        %v469 = vld [vmem:[#allocation5 + $0x8] sm:$0xff]
        %v470 = vld [vmem:[#allocation5 + $0x10] sm:$0xff]
        %v471 = vld [vmem:[#allocation5 + $0x18] sm:$0xff]
        %v472 = vld [vmem:[#allocation5 + $0x20] sm:$0xff]
        %v473 = vld [vmem:[#allocation5 + $0x28] sm:$0xff]
        %v474 = vld [vmem:[#allocation5 + $0x30] sm:$0xff]
        %v475 = vld [vmem:[#allocation5 + $0x38] sm:$0xff]
        %v476 = vld [vmem:[#allocation5 + $0x40] sm:$0xff]
        %v477 = vld [vmem:[#allocation5 + $0x48] sm:$0xff]
        %v478 = vld [vmem:[#allocation5 + $0x50] sm:$0xff]
        %v479 = vld [vmem:[#allocation5 + $0x58] sm:$0xff]
        %v480 = vld [vmem:[#allocation5 + $0x60] sm:$0xff]
        %v481 = vld [vmem:[#allocation5 + $0x68] sm:$0xff]
        %v482 = vld [vmem:[#allocation5 + $0x70] sm:$0xff]
        %v483 = vld [vmem:[#allocation5 + $0x78] sm:$0xff]
        %v484 = vld [vmem:[#allocation5 + $0x80] sm:$0xff]
        %v485 = vld [vmem:[#allocation5 + $0x88] sm:$0xff]
        %v486 = vld [vmem:[#allocation5 + $0x90] sm:$0xff]
        %v487 = vld [vmem:[#allocation5 + $0x98] sm:$0xff]
        %v488 = vld [vmem:[#allocation5 + $0xa0] sm:$0xff]
        %v489 = vld [vmem:[#allocation5 + $0xa8] sm:$0xff]
        %v490 = vld [vmem:[#allocation5 + $0xb0] sm:$0xff]
        %v491 = vld [vmem:[#allocation5 + $0xb8] sm:$0xff]
        %v492 = vld [vmem:[#allocation5 + $0xc0] sm:$0xff]
        %v493 = vld [vmem:[#allocation5 + $0xc8] sm:$0xff]
        %v494 = vld [vmem:[#allocation5 + $0xd0] sm:$0xff]
        %v495 = vld [vmem:[#allocation5 + $0xd8] sm:$0xff]
        %v496 = vld [vmem:[#allocation5 + $0xe0] sm:$0xff]
        %v497 = vld [vmem:[#allocation5 + $0xe8] sm:$0xff]
        %v498 = vld [vmem:[#allocation5 + $0xf0] sm:$0xff]
        %v499 = vld [vmem:[#allocation5 + $0xf8] sm:$0xff]
        %v532 = vunpack.c.l.b16 %v436
        %v533 = vunpack.c.l.b16 %v437
        %v534 = vunpack.c.l.b16 %v438
        %v535 = vunpack.c.l.b16 %v439
        %v536 = vunpack.c.l.b16 %v440
        %v537 = vunpack.c.l.b16 %v441
        %v538 = vunpack.c.l.b16 %v442
        %v539 = vunpack.c.l.b16 %v443
        %v540 = vunpack.c.l.b16 %v444
        %v541 = vunpack.c.l.b16 %v445
        %v542 = vunpack.c.l.b16 %v446
        %v543 = vunpack.c.l.b16 %v447
        %v544 = vunpack.c.l.b16 %v448
        %v545 = vunpack.c.l.b16 %v449
        %v546 = vunpack.c.l.b16 %v450
        %v547 = vunpack.c.l.b16 %v451
        %v548 = vunpack.c.l.b16 %v452
        %v549 = vunpack.c.l.b16 %v453
        %v550 = vunpack.c.l.b16 %v454
        %v551 = vunpack.c.l.b16 %v455
        %v552 = vunpack.c.l.b16 %v456
        %v553 = vunpack.c.l.b16 %v457
        %v554 = vunpack.c.l.b16 %v458
        %v555 = vunpack.c.l.b16 %v459
        %v556 = vunpack.c.l.b16 %v460
        %v557 = vunpack.c.l.b16 %v461
        %v558 = vunpack.c.l.b16 %v462
        %v559 = vunpack.c.l.b16 %v463
        %v560 = vunpack.c.l.b16 %v464
        %v561 = vunpack.c.l.b16 %v465
        %v562 = vunpack.c.l.b16 %v466
        %v563 = vunpack.c.l.b16 %v467
        %v564 = vpack.c.b16 %v533, %v532
        %v565 = vpack.c.b16 %v535, %v534
        %v566 = vpack.c.b16 %v537, %v536
        %v567 = vpack.c.b16 %v539, %v538
        %v568 = vpack.c.b16 %v541, %v540
        %v569 = vpack.c.b16 %v543, %v542
        %v570 = vpack.c.b16 %v545, %v544
        %v571 = vpack.c.b16 %v547, %v546
        %v572 = vpack.c.b16 %v549, %v548
        %v573 = vpack.c.b16 %v551, %v550
        %v574 = vpack.c.b16 %v553, %v552
        %v575 = vpack.c.b16 %v555, %v554
        %v576 = vpack.c.b16 %v557, %v556
        %v577 = vpack.c.b16 %v559, %v558
        %v578 = vpack.c.b16 %v561, %v560
        %v579 = vpack.c.b16 %v563, %v562
        %v628 = vunpack.c.l.b16 %v468
        %v629 = vunpack.c.h.b16 %v468
        %v630 = vunpack.c.l.b16 %v469
        %v631 = vunpack.c.h.b16 %v469
        %v632 = vunpack.c.l.b16 %v470
        %v633 = vunpack.c.h.b16 %v470
        %v634 = vunpack.c.l.b16 %v471
        %v635 = vunpack.c.h.b16 %v471
        %v636 = vunpack.c.l.b16 %v472
        %v637 = vunpack.c.h.b16 %v472
        %v638 = vunpack.c.l.b16 %v473
        %v639 = vunpack.c.h.b16 %v473
        %v640 = vunpack.c.l.b16 %v474
        %v641 = vunpack.c.h.b16 %v474
        %v642 = vunpack.c.l.b16 %v475
        %v643 = vunpack.c.h.b16 %v475
        %v644 = vunpack.c.l.b16 %v476
        %v645 = vunpack.c.h.b16 %v476
        %v646 = vunpack.c.l.b16 %v477
        %v647 = vunpack.c.h.b16 %v477
        %v648 = vunpack.c.l.b16 %v478
        %v649 = vunpack.c.h.b16 %v478
        %v650 = vunpack.c.l.b16 %v479
        %v651 = vunpack.c.h.b16 %v479
        %v652 = vunpack.c.l.b16 %v480
        %v653 = vunpack.c.h.b16 %v480
        %v654 = vunpack.c.l.b16 %v481
        %v655 = vunpack.c.h.b16 %v481
        %v656 = vunpack.c.l.b16 %v482
        %v657 = vunpack.c.h.b16 %v482
        %v658 = vunpack.c.l.b16 %v483
        %v659 = vunpack.c.h.b16 %v483
        %v660 = vunpack.c.l.b16 %v484
        %v661 = vunpack.c.h.b16 %v484
        %v662 = vunpack.c.l.b16 %v485
        %v663 = vunpack.c.h.b16 %v485
        %v664 = vunpack.c.l.b16 %v486
        %v665 = vunpack.c.h.b16 %v486
        %v666 = vunpack.c.l.b16 %v487
        %v667 = vunpack.c.h.b16 %v487
        %v668 = vunpack.c.l.b16 %v488
        %v669 = vunpack.c.h.b16 %v488
        %v670 = vunpack.c.l.b16 %v489
        %v671 = vunpack.c.h.b16 %v489
        %v672 = vunpack.c.l.b16 %v490
        %v673 = vunpack.c.h.b16 %v490
        %v674 = vunpack.c.l.b16 %v491
        %v675 = vunpack.c.h.b16 %v491
        %v676 = vunpack.c.l.b16 %v492
        %v677 = vunpack.c.h.b16 %v492
        %v678 = vunpack.c.l.b16 %v493
        %v679 = vunpack.c.h.b16 %v493
        %v680 = vunpack.c.l.b16 %v494
        %v681 = vunpack.c.h.b16 %v494
        %v682 = vunpack.c.l.b16 %v495
        %v683 = vunpack.c.h.b16 %v495
        %v684 = vunpack.c.l.b16 %v496
        %v685 = vunpack.c.h.b16 %v496
        %v686 = vunpack.c.l.b16 %v497
        %v687 = vunpack.c.h.b16 %v497
        %v688 = vunpack.c.l.b16 %v498
        %v689 = vunpack.c.h.b16 %v498
        %v690 = vunpack.c.l.b16 %v499
        %v691 = vunpack.c.h.b16 %v499
        %v692 = vpack.c.b16 %v632, %v628
        %v693 = vpack.c.b16 %v633, %v629
        %v694 = vpack.c.b16 %v634, %v630
        %v695 = vpack.c.b16 %v635, %v631
        %v696 = vpack.c.b16 %v640, %v636
        %v697 = vpack.c.b16 %v641, %v637
        %v698 = vpack.c.b16 %v642, %v638
        %v699 = vpack.c.b16 %v643, %v639
        %v700 = vpack.c.b16 %v648, %v644
        %v701 = vpack.c.b16 %v649, %v645
        %v702 = vpack.c.b16 %v650, %v646
        %v703 = vpack.c.b16 %v651, %v647
        %v704 = vpack.c.b16 %v656, %v652
        %v705 = vpack.c.b16 %v657, %v653
        %v706 = vpack.c.b16 %v658, %v654
        %v707 = vpack.c.b16 %v659, %v655
        %v708 = vpack.c.b16 %v664, %v660
        %v709 = vpack.c.b16 %v665, %v661
        %v710 = vpack.c.b16 %v666, %v662
        %v711 = vpack.c.b16 %v667, %v663
        %v712 = vpack.c.b16 %v672, %v668
        %v713 = vpack.c.b16 %v673, %v669
        %v714 = vpack.c.b16 %v674, %v670
        %v715 = vpack.c.b16 %v675, %v671
        %v716 = vpack.c.b16 %v680, %v676
        %v717 = vpack.c.b16 %v681, %v677
        %v718 = vpack.c.b16 %v682, %v678
        %v719 = vpack.c.b16 %v683, %v679
        %v720 = vpack.c.b16 %v688, %v684
        %v721 = vpack.c.b16 %v689, %v685
        %v722 = vpack.c.b16 %v690, %v686
        %v723 = vpack.c.b16 %v691, %v687
        %756 = vmatpush.bf16.msra.mxu0 %v720
        %757 = vmatpush.bf16.msra.mxu0 %v716
        %758 = vmatpush.bf16.msra.mxu0 %v712
        %759 = vmatpush.bf16.msra.mxu0 %v708
        %760 = vmatpush.bf16.msra.mxu0 %v704
        %761 = vmatpush.bf16.msra.mxu0 %v700
        %762 = vmatpush.bf16.msra.mxu0 %v696
        %763 = vmatpush.bf16.msra.mxu0 %v692
        %764 = vmatmul.bf16.gmra.mxu0 %v564
        %v765 = vpop.f32.mrf.mxu0
        %v766 = vadd.f32 0.0, %v765
        %v767 = vpop.f32.mrf.mxu0
        %v768 = vadd.f32 0.0, %v767
        %769 = vmatmul.bf16.gmra.mxu0 %v565
        %v770 = vpop.f32.mrf.mxu0
        %v771 = vadd.f32 0.0, %v770
        %v772 = vpop.f32.mrf.mxu0
        %v773 = vadd.f32 0.0, %v772
        %774 = vmatmul.bf16.gmra.mxu0 %v566
        %v775 = vpop.f32.mrf.mxu0
        %v776 = vadd.f32 0.0, %v775
        %v777 = vpop.f32.mrf.mxu0
        %v778 = vadd.f32 0.0, %v777
        %779 = vmatmul.bf16.gmra.mxu0 %v567
        %v780 = vpop.f32.mrf.mxu0
        %v781 = vadd.f32 0.0, %v780
        %v782 = vpop.f32.mrf.mxu0
        %v783 = vadd.f32 0.0, %v782
        %784 = vmatmul.bf16.gmra.mxu0 %v568
        %v785 = vpop.f32.mrf.mxu0
        %v786 = vadd.f32 0.0, %v785
        %v787 = vpop.f32.mrf.mxu0
        %v788 = vadd.f32 0.0, %v787
        %789 = vmatmul.bf16.gmra.mxu0 %v569
        %v790 = vpop.f32.mrf.mxu0
        %v791 = vadd.f32 0.0, %v790
        %v792 = vpop.f32.mrf.mxu0
        %v793 = vadd.f32 0.0, %v792
        %794 = vmatmul.bf16.gmra.mxu0 %v570
        %v795 = vpop.f32.mrf.mxu0
        %v796 = vadd.f32 0.0, %v795
        %v797 = vpop.f32.mrf.mxu0
        %v798 = vadd.f32 0.0, %v797
        %799 = vmatmul.bf16.gmra.mxu0 %v571
        %v800 = vpop.f32.mrf.mxu0
        %v801 = vadd.f32 0.0, %v800
        %v802 = vpop.f32.mrf.mxu0
        %v803 = vadd.f32 0.0, %v802
        %804 = vmatmul.bf16.gmra.mxu0 %v572
        %v805 = vpop.f32.mrf.mxu0
        %v806 = vadd.f32 0.0, %v805
        %v807 = vpop.f32.mrf.mxu0
        %v808 = vadd.f32 0.0, %v807
        %809 = vmatmul.bf16.gmra.mxu0 %v573
        %v810 = vpop.f32.mrf.mxu0
        %v811 = vadd.f32 0.0, %v810
        %v812 = vpop.f32.mrf.mxu0
        %v813 = vadd.f32 0.0, %v812
        %814 = vmatmul.bf16.gmra.mxu0 %v574
        %v815 = vpop.f32.mrf.mxu0
        %v816 = vadd.f32 0.0, %v815
        %v817 = vpop.f32.mrf.mxu0
        %v818 = vadd.f32 0.0, %v817
        %819 = vmatmul.bf16.gmra.mxu0 %v575
        %v820 = vpop.f32.mrf.mxu0
        %v821 = vadd.f32 0.0, %v820
        %v822 = vpop.f32.mrf.mxu0
        %v823 = vadd.f32 0.0, %v822
        %824 = vmatmul.bf16.gmra.mxu0 %v576
        %v825 = vpop.f32.mrf.mxu0
        %v826 = vadd.f32 0.0, %v825
        %v827 = vpop.f32.mrf.mxu0
        %v828 = vadd.f32 0.0, %v827
        %829 = vmatmul.bf16.gmra.mxu0 %v577
        %v830 = vpop.f32.mrf.mxu0
        %v831 = vadd.f32 0.0, %v830
        %v832 = vpop.f32.mrf.mxu0
        %v833 = vadd.f32 0.0, %v832
        %834 = vmatmul.bf16.gmra.mxu0 %v578
        %v835 = vpop.f32.mrf.mxu0
        %v836 = vadd.f32 0.0, %v835
        %v837 = vpop.f32.mrf.mxu0
        %v838 = vadd.f32 0.0, %v837
        %839 = vmatmul.bf16.gmra.mxu0 %v579
        %v840 = vpop.f32.mrf.mxu0
        %v841 = vadd.f32 0.0, %v840
        %v842 = vpop.f32.mrf.mxu0
        %v843 = vadd.f32 0.0, %v842
        %844 = vdwg.mxu0
        %845 = vmatpush.bf16.msra.mxu0 %v721
        %846 = vmatpush.bf16.msra.mxu0 %v717
        %847 = vmatpush.bf16.msra.mxu0 %v713
        %848 = vmatpush.bf16.msra.mxu0 %v709
        %849 = vmatpush.bf16.msra.mxu0 %v705
        %850 = vmatpush.bf16.msra.mxu0 %v701
        %851 = vmatpush.bf16.msra.mxu0 %v697
        %852 = vmatpush.bf16.msra.mxu0 %v693
        %853 = vmatmul.bf16.gmra.mxu0 %v564
        %v854 = vpop.f32.mrf.mxu0
        %v855 = vadd.f32 0.0, %v854
        %v856 = vpop.f32.mrf.mxu0
        %v857 = vadd.f32 0.0, %v856
        %858 = vmatmul.bf16.gmra.mxu0 %v565
        %v859 = vpop.f32.mrf.mxu0
        %v860 = vadd.f32 0.0, %v859
        %v861 = vpop.f32.mrf.mxu0
        %v862 = vadd.f32 0.0, %v861
        %863 = vmatmul.bf16.gmra.mxu0 %v566
        %v864 = vpop.f32.mrf.mxu0
        %v865 = vadd.f32 0.0, %v864
        %v866 = vpop.f32.mrf.mxu0
        %v867 = vadd.f32 0.0, %v866
        %868 = vmatmul.bf16.gmra.mxu0 %v567
        %v869 = vpop.f32.mrf.mxu0
        %v870 = vadd.f32 0.0, %v869
        %v871 = vpop.f32.mrf.mxu0
        %v872 = vadd.f32 0.0, %v871
        %873 = vmatmul.bf16.gmra.mxu0 %v568
        %v874 = vpop.f32.mrf.mxu0
        %v875 = vadd.f32 0.0, %v874
        %v876 = vpop.f32.mrf.mxu0
        %v877 = vadd.f32 0.0, %v876
        %878 = vmatmul.bf16.gmra.mxu0 %v569
        %v879 = vpop.f32.mrf.mxu0
        %v880 = vadd.f32 0.0, %v879
        %v881 = vpop.f32.mrf.mxu0
        %v882 = vadd.f32 0.0, %v881
        %883 = vmatmul.bf16.gmra.mxu0 %v570
        %v884 = vpop.f32.mrf.mxu0
        %v885 = vadd.f32 0.0, %v884
        %v886 = vpop.f32.mrf.mxu0
        %v887 = vadd.f32 0.0, %v886
        %888 = vmatmul.bf16.gmra.mxu0 %v571
        %v889 = vpop.f32.mrf.mxu0
        %v890 = vadd.f32 0.0, %v889
        %v891 = vpop.f32.mrf.mxu0
        %v892 = vadd.f32 0.0, %v891
        %893 = vmatmul.bf16.gmra.mxu0 %v572
        %v894 = vpop.f32.mrf.mxu0
        %v895 = vadd.f32 0.0, %v894
        %v896 = vpop.f32.mrf.mxu0
        %v897 = vadd.f32 0.0, %v896
        %898 = vmatmul.bf16.gmra.mxu0 %v573
        %v899 = vpop.f32.mrf.mxu0
        %v900 = vadd.f32 0.0, %v899
        %v901 = vpop.f32.mrf.mxu0
        %v902 = vadd.f32 0.0, %v901
        %903 = vmatmul.bf16.gmra.mxu0 %v574
        %v904 = vpop.f32.mrf.mxu0
        %v905 = vadd.f32 0.0, %v904
        %v906 = vpop.f32.mrf.mxu0
        %v907 = vadd.f32 0.0, %v906
        %908 = vmatmul.bf16.gmra.mxu0 %v575
        %v909 = vpop.f32.mrf.mxu0
        %v910 = vadd.f32 0.0, %v909
        %v911 = vpop.f32.mrf.mxu0
        %v912 = vadd.f32 0.0, %v911
        %913 = vmatmul.bf16.gmra.mxu0 %v576
        %v914 = vpop.f32.mrf.mxu0
        %v915 = vadd.f32 0.0, %v914
        %v916 = vpop.f32.mrf.mxu0
        %v917 = vadd.f32 0.0, %v916
        %918 = vmatmul.bf16.gmra.mxu0 %v577
        %v919 = vpop.f32.mrf.mxu0
        %v920 = vadd.f32 0.0, %v919
        %v921 = vpop.f32.mrf.mxu0
        %v922 = vadd.f32 0.0, %v921
        %923 = vmatmul.bf16.gmra.mxu0 %v578
        %v924 = vpop.f32.mrf.mxu0
        %v925 = vadd.f32 0.0, %v924
        %v926 = vpop.f32.mrf.mxu0
        %v927 = vadd.f32 0.0, %v926
        %928 = vmatmul.bf16.gmra.mxu0 %v579
        %v929 = vpop.f32.mrf.mxu0
        %v930 = vadd.f32 0.0, %v929
        %v931 = vpop.f32.mrf.mxu0
        %v932 = vadd.f32 0.0, %v931
        %933 = vdwg.mxu0
        %934 = vmatpush.bf16.msra.mxu0 %v722
        %935 = vmatpush.bf16.msra.mxu0 %v718
        %936 = vmatpush.bf16.msra.mxu0 %v714
        %937 = vmatpush.bf16.msra.mxu0 %v710
        %938 = vmatpush.bf16.msra.mxu0 %v706
        %939 = vmatpush.bf16.msra.mxu0 %v702
        %940 = vmatpush.bf16.msra.mxu0 %v698
        %941 = vmatpush.bf16.msra.mxu0 %v694
        %942 = vmatmul.bf16.gmra.mxu0 %v564
        %v943 = vpop.f32.mrf.mxu0
        %v944 = vadd.f32 0.0, %v943
        %v945 = vpop.f32.mrf.mxu0
        %v946 = vadd.f32 0.0, %v945
        %947 = vmatmul.bf16.gmra.mxu0 %v565
        %v948 = vpop.f32.mrf.mxu0
        %v949 = vadd.f32 0.0, %v948
        %v950 = vpop.f32.mrf.mxu0
        %v951 = vadd.f32 0.0, %v950
        %952 = vmatmul.bf16.gmra.mxu0 %v566
        %v953 = vpop.f32.mrf.mxu0
        %v954 = vadd.f32 0.0, %v953
        %v955 = vpop.f32.mrf.mxu0
        %v956 = vadd.f32 0.0, %v955
        %957 = vmatmul.bf16.gmra.mxu0 %v567
        %v958 = vpop.f32.mrf.mxu0
        %v959 = vadd.f32 0.0, %v958
        %v960 = vpop.f32.mrf.mxu0
        %v961 = vadd.f32 0.0, %v960
        %962 = vmatmul.bf16.gmra.mxu0 %v568
        %v963 = vpop.f32.mrf.mxu0
        %v964 = vadd.f32 0.0, %v963
        %v965 = vpop.f32.mrf.mxu0
        %v966 = vadd.f32 0.0, %v965
        %967 = vmatmul.bf16.gmra.mxu0 %v569
        %v968 = vpop.f32.mrf.mxu0
        %v969 = vadd.f32 0.0, %v968
        %v970 = vpop.f32.mrf.mxu0
        %v971 = vadd.f32 0.0, %v970
        %972 = vmatmul.bf16.gmra.mxu0 %v570
        %v973 = vpop.f32.mrf.mxu0
        %v974 = vadd.f32 0.0, %v973
        %v975 = vpop.f32.mrf.mxu0
        %v976 = vadd.f32 0.0, %v975
        %977 = vmatmul.bf16.gmra.mxu0 %v571
        %v978 = vpop.f32.mrf.mxu0
        %v979 = vadd.f32 0.0, %v978
        %v980 = vpop.f32.mrf.mxu0
        %v981 = vadd.f32 0.0, %v980
        %982 = vmatmul.bf16.gmra.mxu0 %v572
        %v983 = vpop.f32.mrf.mxu0
        %v984 = vadd.f32 0.0, %v983
        %v985 = vpop.f32.mrf.mxu0
        %v986 = vadd.f32 0.0, %v985
        %987 = vmatmul.bf16.gmra.mxu0 %v573
        %v988 = vpop.f32.mrf.mxu0
        %v989 = vadd.f32 0.0, %v988
        %v990 = vpop.f32.mrf.mxu0
        %v991 = vadd.f32 0.0, %v990
        %992 = vmatmul.bf16.gmra.mxu0 %v574
        %v993 = vpop.f32.mrf.mxu0
        %v994 = vadd.f32 0.0, %v993
        %v995 = vpop.f32.mrf.mxu0
        %v996 = vadd.f32 0.0, %v995
        %997 = vmatmul.bf16.gmra.mxu0 %v575
        %v998 = vpop.f32.mrf.mxu0
        %v999 = vadd.f32 0.0, %v998
        %v1000 = vpop.f32.mrf.mxu0
        %v1001 = vadd.f32 0.0, %v1000
        %1002 = vmatmul.bf16.gmra.mxu0 %v576
        %v1003 = vpop.f32.mrf.mxu0
        %v1004 = vadd.f32 0.0, %v1003
        %v1005 = vpop.f32.mrf.mxu0
        %v1006 = vadd.f32 0.0, %v1005
        %1007 = vmatmul.bf16.gmra.mxu0 %v577
        %v1008 = vpop.f32.mrf.mxu0
        %v1009 = vadd.f32 0.0, %v1008
        %v1010 = vpop.f32.mrf.mxu0
        %v1011 = vadd.f32 0.0, %v1010
        %1012 = vmatmul.bf16.gmra.mxu0 %v578
        %v1013 = vpop.f32.mrf.mxu0
        %v1014 = vadd.f32 0.0, %v1013
        %v1015 = vpop.f32.mrf.mxu0
        %v1016 = vadd.f32 0.0, %v1015
        %1017 = vmatmul.bf16.gmra.mxu0 %v579
        %v1018 = vpop.f32.mrf.mxu0
        %v1019 = vadd.f32 0.0, %v1018
        %v1020 = vpop.f32.mrf.mxu0
        %v1021 = vadd.f32 0.0, %v1020
        %1022 = vdwg.mxu0
        %1023 = vmatpush.bf16.msra.mxu0 %v723
        %1024 = vmatpush.bf16.msra.mxu0 %v719
        %1025 = vmatpush.bf16.msra.mxu0 %v715
        %1026 = vmatpush.bf16.msra.mxu0 %v711
        %1027 = vmatpush.bf16.msra.mxu0 %v707
        %1028 = vmatpush.bf16.msra.mxu0 %v703
        %1029 = vmatpush.bf16.msra.mxu0 %v699
        %1030 = vmatpush.bf16.msra.mxu0 %v695
        %1031 = vmatmul.bf16.gmra.mxu0 %v564
        %v1032 = vpop.f32.mrf.mxu0
        %v1033 = vadd.f32 0.0, %v1032
        %v1034 = vpop.f32.mrf.mxu0
        %v1035 = vadd.f32 0.0, %v1034
        %1036 = vmatmul.bf16.gmra.mxu0 %v565
        %v1037 = vpop.f32.mrf.mxu0
        %v1038 = vadd.f32 0.0, %v1037
        %v1039 = vpop.f32.mrf.mxu0
        %v1040 = vadd.f32 0.0, %v1039
        %1041 = vmatmul.bf16.gmra.mxu0 %v566
        %v1042 = vpop.f32.mrf.mxu0
        %v1043 = vadd.f32 0.0, %v1042
        %v1044 = vpop.f32.mrf.mxu0
        %v1045 = vadd.f32 0.0, %v1044
        %1046 = vmatmul.bf16.gmra.mxu0 %v567
        %v1047 = vpop.f32.mrf.mxu0
        %v1048 = vadd.f32 0.0, %v1047
        %v1049 = vpop.f32.mrf.mxu0
        %v1050 = vadd.f32 0.0, %v1049
        %1051 = vmatmul.bf16.gmra.mxu0 %v568
        %v1052 = vpop.f32.mrf.mxu0
        %v1053 = vadd.f32 0.0, %v1052
        %v1054 = vpop.f32.mrf.mxu0
        %v1055 = vadd.f32 0.0, %v1054
        %1056 = vmatmul.bf16.gmra.mxu0 %v569
        %v1057 = vpop.f32.mrf.mxu0
        %v1058 = vadd.f32 0.0, %v1057
        %v1059 = vpop.f32.mrf.mxu0
        %v1060 = vadd.f32 0.0, %v1059
        %1061 = vmatmul.bf16.gmra.mxu0 %v570
        %v1062 = vpop.f32.mrf.mxu0
        %v1063 = vadd.f32 0.0, %v1062
        %v1064 = vpop.f32.mrf.mxu0
        %v1065 = vadd.f32 0.0, %v1064
        %1066 = vmatmul.bf16.gmra.mxu0 %v571
        %v1067 = vpop.f32.mrf.mxu0
        %v1068 = vadd.f32 0.0, %v1067
        %v1069 = vpop.f32.mrf.mxu0
        %v1070 = vadd.f32 0.0, %v1069
        %1071 = vmatmul.bf16.gmra.mxu0 %v572
        %v1072 = vpop.f32.mrf.mxu0
        %v1073 = vadd.f32 0.0, %v1072
        %v1074 = vpop.f32.mrf.mxu0
        %v1075 = vadd.f32 0.0, %v1074
        %1076 = vmatmul.bf16.gmra.mxu0 %v573
        %v1077 = vpop.f32.mrf.mxu0
        %v1078 = vadd.f32 0.0, %v1077
        %v1079 = vpop.f32.mrf.mxu0
        %v1080 = vadd.f32 0.0, %v1079
        %1081 = vmatmul.bf16.gmra.mxu0 %v574
        %v1082 = vpop.f32.mrf.mxu0
        %v1083 = vadd.f32 0.0, %v1082
        %v1084 = vpop.f32.mrf.mxu0
        %v1085 = vadd.f32 0.0, %v1084
        %1086 = vmatmul.bf16.gmra.mxu0 %v575
        %v1087 = vpop.f32.mrf.mxu0
        %v1088 = vadd.f32 0.0, %v1087
        %v1089 = vpop.f32.mrf.mxu0
        %v1090 = vadd.f32 0.0, %v1089
        %1091 = vmatmul.bf16.gmra.mxu0 %v576
        %v1092 = vpop.f32.mrf.mxu0
        %v1093 = vadd.f32 0.0, %v1092
        %v1094 = vpop.f32.mrf.mxu0
        %v1095 = vadd.f32 0.0, %v1094
        %1096 = vmatmul.bf16.gmra.mxu0 %v577
        %v1097 = vpop.f32.mrf.mxu0
        %v1098 = vadd.f32 0.0, %v1097
        %v1099 = vpop.f32.mrf.mxu0
        %v1100 = vadd.f32 0.0, %v1099
        %1101 = vmatmul.bf16.gmra.mxu0 %v578
        %v1102 = vpop.f32.mrf.mxu0
        %v1103 = vadd.f32 0.0, %v1102
        %v1104 = vpop.f32.mrf.mxu0
        %v1105 = vadd.f32 0.0, %v1104
        %1106 = vmatmul.bf16.gmra.mxu0 %v579
        %v1107 = vpop.f32.mrf.mxu0
        %v1108 = vadd.f32 0.0, %v1107
        %v1109 = vpop.f32.mrf.mxu0
        %v1110 = vadd.f32 0.0, %v1109
        %1111 = vdwg.mxu0
        %v1112 = vpack.c.bf16 %v855, %v766
        %v1113 = vpack.c.bf16 %v1033, %v944
        %v1114 = vpack.c.bf16 %v857, %v768
        %v1115 = vpack.c.bf16 %v1035, %v946
        %v1116 = vpack.c.bf16 %v860, %v771
        %v1117 = vpack.c.bf16 %v1038, %v949
        %v1118 = vpack.c.bf16 %v862, %v773
        %v1119 = vpack.c.bf16 %v1040, %v951
        %v1120 = vpack.c.bf16 %v865, %v776
        %v1121 = vpack.c.bf16 %v1043, %v954
        %v1122 = vpack.c.bf16 %v867, %v778
        %v1123 = vpack.c.bf16 %v1045, %v956
        %v1124 = vpack.c.bf16 %v870, %v781
        %v1125 = vpack.c.bf16 %v1048, %v959
        %v1126 = vpack.c.bf16 %v872, %v783
        %v1127 = vpack.c.bf16 %v1050, %v961
        %v1128 = vpack.c.bf16 %v875, %v786
        %v1129 = vpack.c.bf16 %v1053, %v964
        %v1130 = vpack.c.bf16 %v877, %v788
        %v1131 = vpack.c.bf16 %v1055, %v966
        %v1132 = vpack.c.bf16 %v880, %v791
        %v1133 = vpack.c.bf16 %v1058, %v969
        %v1134 = vpack.c.bf16 %v882, %v793
        %v1135 = vpack.c.bf16 %v1060, %v971
        %v1136 = vpack.c.bf16 %v885, %v796
        %v1137 = vpack.c.bf16 %v1063, %v974
        %v1138 = vpack.c.bf16 %v887, %v798
        %v1139 = vpack.c.bf16 %v1065, %v976
        %v1140 = vpack.c.bf16 %v890, %v801
        %v1141 = vpack.c.bf16 %v1068, %v979
        %v1142 = vpack.c.bf16 %v892, %v803
        %v1143 = vpack.c.bf16 %v1070, %v981
        %v1144 = vpack.c.bf16 %v895, %v806
        %v1145 = vpack.c.bf16 %v1073, %v984
        %v1146 = vpack.c.bf16 %v897, %v808
        %v1147 = vpack.c.bf16 %v1075, %v986
        %v1148 = vpack.c.bf16 %v900, %v811
        %v1149 = vpack.c.bf16 %v1078, %v989
        %v1150 = vpack.c.bf16 %v902, %v813
        %v1151 = vpack.c.bf16 %v1080, %v991
        %v1152 = vpack.c.bf16 %v905, %v816
        %v1153 = vpack.c.bf16 %v1083, %v994
        %v1154 = vpack.c.bf16 %v907, %v818
        %v1155 = vpack.c.bf16 %v1085, %v996
        %v1156 = vpack.c.bf16 %v910, %v821
        %v1157 = vpack.c.bf16 %v1088, %v999
        %v1158 = vpack.c.bf16 %v912, %v823
        %v1159 = vpack.c.bf16 %v1090, %v1001
        %v1160 = vpack.c.bf16 %v915, %v826
        %v1161 = vpack.c.bf16 %v1093, %v1004
        %v1162 = vpack.c.bf16 %v917, %v828
        %v1163 = vpack.c.bf16 %v1095, %v1006
        %v1164 = vpack.c.bf16 %v920, %v831
        %v1165 = vpack.c.bf16 %v1098, %v1009
        %v1166 = vpack.c.bf16 %v922, %v833
        %v1167 = vpack.c.bf16 %v1100, %v1011
        %v1168 = vpack.c.bf16 %v925, %v836
        %v1169 = vpack.c.bf16 %v1103, %v1014
        %v1170 = vpack.c.bf16 %v927, %v838
        %v1171 = vpack.c.bf16 %v1105, %v1016
        %v1172 = vpack.c.bf16 %v930, %v841
        %v1173 = vpack.c.bf16 %v1108, %v1019
        %v1174 = vpack.c.bf16 %v932, %v843
        %v1175 = vpack.c.bf16 %v1110, %v1021
        %v1176 = vld [vmem:[#allocation7] sm:$0xf]
        %1178 = vst [vmem:[#allocation1] ss:$9 sm:$0xff] %v1176
        %v1179 = vld [vmem:[#allocation1] sm:$0xff]
        %v1180 = vld [vmem:[#allocation1 + $0x9] sm:$0xff]
        %v1181 = vld [vmem:[#allocation1 + $0x12] sm:$0xff]
        %v1182 = vld [vmem:[#allocation1 + $0x1b] sm:$0xff]
        %v1183 = vpack.i.b16 %v1179, %v1179
        %v1185 = vperm.slane %v1183, 0
        %v1186 = vpack.i.b16 %v1180, %v1180
        %v1188 = vperm.slane %v1186, 0
        %v1189 = vpack.i.b16 %v1181, %v1181
        %v1191 = vperm.slane %v1189, 0
        %v1192 = vpack.i.b16 %v1182, %v1182
        %v1194 = vperm.slane %v1192, 0
        %v1195 = vunpack.c.l.bf16 %v1112
        %v1196 = vunpack.c.h.bf16 %v1112
        %v1197 = vunpack.c.l.bf16 %v1113
        %v1198 = vunpack.c.h.bf16 %v1113
        %v1199 = vunpack.c.l.bf16 %v1114
        %v1200 = vunpack.c.h.bf16 %v1114
        %v1201 = vunpack.c.l.bf16 %v1115
        %v1202 = vunpack.c.h.bf16 %v1115
        %v1203 = vunpack.c.l.bf16 %v1116
        %v1204 = vunpack.c.h.bf16 %v1116
        %v1205 = vunpack.c.l.bf16 %v1117
        %v1206 = vunpack.c.h.bf16 %v1117
        %v1207 = vunpack.c.l.bf16 %v1118
        %v1208 = vunpack.c.h.bf16 %v1118
        %v1209 = vunpack.c.l.bf16 %v1119
        %v1210 = vunpack.c.h.bf16 %v1119
        %v1211 = vunpack.c.l.bf16 %v1120
        %v1212 = vunpack.c.h.bf16 %v1120
        %v1213 = vunpack.c.l.bf16 %v1121
        %v1214 = vunpack.c.h.bf16 %v1121
        %v1215 = vunpack.c.l.bf16 %v1122
        %v1216 = vunpack.c.h.bf16 %v1122
        %v1217 = vunpack.c.l.bf16 %v1123
        %v1218 = vunpack.c.h.bf16 %v1123
        %v1219 = vunpack.c.l.bf16 %v1124
        %v1220 = vunpack.c.h.bf16 %v1124
        %v1221 = vunpack.c.l.bf16 %v1125
        %v1222 = vunpack.c.h.bf16 %v1125
        %v1223 = vunpack.c.l.bf16 %v1126
        %v1224 = vunpack.c.h.bf16 %v1126
        %v1225 = vunpack.c.l.bf16 %v1127
        %v1226 = vunpack.c.h.bf16 %v1127
        %v1227 = vunpack.c.l.bf16 %v1128
        %v1228 = vunpack.c.h.bf16 %v1128
        %v1229 = vunpack.c.l.bf16 %v1129
        %v1230 = vunpack.c.h.bf16 %v1129
        %v1231 = vunpack.c.l.bf16 %v1130
        %v1232 = vunpack.c.h.bf16 %v1130
        %v1233 = vunpack.c.l.bf16 %v1131
        %v1234 = vunpack.c.h.bf16 %v1131
        %v1235 = vunpack.c.l.bf16 %v1132
        %v1236 = vunpack.c.h.bf16 %v1132
        %v1237 = vunpack.c.l.bf16 %v1133
        %v1238 = vunpack.c.h.bf16 %v1133
        %v1239 = vunpack.c.l.bf16 %v1134
        %v1240 = vunpack.c.h.bf16 %v1134
        %v1241 = vunpack.c.l.bf16 %v1135
        %v1242 = vunpack.c.h.bf16 %v1135
        %v1243 = vunpack.c.l.bf16 %v1136
        %v1244 = vunpack.c.h.bf16 %v1136
        %v1245 = vunpack.c.l.bf16 %v1137
        %v1246 = vunpack.c.h.bf16 %v1137
        %v1247 = vunpack.c.l.bf16 %v1138
        %v1248 = vunpack.c.h.bf16 %v1138
        %v1249 = vunpack.c.l.bf16 %v1139
        %v1250 = vunpack.c.h.bf16 %v1139
        %v1251 = vunpack.c.l.bf16 %v1140
        %v1252 = vunpack.c.h.bf16 %v1140
        %v1253 = vunpack.c.l.bf16 %v1141
        %v1254 = vunpack.c.h.bf16 %v1141
        %v1255 = vunpack.c.l.bf16 %v1142
        %v1256 = vunpack.c.h.bf16 %v1142
        %v1257 = vunpack.c.l.bf16 %v1143
        %v1258 = vunpack.c.h.bf16 %v1143
        %v1259 = vunpack.c.l.bf16 %v1144
        %v1260 = vunpack.c.h.bf16 %v1144
        %v1261 = vunpack.c.l.bf16 %v1145
        %v1262 = vunpack.c.h.bf16 %v1145
        %v1263 = vunpack.c.l.bf16 %v1146
        %v1264 = vunpack.c.h.bf16 %v1146
        %v1265 = vunpack.c.l.bf16 %v1147
        %v1266 = vunpack.c.h.bf16 %v1147
        %v1267 = vunpack.c.l.bf16 %v1148
        %v1268 = vunpack.c.h.bf16 %v1148
        %v1269 = vunpack.c.l.bf16 %v1149
        %v1270 = vunpack.c.h.bf16 %v1149
        %v1271 = vunpack.c.l.bf16 %v1150
        %v1272 = vunpack.c.h.bf16 %v1150
        %v1273 = vunpack.c.l.bf16 %v1151
        %v1274 = vunpack.c.h.bf16 %v1151
        %v1275 = vunpack.c.l.bf16 %v1152
        %v1276 = vunpack.c.h.bf16 %v1152
        %v1277 = vunpack.c.l.bf16 %v1153
        %v1278 = vunpack.c.h.bf16 %v1153
        %v1279 = vunpack.c.l.bf16 %v1154
        %v1280 = vunpack.c.h.bf16 %v1154
        %v1281 = vunpack.c.l.bf16 %v1155
        %v1282 = vunpack.c.h.bf16 %v1155
        %v1283 = vunpack.c.l.bf16 %v1156
        %v1284 = vunpack.c.h.bf16 %v1156
        %v1285 = vunpack.c.l.bf16 %v1157
        %v1286 = vunpack.c.h.bf16 %v1157
        %v1287 = vunpack.c.l.bf16 %v1158
        %v1288 = vunpack.c.h.bf16 %v1158
        %v1289 = vunpack.c.l.bf16 %v1159
        %v1290 = vunpack.c.h.bf16 %v1159
        %v1291 = vunpack.c.l.bf16 %v1160
        %v1292 = vunpack.c.h.bf16 %v1160
        %v1293 = vunpack.c.l.bf16 %v1161
        %v1294 = vunpack.c.h.bf16 %v1161
        %v1295 = vunpack.c.l.bf16 %v1162
        %v1296 = vunpack.c.h.bf16 %v1162
        %v1297 = vunpack.c.l.bf16 %v1163
        %v1298 = vunpack.c.h.bf16 %v1163
        %v1299 = vunpack.c.l.bf16 %v1164
        %v1300 = vunpack.c.h.bf16 %v1164
        %v1301 = vunpack.c.l.bf16 %v1165
        %v1302 = vunpack.c.h.bf16 %v1165
        %v1303 = vunpack.c.l.bf16 %v1166
        %v1304 = vunpack.c.h.bf16 %v1166
        %v1305 = vunpack.c.l.bf16 %v1167
        %v1306 = vunpack.c.h.bf16 %v1167
        %v1307 = vunpack.c.l.bf16 %v1168
        %v1308 = vunpack.c.h.bf16 %v1168
        %v1309 = vunpack.c.l.bf16 %v1169
        %v1310 = vunpack.c.h.bf16 %v1169
        %v1311 = vunpack.c.l.bf16 %v1170
        %v1312 = vunpack.c.h.bf16 %v1170
        %v1313 = vunpack.c.l.bf16 %v1171
        %v1314 = vunpack.c.h.bf16 %v1171
        %v1315 = vunpack.c.l.bf16 %v1172
        %v1316 = vunpack.c.h.bf16 %v1172
        %v1317 = vunpack.c.l.bf16 %v1173
        %v1318 = vunpack.c.h.bf16 %v1173
        %v1319 = vunpack.c.l.bf16 %v1174
        %v1320 = vunpack.c.h.bf16 %v1174
        %v1321 = vunpack.c.l.bf16 %v1175
        %v1322 = vunpack.c.h.bf16 %v1175
        %v1323 = vunpack.c.l.bf16 %v1185
        %v1324 = vunpack.c.l.bf16 %v1188
        %v1325 = vunpack.c.l.bf16 %v1191
        %v1326 = vunpack.c.l.bf16 %v1194
        %v1327 = vadd.f32 %v1195, %v1323
        %v1328 = vadd.f32 %v1196, %v1324
        %v1329 = vadd.f32 %v1197, %v1325
        %v1330 = vadd.f32 %v1198, %v1326
        %v1331 = vadd.f32 %v1199, %v1323
        %v1332 = vadd.f32 %v1200, %v1324
        %v1333 = vadd.f32 %v1201, %v1325
        %v1334 = vadd.f32 %v1202, %v1326
        %v1335 = vadd.f32 %v1203, %v1323
        %v1336 = vadd.f32 %v1204, %v1324
        %v1337 = vadd.f32 %v1205, %v1325
        %v1338 = vadd.f32 %v1206, %v1326
        %v1339 = vadd.f32 %v1207, %v1323
        %v1340 = vadd.f32 %v1208, %v1324
        %v1341 = vadd.f32 %v1209, %v1325
        %v1342 = vadd.f32 %v1210, %v1326
        %v1343 = vadd.f32 %v1211, %v1323
        %v1344 = vadd.f32 %v1212, %v1324
        %v1345 = vadd.f32 %v1213, %v1325
        %v1346 = vadd.f32 %v1214, %v1326
        %v1347 = vadd.f32 %v1215, %v1323
        %v1348 = vadd.f32 %v1216, %v1324
        %v1349 = vadd.f32 %v1217, %v1325
        %v1350 = vadd.f32 %v1218, %v1326
        %v1351 = vadd.f32 %v1219, %v1323
        %v1352 = vadd.f32 %v1220, %v1324
        %v1353 = vadd.f32 %v1221, %v1325
        %v1354 = vadd.f32 %v1222, %v1326
        %v1355 = vadd.f32 %v1223, %v1323
        %v1356 = vadd.f32 %v1224, %v1324
        %v1357 = vadd.f32 %v1225, %v1325
        %v1358 = vadd.f32 %v1226, %v1326
        %v1359 = vadd.f32 %v1227, %v1323
        %v1360 = vadd.f32 %v1228, %v1324
        %v1361 = vadd.f32 %v1229, %v1325
        %v1362 = vadd.f32 %v1230, %v1326
        %v1363 = vadd.f32 %v1231, %v1323
        %v1364 = vadd.f32 %v1232, %v1324
        %v1365 = vadd.f32 %v1233, %v1325
        %v1366 = vadd.f32 %v1234, %v1326
        %v1367 = vadd.f32 %v1235, %v1323
        %v1368 = vadd.f32 %v1236, %v1324
        %v1369 = vadd.f32 %v1237, %v1325
        %v1370 = vadd.f32 %v1238, %v1326
        %v1371 = vadd.f32 %v1239, %v1323
        %v1372 = vadd.f32 %v1240, %v1324
        %v1373 = vadd.f32 %v1241, %v1325
        %v1374 = vadd.f32 %v1242, %v1326
        %v1375 = vadd.f32 %v1243, %v1323
        %v1376 = vadd.f32 %v1244, %v1324
        %v1377 = vadd.f32 %v1245, %v1325
        %v1378 = vadd.f32 %v1246, %v1326
        %v1379 = vadd.f32 %v1247, %v1323
        %v1380 = vadd.f32 %v1248, %v1324
        %v1381 = vadd.f32 %v1249, %v1325
        %v1382 = vadd.f32 %v1250, %v1326
        %v1383 = vadd.f32 %v1251, %v1323
        %v1384 = vadd.f32 %v1252, %v1324
        %v1385 = vadd.f32 %v1253, %v1325
        %v1386 = vadd.f32 %v1254, %v1326
        %v1387 = vadd.f32 %v1255, %v1323
        %v1388 = vadd.f32 %v1256, %v1324
        %v1389 = vadd.f32 %v1257, %v1325
        %v1390 = vadd.f32 %v1258, %v1326
        %v1391 = vadd.f32 %v1259, %v1323
        %v1392 = vadd.f32 %v1260, %v1324
        %v1393 = vadd.f32 %v1261, %v1325
        %v1394 = vadd.f32 %v1262, %v1326
        %v1395 = vadd.f32 %v1263, %v1323
        %v1396 = vadd.f32 %v1264, %v1324
        %v1397 = vadd.f32 %v1265, %v1325
        %v1398 = vadd.f32 %v1266, %v1326
        %v1399 = vadd.f32 %v1267, %v1323
        %v1400 = vadd.f32 %v1268, %v1324
        %v1401 = vadd.f32 %v1269, %v1325
        %v1402 = vadd.f32 %v1270, %v1326
        %v1403 = vadd.f32 %v1271, %v1323
        %v1404 = vadd.f32 %v1272, %v1324
        %v1405 = vadd.f32 %v1273, %v1325
        %v1406 = vadd.f32 %v1274, %v1326
        %v1407 = vadd.f32 %v1275, %v1323
        %v1408 = vadd.f32 %v1276, %v1324
        %v1409 = vadd.f32 %v1277, %v1325
        %v1410 = vadd.f32 %v1278, %v1326
        %v1411 = vadd.f32 %v1279, %v1323
        %v1412 = vadd.f32 %v1280, %v1324
        %v1413 = vadd.f32 %v1281, %v1325
        %v1414 = vadd.f32 %v1282, %v1326
        %v1415 = vadd.f32 %v1283, %v1323
        %v1416 = vadd.f32 %v1284, %v1324
        %v1417 = vadd.f32 %v1285, %v1325
        %v1418 = vadd.f32 %v1286, %v1326
        %v1419 = vadd.f32 %v1287, %v1323
        %v1420 = vadd.f32 %v1288, %v1324
        %v1421 = vadd.f32 %v1289, %v1325
        %v1422 = vadd.f32 %v1290, %v1326
        %v1423 = vadd.f32 %v1291, %v1323
        %v1424 = vadd.f32 %v1292, %v1324
        %v1425 = vadd.f32 %v1293, %v1325
        %v1426 = vadd.f32 %v1294, %v1326
        %v1427 = vadd.f32 %v1295, %v1323
        %v1428 = vadd.f32 %v1296, %v1324
        %v1429 = vadd.f32 %v1297, %v1325
        %v1430 = vadd.f32 %v1298, %v1326
        %v1431 = vadd.f32 %v1299, %v1323
        %v1432 = vadd.f32 %v1300, %v1324
        %v1433 = vadd.f32 %v1301, %v1325
        %v1434 = vadd.f32 %v1302, %v1326
        %v1435 = vadd.f32 %v1303, %v1323
        %v1436 = vadd.f32 %v1304, %v1324
        %v1437 = vadd.f32 %v1305, %v1325
        %v1438 = vadd.f32 %v1306, %v1326
        %v1439 = vadd.f32 %v1307, %v1323
        %v1440 = vadd.f32 %v1308, %v1324
        %v1441 = vadd.f32 %v1309, %v1325
        %v1442 = vadd.f32 %v1310, %v1326
        %v1443 = vadd.f32 %v1311, %v1323
        %v1444 = vadd.f32 %v1312, %v1324
        %v1445 = vadd.f32 %v1313, %v1325
        %v1446 = vadd.f32 %v1314, %v1326
        %v1447 = vadd.f32 %v1315, %v1323
        %v1448 = vadd.f32 %v1316, %v1324
        %v1449 = vadd.f32 %v1317, %v1325
        %v1450 = vadd.f32 %v1318, %v1326
        %v1451 = vadd.f32 %v1319, %v1323
        %v1452 = vadd.f32 %v1320, %v1324
        %v1453 = vadd.f32 %v1321, %v1325
        %v1454 = vadd.f32 %v1322, %v1326
        %v1455 = vpack.c.bf16 %v1328, %v1327
        %v1456 = vpack.c.bf16 %v1330, %v1329
        %v1457 = vpack.c.bf16 %v1332, %v1331
        %v1458 = vpack.c.bf16 %v1334, %v1333
        %v1459 = vpack.c.bf16 %v1336, %v1335
        %v1460 = vpack.c.bf16 %v1338, %v1337
        %v1461 = vpack.c.bf16 %v1340, %v1339
        %v1462 = vpack.c.bf16 %v1342, %v1341
        %v1463 = vpack.c.bf16 %v1344, %v1343
        %v1464 = vpack.c.bf16 %v1346, %v1345
        %v1465 = vpack.c.bf16 %v1348, %v1347
        %v1466 = vpack.c.bf16 %v1350, %v1349
        %v1467 = vpack.c.bf16 %v1352, %v1351
        %v1468 = vpack.c.bf16 %v1354, %v1353
        %v1469 = vpack.c.bf16 %v1356, %v1355
        %v1470 = vpack.c.bf16 %v1358, %v1357
        %v1471 = vpack.c.bf16 %v1360, %v1359
        %v1472 = vpack.c.bf16 %v1362, %v1361
        %v1473 = vpack.c.bf16 %v1364, %v1363
        %v1474 = vpack.c.bf16 %v1366, %v1365
        %v1475 = vpack.c.bf16 %v1368, %v1367
        %v1476 = vpack.c.bf16 %v1370, %v1369
        %v1477 = vpack.c.bf16 %v1372, %v1371
        %v1478 = vpack.c.bf16 %v1374, %v1373
        %v1479 = vpack.c.bf16 %v1376, %v1375
        %v1480 = vpack.c.bf16 %v1378, %v1377
        %v1481 = vpack.c.bf16 %v1380, %v1379
        %v1482 = vpack.c.bf16 %v1382, %v1381
        %v1483 = vpack.c.bf16 %v1384, %v1383
        %v1484 = vpack.c.bf16 %v1386, %v1385
        %v1485 = vpack.c.bf16 %v1388, %v1387
        %v1486 = vpack.c.bf16 %v1390, %v1389
        %v1487 = vpack.c.bf16 %v1392, %v1391
        %v1488 = vpack.c.bf16 %v1394, %v1393
        %v1489 = vpack.c.bf16 %v1396, %v1395
        %v1490 = vpack.c.bf16 %v1398, %v1397
        %v1491 = vpack.c.bf16 %v1400, %v1399
        %v1492 = vpack.c.bf16 %v1402, %v1401
        %v1493 = vpack.c.bf16 %v1404, %v1403
        %v1494 = vpack.c.bf16 %v1406, %v1405
        %v1495 = vpack.c.bf16 %v1408, %v1407
        %v1496 = vpack.c.bf16 %v1410, %v1409
        %v1497 = vpack.c.bf16 %v1412, %v1411
        %v1498 = vpack.c.bf16 %v1414, %v1413
        %v1499 = vpack.c.bf16 %v1416, %v1415
        %v1500 = vpack.c.bf16 %v1418, %v1417
        %v1501 = vpack.c.bf16 %v1420, %v1419
        %v1502 = vpack.c.bf16 %v1422, %v1421
        %v1503 = vpack.c.bf16 %v1424, %v1423
        %v1504 = vpack.c.bf16 %v1426, %v1425
        %v1505 = vpack.c.bf16 %v1428, %v1427
        %v1506 = vpack.c.bf16 %v1430, %v1429
        %v1507 = vpack.c.bf16 %v1432, %v1431
        %v1508 = vpack.c.bf16 %v1434, %v1433
        %v1509 = vpack.c.bf16 %v1436, %v1435
        %v1510 = vpack.c.bf16 %v1438, %v1437
        %v1511 = vpack.c.bf16 %v1440, %v1439
        %v1512 = vpack.c.bf16 %v1442, %v1441
        %v1513 = vpack.c.bf16 %v1444, %v1443
        %v1514 = vpack.c.bf16 %v1446, %v1445
        %v1515 = vpack.c.bf16 %v1448, %v1447
        %v1516 = vpack.c.bf16 %v1450, %v1449
        %v1517 = vpack.c.bf16 %v1452, %v1451
        %v1518 = vpack.c.bf16 %v1454, %v1453
        %v1519 = vunpack.c.l.bf16 %v1455
        %v1520 = vunpack.c.h.bf16 %v1455
        %v1521 = vunpack.c.l.bf16 %v1456
        %v1522 = vunpack.c.h.bf16 %v1456
        %v1523 = vunpack.c.l.bf16 %v1457
        %v1524 = vunpack.c.h.bf16 %v1457
        %v1525 = vunpack.c.l.bf16 %v1458
        %v1526 = vunpack.c.h.bf16 %v1458
        %v1527 = vunpack.c.l.bf16 %v1459
        %v1528 = vunpack.c.h.bf16 %v1459
        %v1529 = vunpack.c.l.bf16 %v1460
        %v1530 = vunpack.c.h.bf16 %v1460
        %v1531 = vunpack.c.l.bf16 %v1461
        %v1532 = vunpack.c.h.bf16 %v1461
        %v1533 = vunpack.c.l.bf16 %v1462
        %v1534 = vunpack.c.h.bf16 %v1462
        %v1535 = vunpack.c.l.bf16 %v1463
        %v1536 = vunpack.c.h.bf16 %v1463
        %v1537 = vunpack.c.l.bf16 %v1464
        %v1538 = vunpack.c.h.bf16 %v1464
        %v1539 = vunpack.c.l.bf16 %v1465
        %v1540 = vunpack.c.h.bf16 %v1465
        %v1541 = vunpack.c.l.bf16 %v1466
        %v1542 = vunpack.c.h.bf16 %v1466
        %v1543 = vunpack.c.l.bf16 %v1467
        %v1544 = vunpack.c.h.bf16 %v1467
        %v1545 = vunpack.c.l.bf16 %v1468
        %v1546 = vunpack.c.h.bf16 %v1468
        %v1547 = vunpack.c.l.bf16 %v1469
        %v1548 = vunpack.c.h.bf16 %v1469
        %v1549 = vunpack.c.l.bf16 %v1470
        %v1550 = vunpack.c.h.bf16 %v1470
        %v1551 = vunpack.c.l.bf16 %v1471
        %v1552 = vunpack.c.h.bf16 %v1471
        %v1553 = vunpack.c.l.bf16 %v1472
        %v1554 = vunpack.c.h.bf16 %v1472
        %v1555 = vunpack.c.l.bf16 %v1473
        %v1556 = vunpack.c.h.bf16 %v1473
        %v1557 = vunpack.c.l.bf16 %v1474
        %v1558 = vunpack.c.h.bf16 %v1474
        %v1559 = vunpack.c.l.bf16 %v1475
        %v1560 = vunpack.c.h.bf16 %v1475
        %v1561 = vunpack.c.l.bf16 %v1476
        %v1562 = vunpack.c.h.bf16 %v1476
        %v1563 = vunpack.c.l.bf16 %v1477
        %v1564 = vunpack.c.h.bf16 %v1477
        %v1565 = vunpack.c.l.bf16 %v1478
        %v1566 = vunpack.c.h.bf16 %v1478
        %v1567 = vunpack.c.l.bf16 %v1479
        %v1568 = vunpack.c.h.bf16 %v1479
        %v1569 = vunpack.c.l.bf16 %v1480
        %v1570 = vunpack.c.h.bf16 %v1480
        %v1571 = vunpack.c.l.bf16 %v1481
        %v1572 = vunpack.c.h.bf16 %v1481
        %v1573 = vunpack.c.l.bf16 %v1482
        %v1574 = vunpack.c.h.bf16 %v1482
        %v1575 = vunpack.c.l.bf16 %v1483
        %v1576 = vunpack.c.h.bf16 %v1483
        %v1577 = vunpack.c.l.bf16 %v1484
        %v1578 = vunpack.c.h.bf16 %v1484
        %v1579 = vunpack.c.l.bf16 %v1485
        %v1580 = vunpack.c.h.bf16 %v1485
        %v1581 = vunpack.c.l.bf16 %v1486
        %v1582 = vunpack.c.h.bf16 %v1486
        %v1583 = vunpack.c.l.bf16 %v1487
        %v1584 = vunpack.c.h.bf16 %v1487
        %v1585 = vunpack.c.l.bf16 %v1488
        %v1586 = vunpack.c.h.bf16 %v1488
        %v1587 = vunpack.c.l.bf16 %v1489
        %v1588 = vunpack.c.h.bf16 %v1489
        %v1589 = vunpack.c.l.bf16 %v1490
        %v1590 = vunpack.c.h.bf16 %v1490
        %v1591 = vunpack.c.l.bf16 %v1491
        %v1592 = vunpack.c.h.bf16 %v1491
        %v1593 = vunpack.c.l.bf16 %v1492
        %v1594 = vunpack.c.h.bf16 %v1492
        %v1595 = vunpack.c.l.bf16 %v1493
        %v1596 = vunpack.c.h.bf16 %v1493
        %v1597 = vunpack.c.l.bf16 %v1494
        %v1598 = vunpack.c.h.bf16 %v1494
        %v1599 = vunpack.c.l.bf16 %v1495
        %v1600 = vunpack.c.h.bf16 %v1495
        %v1601 = vunpack.c.l.bf16 %v1496
        %v1602 = vunpack.c.h.bf16 %v1496
        %v1603 = vunpack.c.l.bf16 %v1497
        %v1604 = vunpack.c.h.bf16 %v1497
        %v1605 = vunpack.c.l.bf16 %v1498
        %v1606 = vunpack.c.h.bf16 %v1498
        %v1607 = vunpack.c.l.bf16 %v1499
        %v1608 = vunpack.c.h.bf16 %v1499
        %v1609 = vunpack.c.l.bf16 %v1500
        %v1610 = vunpack.c.h.bf16 %v1500
        %v1611 = vunpack.c.l.bf16 %v1501
        %v1612 = vunpack.c.h.bf16 %v1501
        %v1613 = vunpack.c.l.bf16 %v1502
        %v1614 = vunpack.c.h.bf16 %v1502
        %v1615 = vunpack.c.l.bf16 %v1503
        %v1616 = vunpack.c.h.bf16 %v1503
        %v1617 = vunpack.c.l.bf16 %v1504
        %v1618 = vunpack.c.h.bf16 %v1504
        %v1619 = vunpack.c.l.bf16 %v1505
        %v1620 = vunpack.c.h.bf16 %v1505
        %v1621 = vunpack.c.l.bf16 %v1506
        %v1622 = vunpack.c.h.bf16 %v1506
        %v1623 = vunpack.c.l.bf16 %v1507
        %v1624 = vunpack.c.h.bf16 %v1507
        %v1625 = vunpack.c.l.bf16 %v1508
        %v1626 = vunpack.c.h.bf16 %v1508
        %v1627 = vunpack.c.l.bf16 %v1509
        %v1628 = vunpack.c.h.bf16 %v1509
        %v1629 = vunpack.c.l.bf16 %v1510
        %v1630 = vunpack.c.h.bf16 %v1510
        %v1631 = vunpack.c.l.bf16 %v1511
        %v1632 = vunpack.c.h.bf16 %v1511
        %v1633 = vunpack.c.l.bf16 %v1512
        %v1634 = vunpack.c.h.bf16 %v1512
        %v1635 = vunpack.c.l.bf16 %v1513
        %v1636 = vunpack.c.h.bf16 %v1513
        %v1637 = vunpack.c.l.bf16 %v1514
        %v1638 = vunpack.c.h.bf16 %v1514
        %v1639 = vunpack.c.l.bf16 %v1515
        %v1640 = vunpack.c.h.bf16 %v1515
        %v1641 = vunpack.c.l.bf16 %v1516
        %v1642 = vunpack.c.h.bf16 %v1516
        %v1643 = vunpack.c.l.bf16 %v1517
        %v1644 = vunpack.c.h.bf16 %v1517
        %v1645 = vunpack.c.l.bf16 %v1518
        %v1646 = vunpack.c.h.bf16 %v1518
        %v1647 = vmax.f32 %v1519, 0.0
        %v1648 = vmax.f32 %v1520, 0.0
        %v1649 = vmax.f32 %v1521, 0.0
        %v1650 = vmax.f32 %v1522, 0.0
        %v1651 = vmax.f32 %v1523, 0.0
        %v1652 = vmax.f32 %v1524, 0.0
        %v1653 = vmax.f32 %v1525, 0.0
        %v1654 = vmax.f32 %v1526, 0.0
        %v1655 = vmax.f32 %v1527, 0.0
        %v1656 = vmax.f32 %v1528, 0.0
        %v1657 = vmax.f32 %v1529, 0.0
        %v1658 = vmax.f32 %v1530, 0.0
        %v1659 = vmax.f32 %v1531, 0.0
        %v1660 = vmax.f32 %v1532, 0.0
        %v1661 = vmax.f32 %v1533, 0.0
        %v1662 = vmax.f32 %v1534, 0.0
        %v1663 = vmax.f32 %v1535, 0.0
        %v1664 = vmax.f32 %v1536, 0.0
        %v1665 = vmax.f32 %v1537, 0.0
        %v1666 = vmax.f32 %v1538, 0.0
        %v1667 = vmax.f32 %v1539, 0.0
        %v1668 = vmax.f32 %v1540, 0.0
        %v1669 = vmax.f32 %v1541, 0.0
        %v1670 = vmax.f32 %v1542, 0.0
        %v1671 = vmax.f32 %v1543, 0.0
        %v1672 = vmax.f32 %v1544, 0.0
        %v1673 = vmax.f32 %v1545, 0.0
        %v1674 = vmax.f32 %v1546, 0.0
        %v1675 = vmax.f32 %v1547, 0.0
        %v1676 = vmax.f32 %v1548, 0.0
        %v1677 = vmax.f32 %v1549, 0.0
        %v1678 = vmax.f32 %v1550, 0.0
        %v1679 = vmax.f32 %v1551, 0.0
        %v1680 = vmax.f32 %v1552, 0.0
        %v1681 = vmax.f32 %v1553, 0.0
        %v1682 = vmax.f32 %v1554, 0.0
        %v1683 = vmax.f32 %v1555, 0.0
        %v1684 = vmax.f32 %v1556, 0.0
        %v1685 = vmax.f32 %v1557, 0.0
        %v1686 = vmax.f32 %v1558, 0.0
        %v1687 = vmax.f32 %v1559, 0.0
        %v1688 = vmax.f32 %v1560, 0.0
        %v1689 = vmax.f32 %v1561, 0.0
        %v1690 = vmax.f32 %v1562, 0.0
        %v1691 = vmax.f32 %v1563, 0.0
        %v1692 = vmax.f32 %v1564, 0.0
        %v1693 = vmax.f32 %v1565, 0.0
        %v1694 = vmax.f32 %v1566, 0.0
        %v1695 = vmax.f32 %v1567, 0.0
        %v1696 = vmax.f32 %v1568, 0.0
        %v1697 = vmax.f32 %v1569, 0.0
        %v1698 = vmax.f32 %v1570, 0.0
        %v1699 = vmax.f32 %v1571, 0.0
        %v1700 = vmax.f32 %v1572, 0.0
        %v1701 = vmax.f32 %v1573, 0.0
        %v1702 = vmax.f32 %v1574, 0.0
        %v1703 = vmax.f32 %v1575, 0.0
        %v1704 = vmax.f32 %v1576, 0.0
        %v1705 = vmax.f32 %v1577, 0.0
        %v1706 = vmax.f32 %v1578, 0.0
        %v1707 = vmax.f32 %v1579, 0.0
        %v1708 = vmax.f32 %v1580, 0.0
        %v1709 = vmax.f32 %v1581, 0.0
        %v1710 = vmax.f32 %v1582, 0.0
        %v1711 = vmax.f32 %v1583, 0.0
        %v1712 = vmax.f32 %v1584, 0.0
        %v1713 = vmax.f32 %v1585, 0.0
        %v1714 = vmax.f32 %v1586, 0.0
        %v1715 = vmax.f32 %v1587, 0.0
        %v1716 = vmax.f32 %v1588, 0.0
        %v1717 = vmax.f32 %v1589, 0.0
        %v1718 = vmax.f32 %v1590, 0.0
        %v1719 = vmax.f32 %v1591, 0.0
        %v1720 = vmax.f32 %v1592, 0.0
        %v1721 = vmax.f32 %v1593, 0.0
        %v1722 = vmax.f32 %v1594, 0.0
        %v1723 = vmax.f32 %v1595, 0.0
        %v1724 = vmax.f32 %v1596, 0.0
        %v1725 = vmax.f32 %v1597, 0.0
        %v1726 = vmax.f32 %v1598, 0.0
        %v1727 = vmax.f32 %v1599, 0.0
        %v1728 = vmax.f32 %v1600, 0.0
        %v1729 = vmax.f32 %v1601, 0.0
        %v1730 = vmax.f32 %v1602, 0.0
        %v1731 = vmax.f32 %v1603, 0.0
        %v1732 = vmax.f32 %v1604, 0.0
        %v1733 = vmax.f32 %v1605, 0.0
        %v1734 = vmax.f32 %v1606, 0.0
        %v1735 = vmax.f32 %v1607, 0.0
        %v1736 = vmax.f32 %v1608, 0.0
        %v1737 = vmax.f32 %v1609, 0.0
        %v1738 = vmax.f32 %v1610, 0.0
        %v1739 = vmax.f32 %v1611, 0.0
        %v1740 = vmax.f32 %v1612, 0.0
        %v1741 = vmax.f32 %v1613, 0.0
        %v1742 = vmax.f32 %v1614, 0.0
        %v1743 = vmax.f32 %v1615, 0.0
        %v1744 = vmax.f32 %v1616, 0.0
        %v1745 = vmax.f32 %v1617, 0.0
        %v1746 = vmax.f32 %v1618, 0.0
        %v1747 = vmax.f32 %v1619, 0.0
        %v1748 = vmax.f32 %v1620, 0.0
        %v1749 = vmax.f32 %v1621, 0.0
        %v1750 = vmax.f32 %v1622, 0.0
        %v1751 = vmax.f32 %v1623, 0.0
        %v1752 = vmax.f32 %v1624, 0.0
        %v1753 = vmax.f32 %v1625, 0.0
        %v1754 = vmax.f32 %v1626, 0.0
        %v1755 = vmax.f32 %v1627, 0.0
        %v1756 = vmax.f32 %v1628, 0.0
        %v1757 = vmax.f32 %v1629, 0.0
        %v1758 = vmax.f32 %v1630, 0.0
        %v1759 = vmax.f32 %v1631, 0.0
        %v1760 = vmax.f32 %v1632, 0.0
        %v1761 = vmax.f32 %v1633, 0.0
        %v1762 = vmax.f32 %v1634, 0.0
        %v1763 = vmax.f32 %v1635, 0.0
        %v1764 = vmax.f32 %v1636, 0.0
        %v1765 = vmax.f32 %v1637, 0.0
        %v1766 = vmax.f32 %v1638, 0.0
        %v1767 = vmax.f32 %v1639, 0.0
        %v1768 = vmax.f32 %v1640, 0.0
        %v1769 = vmax.f32 %v1641, 0.0
        %v1770 = vmax.f32 %v1642, 0.0
        %v1771 = vmax.f32 %v1643, 0.0
        %v1772 = vmax.f32 %v1644, 0.0
        %v1773 = vmax.f32 %v1645, 0.0
        %v1774 = vmax.f32 %v1646, 0.0
        %v1775 = vpack.c.bf16 %v1651, %v1647
        %v1776 = vpack.c.bf16 %v1652, %v1648
        %v1777 = vpack.c.bf16 %v1653, %v1649
        %v1778 = vpack.c.bf16 %v1654, %v1650
        %v1779 = vpack.c.bf16 %v1659, %v1655
        %v1780 = vpack.c.bf16 %v1660, %v1656
        %v1781 = vpack.c.bf16 %v1661, %v1657
        %v1782 = vpack.c.bf16 %v1662, %v1658
        %v1783 = vpack.c.bf16 %v1667, %v1663
        %v1784 = vpack.c.bf16 %v1668, %v1664
        %v1785 = vpack.c.bf16 %v1669, %v1665
        %v1786 = vpack.c.bf16 %v1670, %v1666
        %v1787 = vpack.c.bf16 %v1675, %v1671
        %v1788 = vpack.c.bf16 %v1676, %v1672
        %v1789 = vpack.c.bf16 %v1677, %v1673
        %v1790 = vpack.c.bf16 %v1678, %v1674
        %v1791 = vpack.c.bf16 %v1683, %v1679
        %v1792 = vpack.c.bf16 %v1684, %v1680
        %v1793 = vpack.c.bf16 %v1685, %v1681
        %v1794 = vpack.c.bf16 %v1686, %v1682
        %v1795 = vpack.c.bf16 %v1691, %v1687
        %v1796 = vpack.c.bf16 %v1692, %v1688
        %v1797 = vpack.c.bf16 %v1693, %v1689
        %v1798 = vpack.c.bf16 %v1694, %v1690
        %v1799 = vpack.c.bf16 %v1699, %v1695
        %v1800 = vpack.c.bf16 %v1700, %v1696
        %v1801 = vpack.c.bf16 %v1701, %v1697
        %v1802 = vpack.c.bf16 %v1702, %v1698
        %v1803 = vpack.c.bf16 %v1707, %v1703
        %v1804 = vpack.c.bf16 %v1708, %v1704
        %v1805 = vpack.c.bf16 %v1709, %v1705
        %v1806 = vpack.c.bf16 %v1710, %v1706
        %v1807 = vpack.c.bf16 %v1715, %v1711
        %v1808 = vpack.c.bf16 %v1716, %v1712
        %v1809 = vpack.c.bf16 %v1717, %v1713
        %v1810 = vpack.c.bf16 %v1718, %v1714
        %v1811 = vpack.c.bf16 %v1723, %v1719
        %v1812 = vpack.c.bf16 %v1724, %v1720
        %v1813 = vpack.c.bf16 %v1725, %v1721
        %v1814 = vpack.c.bf16 %v1726, %v1722
        %v1815 = vpack.c.bf16 %v1731, %v1727
        %v1816 = vpack.c.bf16 %v1732, %v1728
        %v1817 = vpack.c.bf16 %v1733, %v1729
        %v1818 = vpack.c.bf16 %v1734, %v1730
        %v1819 = vpack.c.bf16 %v1739, %v1735
        %v1820 = vpack.c.bf16 %v1740, %v1736
        %v1821 = vpack.c.bf16 %v1741, %v1737
        %v1822 = vpack.c.bf16 %v1742, %v1738
        %v1823 = vpack.c.bf16 %v1747, %v1743
        %v1824 = vpack.c.bf16 %v1748, %v1744
        %v1825 = vpack.c.bf16 %v1749, %v1745
        %v1826 = vpack.c.bf16 %v1750, %v1746
        %v1827 = vpack.c.bf16 %v1755, %v1751
        %v1828 = vpack.c.bf16 %v1756, %v1752
        %v1829 = vpack.c.bf16 %v1757, %v1753
        %v1830 = vpack.c.bf16 %v1758, %v1754
        %v1831 = vpack.c.bf16 %v1763, %v1759
        %v1832 = vpack.c.bf16 %v1764, %v1760
        %v1833 = vpack.c.bf16 %v1765, %v1761
        %v1834 = vpack.c.bf16 %v1766, %v1762
        %v1835 = vpack.c.bf16 %v1771, %v1767
        %v1836 = vpack.c.bf16 %v1772, %v1768
        %v1837 = vpack.c.bf16 %v1773, %v1769
        %v1838 = vpack.c.bf16 %v1774, %v1770
        %v1839 = vld [vmem:[#allocation8] sm:$0xff]
        %v1840 = vld [vmem:[#allocation8 + $0x8] sm:$0xff]
        %v1841 = vld [vmem:[#allocation8 + $0x10] sm:$0xff]
        %v1842 = vld [vmem:[#allocation8 + $0x18] sm:$0xff]
        %v1843 = vld [vmem:[#allocation8 + $0x20] sm:$0xff]
        %v1844 = vld [vmem:[#allocation8 + $0x28] sm:$0xff]
        %v1845 = vld [vmem:[#allocation8 + $0x30] sm:$0xff]
        %v1846 = vld [vmem:[#allocation8 + $0x38] sm:$0xff]
        %v1847 = vld [vmem:[#allocation8 + $0x40] sm:$0xff]
        %v1848 = vld [vmem:[#allocation8 + $0x48] sm:$0xff]
        %v1849 = vld [vmem:[#allocation8 + $0x50] sm:$0xff]
        %v1850 = vld [vmem:[#allocation8 + $0x58] sm:$0xff]
        %v1851 = vld [vmem:[#allocation8 + $0x60] sm:$0xff]
        %v1852 = vld [vmem:[#allocation8 + $0x68] sm:$0xff]
        %v1853 = vld [vmem:[#allocation8 + $0x70] sm:$0xff]
        %v1854 = vld [vmem:[#allocation8 + $0x78] sm:$0xff]
        %v1855 = vld [vmem:[#allocation8 + $0x80] sm:$0xff]
        %v1856 = vld [vmem:[#allocation8 + $0x88] sm:$0xff]
        %v1857 = vld [vmem:[#allocation8 + $0x90] sm:$0xff]
        %v1858 = vld [vmem:[#allocation8 + $0x98] sm:$0xff]
        %v1859 = vld [vmem:[#allocation8 + $0xa0] sm:$0xff]
        %v1860 = vld [vmem:[#allocation8 + $0xa8] sm:$0xff]
        %v1861 = vld [vmem:[#allocation8 + $0xb0] sm:$0xff]
        %v1862 = vld [vmem:[#allocation8 + $0xb8] sm:$0xff]
        %v1863 = vld [vmem:[#allocation8 + $0xc0] sm:$0xff]
        %v1864 = vld [vmem:[#allocation8 + $0xc8] sm:$0xff]
        %v1865 = vld [vmem:[#allocation8 + $0xd0] sm:$0xff]
        %v1866 = vld [vmem:[#allocation8 + $0xd8] sm:$0xff]
        %v1867 = vld [vmem:[#allocation8 + $0xe0] sm:$0xff]
        %v1868 = vld [vmem:[#allocation8 + $0xe8] sm:$0xff]
        %v1869 = vld [vmem:[#allocation8 + $0xf0] sm:$0xff]
        %v1870 = vld [vmem:[#allocation8 + $0xf8] sm:$0xff]
        %v1871 = vld [vmem:[#allocation8 + $0x100] sm:$0xff]
        %v1872 = vld [vmem:[#allocation8 + $0x108] sm:$0xff]
        %v1873 = vld [vmem:[#allocation8 + $0x110] sm:$0xff]
        %v1874 = vld [vmem:[#allocation8 + $0x118] sm:$0xff]
        %v1875 = vld [vmem:[#allocation8 + $0x120] sm:$0xff]
        %v1876 = vld [vmem:[#allocation8 + $0x128] sm:$0xff]
        %v1877 = vld [vmem:[#allocation8 + $0x130] sm:$0xff]
        %v1878 = vld [vmem:[#allocation8 + $0x138] sm:$0xff]
        %v1879 = vld [vmem:[#allocation8 + $0x140] sm:$0xff]
        %v1880 = vld [vmem:[#allocation8 + $0x148] sm:$0xff]
        %v1881 = vld [vmem:[#allocation8 + $0x150] sm:$0xff]
        %v1882 = vld [vmem:[#allocation8 + $0x158] sm:$0xff]
        %v1883 = vld [vmem:[#allocation8 + $0x160] sm:$0xff]
        %v1884 = vld [vmem:[#allocation8 + $0x168] sm:$0xff]
        %v1885 = vld [vmem:[#allocation8 + $0x170] sm:$0xff]
        %v1886 = vld [vmem:[#allocation8 + $0x178] sm:$0xff]
        %v1887 = vld [vmem:[#allocation8 + $0x180] sm:$0xff]
        %v1888 = vld [vmem:[#allocation8 + $0x188] sm:$0xff]
        %v1889 = vld [vmem:[#allocation8 + $0x190] sm:$0xff]
        %v1890 = vld [vmem:[#allocation8 + $0x198] sm:$0xff]
        %v1891 = vld [vmem:[#allocation8 + $0x1a0] sm:$0xff]
        %v1892 = vld [vmem:[#allocation8 + $0x1a8] sm:$0xff]
        %v1893 = vld [vmem:[#allocation8 + $0x1b0] sm:$0xff]
        %v1894 = vld [vmem:[#allocation8 + $0x1b8] sm:$0xff]
        %v1895 = vld [vmem:[#allocation8 + $0x1c0] sm:$0xff]
        %v1896 = vld [vmem:[#allocation8 + $0x1c8] sm:$0xff]
        %v1897 = vld [vmem:[#allocation8 + $0x1d0] sm:$0xff]
        %v1898 = vld [vmem:[#allocation8 + $0x1d8] sm:$0xff]
        %v1899 = vld [vmem:[#allocation8 + $0x1e0] sm:$0xff]
        %v1900 = vld [vmem:[#allocation8 + $0x1e8] sm:$0xff]
        %v1901 = vld [vmem:[#allocation8 + $0x1f0] sm:$0xff]
        %v1902 = vld [vmem:[#allocation8 + $0x1f8] sm:$0xff]
        %v1967 = vunpack.c.l.b16 %v1839
        %v1968 = vunpack.c.h.b16 %v1839
        %v1969 = vunpack.c.l.b16 %v1840
        %v1970 = vunpack.c.h.b16 %v1840
        %v1971 = vunpack.c.l.b16 %v1841
        %v1972 = vunpack.c.h.b16 %v1841
        %v1973 = vunpack.c.l.b16 %v1842
        %v1974 = vunpack.c.h.b16 %v1842
        %v1975 = vunpack.c.l.b16 %v1843
        %v1976 = vunpack.c.h.b16 %v1843
        %v1977 = vunpack.c.l.b16 %v1844
        %v1978 = vunpack.c.h.b16 %v1844
        %v1979 = vunpack.c.l.b16 %v1845
        %v1980 = vunpack.c.h.b16 %v1845
        %v1981 = vunpack.c.l.b16 %v1846
        %v1982 = vunpack.c.h.b16 %v1846
        %v1983 = vunpack.c.l.b16 %v1847
        %v1984 = vunpack.c.h.b16 %v1847
        %v1985 = vunpack.c.l.b16 %v1848
        %v1986 = vunpack.c.h.b16 %v1848
        %v1987 = vunpack.c.l.b16 %v1849
        %v1988 = vunpack.c.h.b16 %v1849
        %v1989 = vunpack.c.l.b16 %v1850
        %v1990 = vunpack.c.h.b16 %v1850
        %v1991 = vunpack.c.l.b16 %v1851
        %v1992 = vunpack.c.h.b16 %v1851
        %v1993 = vunpack.c.l.b16 %v1852
        %v1994 = vunpack.c.h.b16 %v1852
        %v1995 = vunpack.c.l.b16 %v1853
        %v1996 = vunpack.c.h.b16 %v1853
        %v1997 = vunpack.c.l.b16 %v1854
        %v1998 = vunpack.c.h.b16 %v1854
        %v1999 = vunpack.c.l.b16 %v1855
        %v2000 = vunpack.c.h.b16 %v1855
        %v2001 = vunpack.c.l.b16 %v1856
        %v2002 = vunpack.c.h.b16 %v1856
        %v2003 = vunpack.c.l.b16 %v1857
        %v2004 = vunpack.c.h.b16 %v1857
        %v2005 = vunpack.c.l.b16 %v1858
        %v2006 = vunpack.c.h.b16 %v1858
        %v2007 = vunpack.c.l.b16 %v1859
        %v2008 = vunpack.c.h.b16 %v1859
        %v2009 = vunpack.c.l.b16 %v1860
        %v2010 = vunpack.c.h.b16 %v1860
        %v2011 = vunpack.c.l.b16 %v1861
        %v2012 = vunpack.c.h.b16 %v1861
        %v2013 = vunpack.c.l.b16 %v1862
        %v2014 = vunpack.c.h.b16 %v1862
        %v2015 = vunpack.c.l.b16 %v1863
        %v2016 = vunpack.c.h.b16 %v1863
        %v2017 = vunpack.c.l.b16 %v1864
        %v2018 = vunpack.c.h.b16 %v1864
        %v2019 = vunpack.c.l.b16 %v1865
        %v2020 = vunpack.c.h.b16 %v1865
        %v2021 = vunpack.c.l.b16 %v1866
        %v2022 = vunpack.c.h.b16 %v1866
        %v2023 = vunpack.c.l.b16 %v1867
        %v2024 = vunpack.c.h.b16 %v1867
        %v2025 = vunpack.c.l.b16 %v1868
        %v2026 = vunpack.c.h.b16 %v1868
        %v2027 = vunpack.c.l.b16 %v1869
        %v2028 = vunpack.c.h.b16 %v1869
        %v2029 = vunpack.c.l.b16 %v1870
        %v2030 = vunpack.c.h.b16 %v1870
        %v2031 = vunpack.c.l.b16 %v1871
        %v2032 = vunpack.c.h.b16 %v1871
        %v2033 = vunpack.c.l.b16 %v1872
        %v2034 = vunpack.c.h.b16 %v1872
        %v2035 = vunpack.c.l.b16 %v1873
        %v2036 = vunpack.c.h.b16 %v1873
        %v2037 = vunpack.c.l.b16 %v1874
        %v2038 = vunpack.c.h.b16 %v1874
        %v2039 = vunpack.c.l.b16 %v1875
        %v2040 = vunpack.c.h.b16 %v1875
        %v2041 = vunpack.c.l.b16 %v1876
        %v2042 = vunpack.c.h.b16 %v1876
        %v2043 = vunpack.c.l.b16 %v1877
        %v2044 = vunpack.c.h.b16 %v1877
        %v2045 = vunpack.c.l.b16 %v1878
        %v2046 = vunpack.c.h.b16 %v1878
        %v2047 = vunpack.c.l.b16 %v1879
        %v2048 = vunpack.c.h.b16 %v1879
        %v2049 = vunpack.c.l.b16 %v1880
        %v2050 = vunpack.c.h.b16 %v1880
        %v2051 = vunpack.c.l.b16 %v1881
        %v2052 = vunpack.c.h.b16 %v1881
        %v2053 = vunpack.c.l.b16 %v1882
        %v2054 = vunpack.c.h.b16 %v1882
        %v2055 = vunpack.c.l.b16 %v1883
        %v2056 = vunpack.c.h.b16 %v1883
        %v2057 = vunpack.c.l.b16 %v1884
        %v2058 = vunpack.c.h.b16 %v1884
        %v2059 = vunpack.c.l.b16 %v1885
        %v2060 = vunpack.c.h.b16 %v1885
        %v2061 = vunpack.c.l.b16 %v1886
        %v2062 = vunpack.c.h.b16 %v1886
        %v2063 = vunpack.c.l.b16 %v1887
        %v2064 = vunpack.c.h.b16 %v1887
        %v2065 = vunpack.c.l.b16 %v1888
        %v2066 = vunpack.c.h.b16 %v1888
        %v2067 = vunpack.c.l.b16 %v1889
        %v2068 = vunpack.c.h.b16 %v1889
        %v2069 = vunpack.c.l.b16 %v1890
        %v2070 = vunpack.c.h.b16 %v1890
        %v2071 = vunpack.c.l.b16 %v1891
        %v2072 = vunpack.c.h.b16 %v1891
        %v2073 = vunpack.c.l.b16 %v1892
        %v2074 = vunpack.c.h.b16 %v1892
        %v2075 = vunpack.c.l.b16 %v1893
        %v2076 = vunpack.c.h.b16 %v1893
        %v2077 = vunpack.c.l.b16 %v1894
        %v2078 = vunpack.c.h.b16 %v1894
        %v2079 = vunpack.c.l.b16 %v1895
        %v2080 = vunpack.c.h.b16 %v1895
        %v2081 = vunpack.c.l.b16 %v1896
        %v2082 = vunpack.c.h.b16 %v1896
        %v2083 = vunpack.c.l.b16 %v1897
        %v2084 = vunpack.c.h.b16 %v1897
        %v2085 = vunpack.c.l.b16 %v1898
        %v2086 = vunpack.c.h.b16 %v1898
        %v2087 = vunpack.c.l.b16 %v1899
        %v2088 = vunpack.c.h.b16 %v1899
        %v2089 = vunpack.c.l.b16 %v1900
        %v2090 = vunpack.c.h.b16 %v1900
        %v2091 = vunpack.c.l.b16 %v1901
        %v2092 = vunpack.c.h.b16 %v1901
        %v2093 = vunpack.c.l.b16 %v1902
        %v2094 = vunpack.c.h.b16 %v1902
        %v2095 = vpack.c.b16 %v1969, %v1967
        %v2096 = vpack.c.b16 %v1970, %v1968
        %v2097 = vpack.c.b16 %v1973, %v1971
        %v2098 = vpack.c.b16 %v1974, %v1972
        %v2099 = vpack.c.b16 %v1977, %v1975
        %v2100 = vpack.c.b16 %v1978, %v1976
        %v2101 = vpack.c.b16 %v1981, %v1979
        %v2102 = vpack.c.b16 %v1982, %v1980
        %v2103 = vpack.c.b16 %v1985, %v1983
        %v2104 = vpack.c.b16 %v1986, %v1984
        %v2105 = vpack.c.b16 %v1989, %v1987
        %v2106 = vpack.c.b16 %v1990, %v1988
        %v2107 = vpack.c.b16 %v1993, %v1991
        %v2108 = vpack.c.b16 %v1994, %v1992
        %v2109 = vpack.c.b16 %v1997, %v1995
        %v2110 = vpack.c.b16 %v1998, %v1996
        %v2111 = vpack.c.b16 %v2001, %v1999
        %v2112 = vpack.c.b16 %v2002, %v2000
        %v2113 = vpack.c.b16 %v2005, %v2003
        %v2114 = vpack.c.b16 %v2006, %v2004
        %v2115 = vpack.c.b16 %v2009, %v2007
        %v2116 = vpack.c.b16 %v2010, %v2008
        %v2117 = vpack.c.b16 %v2013, %v2011
        %v2118 = vpack.c.b16 %v2014, %v2012
        %v2119 = vpack.c.b16 %v2017, %v2015
        %v2120 = vpack.c.b16 %v2018, %v2016
        %v2121 = vpack.c.b16 %v2021, %v2019
        %v2122 = vpack.c.b16 %v2022, %v2020
        %v2123 = vpack.c.b16 %v2025, %v2023
        %v2124 = vpack.c.b16 %v2026, %v2024
        %v2125 = vpack.c.b16 %v2029, %v2027
        %v2126 = vpack.c.b16 %v2030, %v2028
        %v2127 = vpack.c.b16 %v2033, %v2031
        %v2128 = vpack.c.b16 %v2034, %v2032
        %v2129 = vpack.c.b16 %v2037, %v2035
        %v2130 = vpack.c.b16 %v2038, %v2036
        %v2131 = vpack.c.b16 %v2041, %v2039
        %v2132 = vpack.c.b16 %v2042, %v2040
        %v2133 = vpack.c.b16 %v2045, %v2043
        %v2134 = vpack.c.b16 %v2046, %v2044
        %v2135 = vpack.c.b16 %v2049, %v2047
        %v2136 = vpack.c.b16 %v2050, %v2048
        %v2137 = vpack.c.b16 %v2053, %v2051
        %v2138 = vpack.c.b16 %v2054, %v2052
        %v2139 = vpack.c.b16 %v2057, %v2055
        %v2140 = vpack.c.b16 %v2058, %v2056
        %v2141 = vpack.c.b16 %v2061, %v2059
        %v2142 = vpack.c.b16 %v2062, %v2060
        %v2143 = vpack.c.b16 %v2065, %v2063
        %v2144 = vpack.c.b16 %v2066, %v2064
        %v2145 = vpack.c.b16 %v2069, %v2067
        %v2146 = vpack.c.b16 %v2070, %v2068
        %v2147 = vpack.c.b16 %v2073, %v2071
        %v2148 = vpack.c.b16 %v2074, %v2072
        %v2149 = vpack.c.b16 %v2077, %v2075
        %v2150 = vpack.c.b16 %v2078, %v2076
        %v2151 = vpack.c.b16 %v2081, %v2079
        %v2152 = vpack.c.b16 %v2082, %v2080
        %v2153 = vpack.c.b16 %v2085, %v2083
        %v2154 = vpack.c.b16 %v2086, %v2084
        %v2155 = vpack.c.b16 %v2089, %v2087
        %v2156 = vpack.c.b16 %v2090, %v2088
        %v2157 = vpack.c.b16 %v2093, %v2091
        %v2158 = vpack.c.b16 %v2094, %v2092
        %2223 = vmatpush.bf16.msra.mxu0 %v2109
        %2224 = vmatpush.bf16.msra.mxu0 %v2107
        %2225 = vmatpush.bf16.msra.mxu0 %v2105
        %2226 = vmatpush.bf16.msra.mxu0 %v2103
        %2227 = vmatpush.bf16.msra.mxu0 %v2101
        %2228 = vmatpush.bf16.msra.mxu0 %v2099
        %2229 = vmatpush.bf16.msra.mxu0 %v2097
        %2230 = vmatpush.bf16.msra.mxu0 %v2095
        %2231 = vmatmul.bf16.gmra.mxu0 %v1775
        %v2232 = vpop.f32.mrf.mxu0
        %v2233 = vadd.f32 0.0, %v2232
        %v2234 = vpop.f32.mrf.mxu0
        %v2235 = vadd.f32 0.0, %v2234
        %2236 = vmatmul.bf16.gmra.mxu0 %v1779
        %v2237 = vpop.f32.mrf.mxu0
        %v2238 = vadd.f32 0.0, %v2237
        %v2239 = vpop.f32.mrf.mxu0
        %v2240 = vadd.f32 0.0, %v2239
        %2241 = vmatmul.bf16.gmra.mxu0 %v1783
        %v2242 = vpop.f32.mrf.mxu0
        %v2243 = vadd.f32 0.0, %v2242
        %v2244 = vpop.f32.mrf.mxu0
        %v2245 = vadd.f32 0.0, %v2244
        %2246 = vmatmul.bf16.gmra.mxu0 %v1787
        %v2247 = vpop.f32.mrf.mxu0
        %v2248 = vadd.f32 0.0, %v2247
        %v2249 = vpop.f32.mrf.mxu0
        %v2250 = vadd.f32 0.0, %v2249
        %2251 = vmatmul.bf16.gmra.mxu0 %v1791
        %v2252 = vpop.f32.mrf.mxu0
        %v2253 = vadd.f32 0.0, %v2252
        %v2254 = vpop.f32.mrf.mxu0
        %v2255 = vadd.f32 0.0, %v2254
        %2256 = vmatmul.bf16.gmra.mxu0 %v1795
        %v2257 = vpop.f32.mrf.mxu0
        %v2258 = vadd.f32 0.0, %v2257
        %v2259 = vpop.f32.mrf.mxu0
        %v2260 = vadd.f32 0.0, %v2259
        %2261 = vmatmul.bf16.gmra.mxu0 %v1799
        %v2262 = vpop.f32.mrf.mxu0
        %v2263 = vadd.f32 0.0, %v2262
        %v2264 = vpop.f32.mrf.mxu0
        %v2265 = vadd.f32 0.0, %v2264
        %2266 = vmatmul.bf16.gmra.mxu0 %v1803
        %v2267 = vpop.f32.mrf.mxu0
        %v2268 = vadd.f32 0.0, %v2267
        %v2269 = vpop.f32.mrf.mxu0
        %v2270 = vadd.f32 0.0, %v2269
        %2271 = vmatmul.bf16.gmra.mxu0 %v1807
        %v2272 = vpop.f32.mrf.mxu0
        %v2273 = vadd.f32 0.0, %v2272
        %v2274 = vpop.f32.mrf.mxu0
        %v2275 = vadd.f32 0.0, %v2274
        %2276 = vmatmul.bf16.gmra.mxu0 %v1811
        %v2277 = vpop.f32.mrf.mxu0
        %v2278 = vadd.f32 0.0, %v2277
        %v2279 = vpop.f32.mrf.mxu0
        %v2280 = vadd.f32 0.0, %v2279
        %2281 = vmatmul.bf16.gmra.mxu0 %v1815
        %v2282 = vpop.f32.mrf.mxu0
        %v2283 = vadd.f32 0.0, %v2282
        %v2284 = vpop.f32.mrf.mxu0
        %v2285 = vadd.f32 0.0, %v2284
        %2286 = vmatmul.bf16.gmra.mxu0 %v1819
        %v2287 = vpop.f32.mrf.mxu0
        %v2288 = vadd.f32 0.0, %v2287
        %v2289 = vpop.f32.mrf.mxu0
        %v2290 = vadd.f32 0.0, %v2289
        %2291 = vmatmul.bf16.gmra.mxu0 %v1823
        %v2292 = vpop.f32.mrf.mxu0
        %v2293 = vadd.f32 0.0, %v2292
        %v2294 = vpop.f32.mrf.mxu0
        %v2295 = vadd.f32 0.0, %v2294
        %2296 = vmatmul.bf16.gmra.mxu0 %v1827
        %v2297 = vpop.f32.mrf.mxu0
        %v2298 = vadd.f32 0.0, %v2297
        %v2299 = vpop.f32.mrf.mxu0
        %v2300 = vadd.f32 0.0, %v2299
        %2301 = vmatmul.bf16.gmra.mxu0 %v1831
        %v2302 = vpop.f32.mrf.mxu0
        %v2303 = vadd.f32 0.0, %v2302
        %v2304 = vpop.f32.mrf.mxu0
        %v2305 = vadd.f32 0.0, %v2304
        %2306 = vmatmul.bf16.gmra.mxu0 %v1835
        %v2307 = vpop.f32.mrf.mxu0
        %v2308 = vadd.f32 0.0, %v2307
        %v2309 = vpop.f32.mrf.mxu0
        %v2310 = vadd.f32 0.0, %v2309
        %2311 = vdwg.mxu0
        %2312 = vmatpush.bf16.msra.mxu0 %v2125
        %2313 = vmatpush.bf16.msra.mxu0 %v2123
        %2314 = vmatpush.bf16.msra.mxu0 %v2121
        %2315 = vmatpush.bf16.msra.mxu0 %v2119
        %2316 = vmatpush.bf16.msra.mxu0 %v2117
        %2317 = vmatpush.bf16.msra.mxu0 %v2115
        %2318 = vmatpush.bf16.msra.mxu0 %v2113
        %2319 = vmatpush.bf16.msra.mxu0 %v2111
        %2320 = vmatmul.bf16.gmra.mxu0 %v1776
        %v2321 = vpop.f32.mrf.mxu0
        %v2322 = vadd.f32 %v2233, %v2321
        %v2323 = vpop.f32.mrf.mxu0
        %v2324 = vadd.f32 %v2235, %v2323
        %2325 = vmatmul.bf16.gmra.mxu0 %v1780
        %v2326 = vpop.f32.mrf.mxu0
        %v2327 = vadd.f32 %v2238, %v2326
        %v2328 = vpop.f32.mrf.mxu0
        %v2329 = vadd.f32 %v2240, %v2328
        %2330 = vmatmul.bf16.gmra.mxu0 %v1784
        %v2331 = vpop.f32.mrf.mxu0
        %v2332 = vadd.f32 %v2243, %v2331
        %v2333 = vpop.f32.mrf.mxu0
        %v2334 = vadd.f32 %v2245, %v2333
        %2335 = vmatmul.bf16.gmra.mxu0 %v1788
        %v2336 = vpop.f32.mrf.mxu0
        %v2337 = vadd.f32 %v2248, %v2336
        %v2338 = vpop.f32.mrf.mxu0
        %v2339 = vadd.f32 %v2250, %v2338
        %2340 = vmatmul.bf16.gmra.mxu0 %v1792
        %v2341 = vpop.f32.mrf.mxu0
        %v2342 = vadd.f32 %v2253, %v2341
        %v2343 = vpop.f32.mrf.mxu0
        %v2344 = vadd.f32 %v2255, %v2343
        %2345 = vmatmul.bf16.gmra.mxu0 %v1796
        %v2346 = vpop.f32.mrf.mxu0
        %v2347 = vadd.f32 %v2258, %v2346
        %v2348 = vpop.f32.mrf.mxu0
        %v2349 = vadd.f32 %v2260, %v2348
        %2350 = vmatmul.bf16.gmra.mxu0 %v1800
        %v2351 = vpop.f32.mrf.mxu0
        %v2352 = vadd.f32 %v2263, %v2351
        %v2353 = vpop.f32.mrf.mxu0
        %v2354 = vadd.f32 %v2265, %v2353
        %2355 = vmatmul.bf16.gmra.mxu0 %v1804
        %v2356 = vpop.f32.mrf.mxu0
        %v2357 = vadd.f32 %v2268, %v2356
        %v2358 = vpop.f32.mrf.mxu0
        %v2359 = vadd.f32 %v2270, %v2358
        %2360 = vmatmul.bf16.gmra.mxu0 %v1808
        %v2361 = vpop.f32.mrf.mxu0
        %v2362 = vadd.f32 %v2273, %v2361
        %v2363 = vpop.f32.mrf.mxu0
        %v2364 = vadd.f32 %v2275, %v2363
        %2365 = vmatmul.bf16.gmra.mxu0 %v1812
        %v2366 = vpop.f32.mrf.mxu0
        %v2367 = vadd.f32 %v2278, %v2366
        %v2368 = vpop.f32.mrf.mxu0
        %v2369 = vadd.f32 %v2280, %v2368
        %2370 = vmatmul.bf16.gmra.mxu0 %v1816
        %v2371 = vpop.f32.mrf.mxu0
        %v2372 = vadd.f32 %v2283, %v2371
        %v2373 = vpop.f32.mrf.mxu0
        %v2374 = vadd.f32 %v2285, %v2373
        %2375 = vmatmul.bf16.gmra.mxu0 %v1820
        %v2376 = vpop.f32.mrf.mxu0
        %v2377 = vadd.f32 %v2288, %v2376
        %v2378 = vpop.f32.mrf.mxu0
        %v2379 = vadd.f32 %v2290, %v2378
        %2380 = vmatmul.bf16.gmra.mxu0 %v1824
        %v2381 = vpop.f32.mrf.mxu0
        %v2382 = vadd.f32 %v2293, %v2381
        %v2383 = vpop.f32.mrf.mxu0
        %v2384 = vadd.f32 %v2295, %v2383
        %2385 = vmatmul.bf16.gmra.mxu0 %v1828
        %v2386 = vpop.f32.mrf.mxu0
        %v2387 = vadd.f32 %v2298, %v2386
        %v2388 = vpop.f32.mrf.mxu0
        %v2389 = vadd.f32 %v2300, %v2388
        %2390 = vmatmul.bf16.gmra.mxu0 %v1832
        %v2391 = vpop.f32.mrf.mxu0
        %v2392 = vadd.f32 %v2303, %v2391
        %v2393 = vpop.f32.mrf.mxu0
        %v2394 = vadd.f32 %v2305, %v2393
        %2395 = vmatmul.bf16.gmra.mxu0 %v1836
        %v2396 = vpop.f32.mrf.mxu0
        %v2397 = vadd.f32 %v2308, %v2396
        %v2398 = vpop.f32.mrf.mxu0
        %v2399 = vadd.f32 %v2310, %v2398
        %2400 = vdwg.mxu0
        %2401 = vmatpush.bf16.msra.mxu0 %v2141
        %2402 = vmatpush.bf16.msra.mxu0 %v2139
        %2403 = vmatpush.bf16.msra.mxu0 %v2137
        %2404 = vmatpush.bf16.msra.mxu0 %v2135
        %2405 = vmatpush.bf16.msra.mxu0 %v2133
        %2406 = vmatpush.bf16.msra.mxu0 %v2131
        %2407 = vmatpush.bf16.msra.mxu0 %v2129
        %2408 = vmatpush.bf16.msra.mxu0 %v2127
        %2409 = vmatmul.bf16.gmra.mxu0 %v1777
        %v2410 = vpop.f32.mrf.mxu0
        %v2411 = vadd.f32 %v2322, %v2410
        %v2412 = vpop.f32.mrf.mxu0
        %v2413 = vadd.f32 %v2324, %v2412
        %2414 = vmatmul.bf16.gmra.mxu0 %v1781
        %v2415 = vpop.f32.mrf.mxu0
        %v2416 = vadd.f32 %v2327, %v2415
        %v2417 = vpop.f32.mrf.mxu0
        %v2418 = vadd.f32 %v2329, %v2417
        %2419 = vmatmul.bf16.gmra.mxu0 %v1785
        %v2420 = vpop.f32.mrf.mxu0
        %v2421 = vadd.f32 %v2332, %v2420
        %v2422 = vpop.f32.mrf.mxu0
        %v2423 = vadd.f32 %v2334, %v2422
        %2424 = vmatmul.bf16.gmra.mxu0 %v1789
        %v2425 = vpop.f32.mrf.mxu0
        %v2426 = vadd.f32 %v2337, %v2425
        %v2427 = vpop.f32.mrf.mxu0
        %v2428 = vadd.f32 %v2339, %v2427
        %2429 = vmatmul.bf16.gmra.mxu0 %v1793
        %v2430 = vpop.f32.mrf.mxu0
        %v2431 = vadd.f32 %v2342, %v2430
        %v2432 = vpop.f32.mrf.mxu0
        %v2433 = vadd.f32 %v2344, %v2432
        %2434 = vmatmul.bf16.gmra.mxu0 %v1797
        %v2435 = vpop.f32.mrf.mxu0
        %v2436 = vadd.f32 %v2347, %v2435
        %v2437 = vpop.f32.mrf.mxu0
        %v2438 = vadd.f32 %v2349, %v2437
        %2439 = vmatmul.bf16.gmra.mxu0 %v1801
        %v2440 = vpop.f32.mrf.mxu0
        %v2441 = vadd.f32 %v2352, %v2440
        %v2442 = vpop.f32.mrf.mxu0
        %v2443 = vadd.f32 %v2354, %v2442
        %2444 = vmatmul.bf16.gmra.mxu0 %v1805
        %v2445 = vpop.f32.mrf.mxu0
        %v2446 = vadd.f32 %v2357, %v2445
        %v2447 = vpop.f32.mrf.mxu0
        %v2448 = vadd.f32 %v2359, %v2447
        %2449 = vmatmul.bf16.gmra.mxu0 %v1809
        %v2450 = vpop.f32.mrf.mxu0
        %v2451 = vadd.f32 %v2362, %v2450
        %v2452 = vpop.f32.mrf.mxu0
        %v2453 = vadd.f32 %v2364, %v2452
        %2454 = vmatmul.bf16.gmra.mxu0 %v1813
        %v2455 = vpop.f32.mrf.mxu0
        %v2456 = vadd.f32 %v2367, %v2455
        %v2457 = vpop.f32.mrf.mxu0
        %v2458 = vadd.f32 %v2369, %v2457
        %2459 = vmatmul.bf16.gmra.mxu0 %v1817
        %v2460 = vpop.f32.mrf.mxu0
        %v2461 = vadd.f32 %v2372, %v2460
        %v2462 = vpop.f32.mrf.mxu0
        %v2463 = vadd.f32 %v2374, %v2462
        %2464 = vmatmul.bf16.gmra.mxu0 %v1821
        %v2465 = vpop.f32.mrf.mxu0
        %v2466 = vadd.f32 %v2377, %v2465
        %v2467 = vpop.f32.mrf.mxu0
        %v2468 = vadd.f32 %v2379, %v2467
        %2469 = vmatmul.bf16.gmra.mxu0 %v1825
        %v2470 = vpop.f32.mrf.mxu0
        %v2471 = vadd.f32 %v2382, %v2470
        %v2472 = vpop.f32.mrf.mxu0
        %v2473 = vadd.f32 %v2384, %v2472
        %2474 = vmatmul.bf16.gmra.mxu0 %v1829
        %v2475 = vpop.f32.mrf.mxu0
        %v2476 = vadd.f32 %v2387, %v2475
        %v2477 = vpop.f32.mrf.mxu0
        %v2478 = vadd.f32 %v2389, %v2477
        %2479 = vmatmul.bf16.gmra.mxu0 %v1833
        %v2480 = vpop.f32.mrf.mxu0
        %v2481 = vadd.f32 %v2392, %v2480
        %v2482 = vpop.f32.mrf.mxu0
        %v2483 = vadd.f32 %v2394, %v2482
        %2484 = vmatmul.bf16.gmra.mxu0 %v1837
        %v2485 = vpop.f32.mrf.mxu0
        %v2486 = vadd.f32 %v2397, %v2485
        %v2487 = vpop.f32.mrf.mxu0
        %v2488 = vadd.f32 %v2399, %v2487
        %2489 = vdwg.mxu0
        %2490 = vmatpush.bf16.msra.mxu0 %v2157
        %2491 = vmatpush.bf16.msra.mxu0 %v2155
        %2492 = vmatpush.bf16.msra.mxu0 %v2153
        %2493 = vmatpush.bf16.msra.mxu0 %v2151
        %2494 = vmatpush.bf16.msra.mxu0 %v2149
        %2495 = vmatpush.bf16.msra.mxu0 %v2147
        %2496 = vmatpush.bf16.msra.mxu0 %v2145
        %2497 = vmatpush.bf16.msra.mxu0 %v2143
        %2498 = vmatmul.bf16.gmra.mxu0 %v1778
        %v2499 = vpop.f32.mrf.mxu0
        %v2500 = vadd.f32 %v2411, %v2499
        %v2501 = vpop.f32.mrf.mxu0
        %v2502 = vadd.f32 %v2413, %v2501
        %2503 = vmatmul.bf16.gmra.mxu0 %v1782
        %v2504 = vpop.f32.mrf.mxu0
        %v2505 = vadd.f32 %v2416, %v2504
        %v2506 = vpop.f32.mrf.mxu0
        %v2507 = vadd.f32 %v2418, %v2506
        %2508 = vmatmul.bf16.gmra.mxu0 %v1786
        %v2509 = vpop.f32.mrf.mxu0
        %v2510 = vadd.f32 %v2421, %v2509
        %v2511 = vpop.f32.mrf.mxu0
        %v2512 = vadd.f32 %v2423, %v2511
        %2513 = vmatmul.bf16.gmra.mxu0 %v1790
        %v2514 = vpop.f32.mrf.mxu0
        %v2515 = vadd.f32 %v2426, %v2514
        %v2516 = vpop.f32.mrf.mxu0
        %v2517 = vadd.f32 %v2428, %v2516
        %2518 = vmatmul.bf16.gmra.mxu0 %v1794
        %v2519 = vpop.f32.mrf.mxu0
        %v2520 = vadd.f32 %v2431, %v2519
        %v2521 = vpop.f32.mrf.mxu0
        %v2522 = vadd.f32 %v2433, %v2521
        %2523 = vmatmul.bf16.gmra.mxu0 %v1798
        %v2524 = vpop.f32.mrf.mxu0
        %v2525 = vadd.f32 %v2436, %v2524
        %v2526 = vpop.f32.mrf.mxu0
        %v2527 = vadd.f32 %v2438, %v2526
        %2528 = vmatmul.bf16.gmra.mxu0 %v1802
        %v2529 = vpop.f32.mrf.mxu0
        %v2530 = vadd.f32 %v2441, %v2529
        %v2531 = vpop.f32.mrf.mxu0
        %v2532 = vadd.f32 %v2443, %v2531
        %2533 = vmatmul.bf16.gmra.mxu0 %v1806
        %v2534 = vpop.f32.mrf.mxu0
        %v2535 = vadd.f32 %v2446, %v2534
        %v2536 = vpop.f32.mrf.mxu0
        %v2537 = vadd.f32 %v2448, %v2536
        %2538 = vmatmul.bf16.gmra.mxu0 %v1810
        %v2539 = vpop.f32.mrf.mxu0
        %v2540 = vadd.f32 %v2451, %v2539
        %v2541 = vpop.f32.mrf.mxu0
        %v2542 = vadd.f32 %v2453, %v2541
        %2543 = vmatmul.bf16.gmra.mxu0 %v1814
        %v2544 = vpop.f32.mrf.mxu0
        %v2545 = vadd.f32 %v2456, %v2544
        %v2546 = vpop.f32.mrf.mxu0
        %v2547 = vadd.f32 %v2458, %v2546
        %2548 = vmatmul.bf16.gmra.mxu0 %v1818
        %v2549 = vpop.f32.mrf.mxu0
        %v2550 = vadd.f32 %v2461, %v2549
        %v2551 = vpop.f32.mrf.mxu0
        %v2552 = vadd.f32 %v2463, %v2551
        %2553 = vmatmul.bf16.gmra.mxu0 %v1822
        %v2554 = vpop.f32.mrf.mxu0
        %v2555 = vadd.f32 %v2466, %v2554
        %v2556 = vpop.f32.mrf.mxu0
        %v2557 = vadd.f32 %v2468, %v2556
        %2558 = vmatmul.bf16.gmra.mxu0 %v1826
        %v2559 = vpop.f32.mrf.mxu0
        %v2560 = vadd.f32 %v2471, %v2559
        %v2561 = vpop.f32.mrf.mxu0
        %v2562 = vadd.f32 %v2473, %v2561
        %2563 = vmatmul.bf16.gmra.mxu0 %v1830
        %v2564 = vpop.f32.mrf.mxu0
        %v2565 = vadd.f32 %v2476, %v2564
        %v2566 = vpop.f32.mrf.mxu0
        %v2567 = vadd.f32 %v2478, %v2566
        %2568 = vmatmul.bf16.gmra.mxu0 %v1834
        %v2569 = vpop.f32.mrf.mxu0
        %v2570 = vadd.f32 %v2481, %v2569
        %v2571 = vpop.f32.mrf.mxu0
        %v2572 = vadd.f32 %v2483, %v2571
        %2573 = vmatmul.bf16.gmra.mxu0 %v1838
        %v2574 = vpop.f32.mrf.mxu0
        %v2575 = vadd.f32 %v2486, %v2574
        %v2576 = vpop.f32.mrf.mxu0
        %v2577 = vadd.f32 %v2488, %v2576
        %2578 = vdwg.mxu0
        %2579 = vmatpush.bf16.msra.mxu0 %v2110
        %2580 = vmatpush.bf16.msra.mxu0 %v2108
        %2581 = vmatpush.bf16.msra.mxu0 %v2106
        %2582 = vmatpush.bf16.msra.mxu0 %v2104
        %2583 = vmatpush.bf16.msra.mxu0 %v2102
        %2584 = vmatpush.bf16.msra.mxu0 %v2100
        %2585 = vmatpush.bf16.msra.mxu0 %v2098
        %2586 = vmatpush.bf16.msra.mxu0 %v2096
        %2587 = vmatmul.bf16.gmra.mxu0 %v1775
        %v2588 = vpop.f32.mrf.mxu0
        %v2589 = vadd.f32 0.0, %v2588
        %v2590 = vpop.f32.mrf.mxu0
        %v2591 = vadd.f32 0.0, %v2590
        %2592 = vmatmul.bf16.gmra.mxu0 %v1779
        %v2593 = vpop.f32.mrf.mxu0
        %v2594 = vadd.f32 0.0, %v2593
        %v2595 = vpop.f32.mrf.mxu0
        %v2596 = vadd.f32 0.0, %v2595
        %2597 = vmatmul.bf16.gmra.mxu0 %v1783
        %v2598 = vpop.f32.mrf.mxu0
        %v2599 = vadd.f32 0.0, %v2598
        %v2600 = vpop.f32.mrf.mxu0
        %v2601 = vadd.f32 0.0, %v2600
        %2602 = vmatmul.bf16.gmra.mxu0 %v1787
        %v2603 = vpop.f32.mrf.mxu0
        %v2604 = vadd.f32 0.0, %v2603
        %v2605 = vpop.f32.mrf.mxu0
        %v2606 = vadd.f32 0.0, %v2605
        %2607 = vmatmul.bf16.gmra.mxu0 %v1791
        %v2608 = vpop.f32.mrf.mxu0
        %v2609 = vadd.f32 0.0, %v2608
        %v2610 = vpop.f32.mrf.mxu0
        %v2611 = vadd.f32 0.0, %v2610
        %2612 = vmatmul.bf16.gmra.mxu0 %v1795
        %v2613 = vpop.f32.mrf.mxu0
        %v2614 = vadd.f32 0.0, %v2613
        %v2615 = vpop.f32.mrf.mxu0
        %v2616 = vadd.f32 0.0, %v2615
        %2617 = vmatmul.bf16.gmra.mxu0 %v1799
        %v2618 = vpop.f32.mrf.mxu0
        %v2619 = vadd.f32 0.0, %v2618
        %v2620 = vpop.f32.mrf.mxu0
        %v2621 = vadd.f32 0.0, %v2620
        %2622 = vmatmul.bf16.gmra.mxu0 %v1803
        %v2623 = vpop.f32.mrf.mxu0
        %v2624 = vadd.f32 0.0, %v2623
        %v2625 = vpop.f32.mrf.mxu0
        %v2626 = vadd.f32 0.0, %v2625
        %2627 = vmatmul.bf16.gmra.mxu0 %v1807
        %v2628 = vpop.f32.mrf.mxu0
        %v2629 = vadd.f32 0.0, %v2628
        %v2630 = vpop.f32.mrf.mxu0
        %v2631 = vadd.f32 0.0, %v2630
        %2632 = vmatmul.bf16.gmra.mxu0 %v1811
        %v2633 = vpop.f32.mrf.mxu0
        %v2634 = vadd.f32 0.0, %v2633
        %v2635 = vpop.f32.mrf.mxu0
        %v2636 = vadd.f32 0.0, %v2635
        %2637 = vmatmul.bf16.gmra.mxu0 %v1815
        %v2638 = vpop.f32.mrf.mxu0
        %v2639 = vadd.f32 0.0, %v2638
        %v2640 = vpop.f32.mrf.mxu0
        %v2641 = vadd.f32 0.0, %v2640
        %2642 = vmatmul.bf16.gmra.mxu0 %v1819
        %v2643 = vpop.f32.mrf.mxu0
        %v2644 = vadd.f32 0.0, %v2643
        %v2645 = vpop.f32.mrf.mxu0
        %v2646 = vadd.f32 0.0, %v2645
        %2647 = vmatmul.bf16.gmra.mxu0 %v1823
        %v2648 = vpop.f32.mrf.mxu0
        %v2649 = vadd.f32 0.0, %v2648
        %v2650 = vpop.f32.mrf.mxu0
        %v2651 = vadd.f32 0.0, %v2650
        %2652 = vmatmul.bf16.gmra.mxu0 %v1827
        %v2653 = vpop.f32.mrf.mxu0
        %v2654 = vadd.f32 0.0, %v2653
        %v2655 = vpop.f32.mrf.mxu0
        %v2656 = vadd.f32 0.0, %v2655
        %2657 = vmatmul.bf16.gmra.mxu0 %v1831
        %v2658 = vpop.f32.mrf.mxu0
        %v2659 = vadd.f32 0.0, %v2658
        %v2660 = vpop.f32.mrf.mxu0
        %v2661 = vadd.f32 0.0, %v2660
        %2662 = vmatmul.bf16.gmra.mxu0 %v1835
        %v2663 = vpop.f32.mrf.mxu0
        %v2664 = vadd.f32 0.0, %v2663
        %v2665 = vpop.f32.mrf.mxu0
        %v2666 = vadd.f32 0.0, %v2665
        %2667 = vdwg.mxu0
        %2668 = vmatpush.bf16.msra.mxu0 %v2126
        %2669 = vmatpush.bf16.msra.mxu0 %v2124
        %2670 = vmatpush.bf16.msra.mxu0 %v2122
        %2671 = vmatpush.bf16.msra.mxu0 %v2120
        %2672 = vmatpush.bf16.msra.mxu0 %v2118
        %2673 = vmatpush.bf16.msra.mxu0 %v2116
        %2674 = vmatpush.bf16.msra.mxu0 %v2114
        %2675 = vmatpush.bf16.msra.mxu0 %v2112
        %2676 = vmatmul.bf16.gmra.mxu0 %v1776
        %v2677 = vpop.f32.mrf.mxu0
        %v2678 = vadd.f32 %v2589, %v2677
        %v2679 = vpop.f32.mrf.mxu0
        %v2680 = vadd.f32 %v2591, %v2679
        %2681 = vmatmul.bf16.gmra.mxu0 %v1780
        %v2682 = vpop.f32.mrf.mxu0
        %v2683 = vadd.f32 %v2594, %v2682
        %v2684 = vpop.f32.mrf.mxu0
        %v2685 = vadd.f32 %v2596, %v2684
        %2686 = vmatmul.bf16.gmra.mxu0 %v1784
        %v2687 = vpop.f32.mrf.mxu0
        %v2688 = vadd.f32 %v2599, %v2687
        %v2689 = vpop.f32.mrf.mxu0
        %v2690 = vadd.f32 %v2601, %v2689
        %2691 = vmatmul.bf16.gmra.mxu0 %v1788
        %v2692 = vpop.f32.mrf.mxu0
        %v2693 = vadd.f32 %v2604, %v2692
        %v2694 = vpop.f32.mrf.mxu0
        %v2695 = vadd.f32 %v2606, %v2694
        %2696 = vmatmul.bf16.gmra.mxu0 %v1792
        %v2697 = vpop.f32.mrf.mxu0
        %v2698 = vadd.f32 %v2609, %v2697
        %v2699 = vpop.f32.mrf.mxu0
        %v2700 = vadd.f32 %v2611, %v2699
        %2701 = vmatmul.bf16.gmra.mxu0 %v1796
        %v2702 = vpop.f32.mrf.mxu0
        %v2703 = vadd.f32 %v2614, %v2702
        %v2704 = vpop.f32.mrf.mxu0
        %v2705 = vadd.f32 %v2616, %v2704
        %2706 = vmatmul.bf16.gmra.mxu0 %v1800
        %v2707 = vpop.f32.mrf.mxu0
        %v2708 = vadd.f32 %v2619, %v2707
        %v2709 = vpop.f32.mrf.mxu0
        %v2710 = vadd.f32 %v2621, %v2709
        %2711 = vmatmul.bf16.gmra.mxu0 %v1804
        %v2712 = vpop.f32.mrf.mxu0
        %v2713 = vadd.f32 %v2624, %v2712
        %v2714 = vpop.f32.mrf.mxu0
        %v2715 = vadd.f32 %v2626, %v2714
        %2716 = vmatmul.bf16.gmra.mxu0 %v1808
        %v2717 = vpop.f32.mrf.mxu0
        %v2718 = vadd.f32 %v2629, %v2717
        %v2719 = vpop.f32.mrf.mxu0
        %v2720 = vadd.f32 %v2631, %v2719
        %2721 = vmatmul.bf16.gmra.mxu0 %v1812
        %v2722 = vpop.f32.mrf.mxu0
        %v2723 = vadd.f32 %v2634, %v2722
        %v2724 = vpop.f32.mrf.mxu0
        %v2725 = vadd.f32 %v2636, %v2724
        %2726 = vmatmul.bf16.gmra.mxu0 %v1816
        %v2727 = vpop.f32.mrf.mxu0
        %v2728 = vadd.f32 %v2639, %v2727
        %v2729 = vpop.f32.mrf.mxu0
        %v2730 = vadd.f32 %v2641, %v2729
        %2731 = vmatmul.bf16.gmra.mxu0 %v1820
        %v2732 = vpop.f32.mrf.mxu0
        %v2733 = vadd.f32 %v2644, %v2732
        %v2734 = vpop.f32.mrf.mxu0
        %v2735 = vadd.f32 %v2646, %v2734
        %2736 = vmatmul.bf16.gmra.mxu0 %v1824
        %v2737 = vpop.f32.mrf.mxu0
        %v2738 = vadd.f32 %v2649, %v2737
        %v2739 = vpop.f32.mrf.mxu0
        %v2740 = vadd.f32 %v2651, %v2739
        %2741 = vmatmul.bf16.gmra.mxu0 %v1828
        %v2742 = vpop.f32.mrf.mxu0
        %v2743 = vadd.f32 %v2654, %v2742
        %v2744 = vpop.f32.mrf.mxu0
        %v2745 = vadd.f32 %v2656, %v2744
        %2746 = vmatmul.bf16.gmra.mxu0 %v1832
        %v2747 = vpop.f32.mrf.mxu0
        %v2748 = vadd.f32 %v2659, %v2747
        %v2749 = vpop.f32.mrf.mxu0
        %v2750 = vadd.f32 %v2661, %v2749
        %2751 = vmatmul.bf16.gmra.mxu0 %v1836
        %v2752 = vpop.f32.mrf.mxu0
        %v2753 = vadd.f32 %v2664, %v2752
        %v2754 = vpop.f32.mrf.mxu0
        %v2755 = vadd.f32 %v2666, %v2754
        %2756 = vdwg.mxu0
        %2757 = vmatpush.bf16.msra.mxu0 %v2142
        %2758 = vmatpush.bf16.msra.mxu0 %v2140
        %2759 = vmatpush.bf16.msra.mxu0 %v2138
        %2760 = vmatpush.bf16.msra.mxu0 %v2136
        %2761 = vmatpush.bf16.msra.mxu0 %v2134
        %2762 = vmatpush.bf16.msra.mxu0 %v2132
        %2763 = vmatpush.bf16.msra.mxu0 %v2130
        %2764 = vmatpush.bf16.msra.mxu0 %v2128
        %2765 = vmatmul.bf16.gmra.mxu0 %v1777
        %v2766 = vpop.f32.mrf.mxu0
        %v2767 = vadd.f32 %v2678, %v2766
        %v2768 = vpop.f32.mrf.mxu0
        %v2769 = vadd.f32 %v2680, %v2768
        %2770 = vmatmul.bf16.gmra.mxu0 %v1781
        %v2771 = vpop.f32.mrf.mxu0
        %v2772 = vadd.f32 %v2683, %v2771
        %v2773 = vpop.f32.mrf.mxu0
        %v2774 = vadd.f32 %v2685, %v2773
        %2775 = vmatmul.bf16.gmra.mxu0 %v1785
        %v2776 = vpop.f32.mrf.mxu0
        %v2777 = vadd.f32 %v2688, %v2776
        %v2778 = vpop.f32.mrf.mxu0
        %v2779 = vadd.f32 %v2690, %v2778
        %2780 = vmatmul.bf16.gmra.mxu0 %v1789
        %v2781 = vpop.f32.mrf.mxu0
        %v2782 = vadd.f32 %v2693, %v2781
        %v2783 = vpop.f32.mrf.mxu0
        %v2784 = vadd.f32 %v2695, %v2783
        %2785 = vmatmul.bf16.gmra.mxu0 %v1793
        %v2786 = vpop.f32.mrf.mxu0
        %v2787 = vadd.f32 %v2698, %v2786
        %v2788 = vpop.f32.mrf.mxu0
        %v2789 = vadd.f32 %v2700, %v2788
        %2790 = vmatmul.bf16.gmra.mxu0 %v1797
        %v2791 = vpop.f32.mrf.mxu0
        %v2792 = vadd.f32 %v2703, %v2791
        %v2793 = vpop.f32.mrf.mxu0
        %v2794 = vadd.f32 %v2705, %v2793
        %2795 = vmatmul.bf16.gmra.mxu0 %v1801
        %v2796 = vpop.f32.mrf.mxu0
        %v2797 = vadd.f32 %v2708, %v2796
        %v2798 = vpop.f32.mrf.mxu0
        %v2799 = vadd.f32 %v2710, %v2798
        %2800 = vmatmul.bf16.gmra.mxu0 %v1805
        %v2801 = vpop.f32.mrf.mxu0
        %v2802 = vadd.f32 %v2713, %v2801
        %v2803 = vpop.f32.mrf.mxu0
        %v2804 = vadd.f32 %v2715, %v2803
        %2805 = vmatmul.bf16.gmra.mxu0 %v1809
        %v2806 = vpop.f32.mrf.mxu0
        %v2807 = vadd.f32 %v2718, %v2806
        %v2808 = vpop.f32.mrf.mxu0
        %v2809 = vadd.f32 %v2720, %v2808
        %2810 = vmatmul.bf16.gmra.mxu0 %v1813
        %v2811 = vpop.f32.mrf.mxu0
        %v2812 = vadd.f32 %v2723, %v2811
        %v2813 = vpop.f32.mrf.mxu0
        %v2814 = vadd.f32 %v2725, %v2813
        %2815 = vmatmul.bf16.gmra.mxu0 %v1817
        %v2816 = vpop.f32.mrf.mxu0
        %v2817 = vadd.f32 %v2728, %v2816
        %v2818 = vpop.f32.mrf.mxu0
        %v2819 = vadd.f32 %v2730, %v2818
        %2820 = vmatmul.bf16.gmra.mxu0 %v1821
        %v2821 = vpop.f32.mrf.mxu0
        %v2822 = vadd.f32 %v2733, %v2821
        %v2823 = vpop.f32.mrf.mxu0
        %v2824 = vadd.f32 %v2735, %v2823
        %2825 = vmatmul.bf16.gmra.mxu0 %v1825
        %v2826 = vpop.f32.mrf.mxu0
        %v2827 = vadd.f32 %v2738, %v2826
        %v2828 = vpop.f32.mrf.mxu0
        %v2829 = vadd.f32 %v2740, %v2828
        %2830 = vmatmul.bf16.gmra.mxu0 %v1829
        %v2831 = vpop.f32.mrf.mxu0
        %v2832 = vadd.f32 %v2743, %v2831
        %v2833 = vpop.f32.mrf.mxu0
        %v2834 = vadd.f32 %v2745, %v2833
        %2835 = vmatmul.bf16.gmra.mxu0 %v1833
        %v2836 = vpop.f32.mrf.mxu0
        %v2837 = vadd.f32 %v2748, %v2836
        %v2838 = vpop.f32.mrf.mxu0
        %v2839 = vadd.f32 %v2750, %v2838
        %2840 = vmatmul.bf16.gmra.mxu0 %v1837
        %v2841 = vpop.f32.mrf.mxu0
        %v2842 = vadd.f32 %v2753, %v2841
        %v2843 = vpop.f32.mrf.mxu0
        %v2844 = vadd.f32 %v2755, %v2843
        %2845 = vdwg.mxu0
        %2846 = vmatpush.bf16.msra.mxu0 %v2158
        %2847 = vmatpush.bf16.msra.mxu0 %v2156
        %2848 = vmatpush.bf16.msra.mxu0 %v2154
        %2849 = vmatpush.bf16.msra.mxu0 %v2152
        %2850 = vmatpush.bf16.msra.mxu0 %v2150
        %2851 = vmatpush.bf16.msra.mxu0 %v2148
        %2852 = vmatpush.bf16.msra.mxu0 %v2146
        %2853 = vmatpush.bf16.msra.mxu0 %v2144
        %2854 = vmatmul.bf16.gmra.mxu0 %v1778
        %v2855 = vpop.f32.mrf.mxu0
        %v2856 = vadd.f32 %v2767, %v2855
        %v2857 = vpop.f32.mrf.mxu0
        %v2858 = vadd.f32 %v2769, %v2857
        %2859 = vmatmul.bf16.gmra.mxu0 %v1782
        %v2860 = vpop.f32.mrf.mxu0
        %v2861 = vadd.f32 %v2772, %v2860
        %v2862 = vpop.f32.mrf.mxu0
        %v2863 = vadd.f32 %v2774, %v2862
        %2864 = vmatmul.bf16.gmra.mxu0 %v1786
        %v2865 = vpop.f32.mrf.mxu0
        %v2866 = vadd.f32 %v2777, %v2865
        %v2867 = vpop.f32.mrf.mxu0
        %v2868 = vadd.f32 %v2779, %v2867
        %2869 = vmatmul.bf16.gmra.mxu0 %v1790
        %v2870 = vpop.f32.mrf.mxu0
        %v2871 = vadd.f32 %v2782, %v2870
        %v2872 = vpop.f32.mrf.mxu0
        %v2873 = vadd.f32 %v2784, %v2872
        %2874 = vmatmul.bf16.gmra.mxu0 %v1794
        %v2875 = vpop.f32.mrf.mxu0
        %v2876 = vadd.f32 %v2787, %v2875
        %v2877 = vpop.f32.mrf.mxu0
        %v2878 = vadd.f32 %v2789, %v2877
        %2879 = vmatmul.bf16.gmra.mxu0 %v1798
        %v2880 = vpop.f32.mrf.mxu0
        %v2881 = vadd.f32 %v2792, %v2880
        %v2882 = vpop.f32.mrf.mxu0
        %v2883 = vadd.f32 %v2794, %v2882
        %2884 = vmatmul.bf16.gmra.mxu0 %v1802
        %v2885 = vpop.f32.mrf.mxu0
        %v2886 = vadd.f32 %v2797, %v2885
        %v2887 = vpop.f32.mrf.mxu0
        %v2888 = vadd.f32 %v2799, %v2887
        %2889 = vmatmul.bf16.gmra.mxu0 %v1806
        %v2890 = vpop.f32.mrf.mxu0
        %v2891 = vadd.f32 %v2802, %v2890
        %v2892 = vpop.f32.mrf.mxu0
        %v2893 = vadd.f32 %v2804, %v2892
        %2894 = vmatmul.bf16.gmra.mxu0 %v1810
        %v2895 = vpop.f32.mrf.mxu0
        %v2896 = vadd.f32 %v2807, %v2895
        %v2897 = vpop.f32.mrf.mxu0
        %v2898 = vadd.f32 %v2809, %v2897
        %2899 = vmatmul.bf16.gmra.mxu0 %v1814
        %v2900 = vpop.f32.mrf.mxu0
        %v2901 = vadd.f32 %v2812, %v2900
        %v2902 = vpop.f32.mrf.mxu0
        %v2903 = vadd.f32 %v2814, %v2902
        %2904 = vmatmul.bf16.gmra.mxu0 %v1818
        %v2905 = vpop.f32.mrf.mxu0
        %v2906 = vadd.f32 %v2817, %v2905
        %v2907 = vpop.f32.mrf.mxu0
        %v2908 = vadd.f32 %v2819, %v2907
        %2909 = vmatmul.bf16.gmra.mxu0 %v1822
        %v2910 = vpop.f32.mrf.mxu0
        %v2911 = vadd.f32 %v2822, %v2910
        %v2912 = vpop.f32.mrf.mxu0
        %v2913 = vadd.f32 %v2824, %v2912
        %2914 = vmatmul.bf16.gmra.mxu0 %v1826
        %v2915 = vpop.f32.mrf.mxu0
        %v2916 = vadd.f32 %v2827, %v2915
        %v2917 = vpop.f32.mrf.mxu0
        %v2918 = vadd.f32 %v2829, %v2917
        %2919 = vmatmul.bf16.gmra.mxu0 %v1830
        %v2920 = vpop.f32.mrf.mxu0
        %v2921 = vadd.f32 %v2832, %v2920
        %v2922 = vpop.f32.mrf.mxu0
        %v2923 = vadd.f32 %v2834, %v2922
        %2924 = vmatmul.bf16.gmra.mxu0 %v1834
        %v2925 = vpop.f32.mrf.mxu0
        %v2926 = vadd.f32 %v2837, %v2925
        %v2927 = vpop.f32.mrf.mxu0
        %v2928 = vadd.f32 %v2839, %v2927
        %2929 = vmatmul.bf16.gmra.mxu0 %v1838
        %v2930 = vpop.f32.mrf.mxu0
        %v2931 = vadd.f32 %v2842, %v2930
        %v2932 = vpop.f32.mrf.mxu0
        %v2933 = vadd.f32 %v2844, %v2932
        %2934 = vdwg.mxu0
        %v2935 = vpack.c.bf16 %v2856, %v2500
        %v2936 = vpack.c.bf16 %v2858, %v2502
        %v2937 = vpack.c.bf16 %v2861, %v2505
        %v2938 = vpack.c.bf16 %v2863, %v2507
        %v2939 = vpack.c.bf16 %v2866, %v2510
        %v2940 = vpack.c.bf16 %v2868, %v2512
        %v2941 = vpack.c.bf16 %v2871, %v2515
        %v2942 = vpack.c.bf16 %v2873, %v2517
        %v2943 = vpack.c.bf16 %v2876, %v2520
        %v2944 = vpack.c.bf16 %v2878, %v2522
        %v2945 = vpack.c.bf16 %v2881, %v2525
        %v2946 = vpack.c.bf16 %v2883, %v2527
        %v2947 = vpack.c.bf16 %v2886, %v2530
        %v2948 = vpack.c.bf16 %v2888, %v2532
        %v2949 = vpack.c.bf16 %v2891, %v2535
        %v2950 = vpack.c.bf16 %v2893, %v2537
        %v2951 = vpack.c.bf16 %v2896, %v2540
        %v2952 = vpack.c.bf16 %v2898, %v2542
        %v2953 = vpack.c.bf16 %v2901, %v2545
        %v2954 = vpack.c.bf16 %v2903, %v2547
        %v2955 = vpack.c.bf16 %v2906, %v2550
        %v2956 = vpack.c.bf16 %v2908, %v2552
        %v2957 = vpack.c.bf16 %v2911, %v2555
        %v2958 = vpack.c.bf16 %v2913, %v2557
        %v2959 = vpack.c.bf16 %v2916, %v2560
        %v2960 = vpack.c.bf16 %v2918, %v2562
        %v2961 = vpack.c.bf16 %v2921, %v2565
        %v2962 = vpack.c.bf16 %v2923, %v2567
        %v2963 = vpack.c.bf16 %v2926, %v2570
        %v2964 = vpack.c.bf16 %v2928, %v2572
        %v2965 = vpack.c.bf16 %v2931, %v2575
        %v2966 = vpack.c.bf16 %v2933, %v2577
        %v2967 = vld [vmem:[%s4] sm:$0x3]
        %2969 = vst [vmem:[#allocation1] ss:$9 sm:$0xff] %v2967
        %v2970 = vld [vmem:[#allocation1] sm:$0xff]
        %v2971 = vld [vmem:[#allocation1 + $0x9] sm:$0xff]
        %v2972 = vpack.i.b16 %v2970, %v2970
        %v2974 = vperm.slane %v2972, 0
        %v2975 = vpack.i.b16 %v2971, %v2971
        %v2977 = vperm.slane %v2975, 0
        %v2978 = vunpack.c.l.bf16 %v2935
        %v2979 = vunpack.c.h.bf16 %v2935
        %v2980 = vunpack.c.l.bf16 %v2936
        %v2981 = vunpack.c.h.bf16 %v2936
        %v2982 = vunpack.c.l.bf16 %v2937
        %v2983 = vunpack.c.h.bf16 %v2937
        %v2984 = vunpack.c.l.bf16 %v2938
        %v2985 = vunpack.c.h.bf16 %v2938
        %v2986 = vunpack.c.l.bf16 %v2939
        %v2987 = vunpack.c.h.bf16 %v2939
        %v2988 = vunpack.c.l.bf16 %v2940
        %v2989 = vunpack.c.h.bf16 %v2940
        %v2990 = vunpack.c.l.bf16 %v2941
        %v2991 = vunpack.c.h.bf16 %v2941
        %v2992 = vunpack.c.l.bf16 %v2942
        %v2993 = vunpack.c.h.bf16 %v2942
        %v2994 = vunpack.c.l.bf16 %v2943
        %v2995 = vunpack.c.h.bf16 %v2943
        %v2996 = vunpack.c.l.bf16 %v2944
        %v2997 = vunpack.c.h.bf16 %v2944
        %v2998 = vunpack.c.l.bf16 %v2945
        %v2999 = vunpack.c.h.bf16 %v2945
        %v3000 = vunpack.c.l.bf16 %v2946
        %v3001 = vunpack.c.h.bf16 %v2946
        %v3002 = vunpack.c.l.bf16 %v2947
        %v3003 = vunpack.c.h.bf16 %v2947
        %v3004 = vunpack.c.l.bf16 %v2948
        %v3005 = vunpack.c.h.bf16 %v2948
        %v3006 = vunpack.c.l.bf16 %v2949
        %v3007 = vunpack.c.h.bf16 %v2949
        %v3008 = vunpack.c.l.bf16 %v2950
        %v3009 = vunpack.c.h.bf16 %v2950
        %v3010 = vunpack.c.l.bf16 %v2951
        %v3011 = vunpack.c.h.bf16 %v2951
        %v3012 = vunpack.c.l.bf16 %v2952
        %v3013 = vunpack.c.h.bf16 %v2952
        %v3014 = vunpack.c.l.bf16 %v2953
        %v3015 = vunpack.c.h.bf16 %v2953
        %v3016 = vunpack.c.l.bf16 %v2954
        %v3017 = vunpack.c.h.bf16 %v2954
        %v3018 = vunpack.c.l.bf16 %v2955
        %v3019 = vunpack.c.h.bf16 %v2955
        %v3020 = vunpack.c.l.bf16 %v2956
        %v3021 = vunpack.c.h.bf16 %v2956
        %v3022 = vunpack.c.l.bf16 %v2957
        %v3023 = vunpack.c.h.bf16 %v2957
        %v3024 = vunpack.c.l.bf16 %v2958
        %v3025 = vunpack.c.h.bf16 %v2958
        %v3026 = vunpack.c.l.bf16 %v2959
        %v3027 = vunpack.c.h.bf16 %v2959
        %v3028 = vunpack.c.l.bf16 %v2960
        %v3029 = vunpack.c.h.bf16 %v2960
        %v3030 = vunpack.c.l.bf16 %v2961
        %v3031 = vunpack.c.h.bf16 %v2961
        %v3032 = vunpack.c.l.bf16 %v2962
        %v3033 = vunpack.c.h.bf16 %v2962
        %v3034 = vunpack.c.l.bf16 %v2963
        %v3035 = vunpack.c.h.bf16 %v2963
        %v3036 = vunpack.c.l.bf16 %v2964
        %v3037 = vunpack.c.h.bf16 %v2964
        %v3038 = vunpack.c.l.bf16 %v2965
        %v3039 = vunpack.c.h.bf16 %v2965
        %v3040 = vunpack.c.l.bf16 %v2966
        %v3041 = vunpack.c.h.bf16 %v2966
        %v3042 = vunpack.c.l.bf16 %v2974
        %v3043 = vunpack.c.l.bf16 %v2977
        %v3044 = vadd.f32 %v2978, %v3042
        %v3045 = vadd.f32 %v2979, %v3043
        %v3046 = vadd.f32 %v2980, %v3042
        %v3047 = vadd.f32 %v2981, %v3043
        %v3048 = vadd.f32 %v2982, %v3042
        %v3049 = vadd.f32 %v2983, %v3043
        %v3050 = vadd.f32 %v2984, %v3042
        %v3051 = vadd.f32 %v2985, %v3043
        %v3052 = vadd.f32 %v2986, %v3042
        %v3053 = vadd.f32 %v2987, %v3043
        %v3054 = vadd.f32 %v2988, %v3042
        %v3055 = vadd.f32 %v2989, %v3043
        %v3056 = vadd.f32 %v2990, %v3042
        %v3057 = vadd.f32 %v2991, %v3043
        %v3058 = vadd.f32 %v2992, %v3042
        %v3059 = vadd.f32 %v2993, %v3043
        %v3060 = vadd.f32 %v2994, %v3042
        %v3061 = vadd.f32 %v2995, %v3043
        %v3062 = vadd.f32 %v2996, %v3042
        %v3063 = vadd.f32 %v2997, %v3043
        %v3064 = vadd.f32 %v2998, %v3042
        %v3065 = vadd.f32 %v2999, %v3043
        %v3066 = vadd.f32 %v3000, %v3042
        %v3067 = vadd.f32 %v3001, %v3043
        %v3068 = vadd.f32 %v3002, %v3042
        %v3069 = vadd.f32 %v3003, %v3043
        %v3070 = vadd.f32 %v3004, %v3042
        %v3071 = vadd.f32 %v3005, %v3043
        %v3072 = vadd.f32 %v3006, %v3042
        %v3073 = vadd.f32 %v3007, %v3043
        %v3074 = vadd.f32 %v3008, %v3042
        %v3075 = vadd.f32 %v3009, %v3043
        %v3076 = vadd.f32 %v3010, %v3042
        %v3077 = vadd.f32 %v3011, %v3043
        %v3078 = vadd.f32 %v3012, %v3042
        %v3079 = vadd.f32 %v3013, %v3043
        %v3080 = vadd.f32 %v3014, %v3042
        %v3081 = vadd.f32 %v3015, %v3043
        %v3082 = vadd.f32 %v3016, %v3042
        %v3083 = vadd.f32 %v3017, %v3043
        %v3084 = vadd.f32 %v3018, %v3042
        %v3085 = vadd.f32 %v3019, %v3043
        %v3086 = vadd.f32 %v3020, %v3042
        %v3087 = vadd.f32 %v3021, %v3043
        %v3088 = vadd.f32 %v3022, %v3042
        %v3089 = vadd.f32 %v3023, %v3043
        %v3090 = vadd.f32 %v3024, %v3042
        %v3091 = vadd.f32 %v3025, %v3043
        %v3092 = vadd.f32 %v3026, %v3042
        %v3093 = vadd.f32 %v3027, %v3043
        %v3094 = vadd.f32 %v3028, %v3042
        %v3095 = vadd.f32 %v3029, %v3043
        %v3096 = vadd.f32 %v3030, %v3042
        %v3097 = vadd.f32 %v3031, %v3043
        %v3098 = vadd.f32 %v3032, %v3042
        %v3099 = vadd.f32 %v3033, %v3043
        %v3100 = vadd.f32 %v3034, %v3042
        %v3101 = vadd.f32 %v3035, %v3043
        %v3102 = vadd.f32 %v3036, %v3042
        %v3103 = vadd.f32 %v3037, %v3043
        %v3104 = vadd.f32 %v3038, %v3042
        %v3105 = vadd.f32 %v3039, %v3043
        %v3106 = vadd.f32 %v3040, %v3042
        %v3107 = vadd.f32 %v3041, %v3043
        %v3108 = vpack.c.bf16 %v3045, %v3044
        %v3109 = vpack.c.bf16 %v3047, %v3046
        %v3110 = vpack.c.bf16 %v3049, %v3048
        %v3111 = vpack.c.bf16 %v3051, %v3050
        %v3112 = vpack.c.bf16 %v3053, %v3052
        %v3113 = vpack.c.bf16 %v3055, %v3054
        %v3114 = vpack.c.bf16 %v3057, %v3056
        %v3115 = vpack.c.bf16 %v3059, %v3058
        %v3116 = vpack.c.bf16 %v3061, %v3060
        %v3117 = vpack.c.bf16 %v3063, %v3062
        %v3118 = vpack.c.bf16 %v3065, %v3064
        %v3119 = vpack.c.bf16 %v3067, %v3066
        %v3120 = vpack.c.bf16 %v3069, %v3068
        %v3121 = vpack.c.bf16 %v3071, %v3070
        %v3122 = vpack.c.bf16 %v3073, %v3072
        %v3123 = vpack.c.bf16 %v3075, %v3074
        %v3124 = vpack.c.bf16 %v3077, %v3076
        %v3125 = vpack.c.bf16 %v3079, %v3078
        %v3126 = vpack.c.bf16 %v3081, %v3080
        %v3127 = vpack.c.bf16 %v3083, %v3082
        %v3128 = vpack.c.bf16 %v3085, %v3084
        %v3129 = vpack.c.bf16 %v3087, %v3086
        %v3130 = vpack.c.bf16 %v3089, %v3088
        %v3131 = vpack.c.bf16 %v3091, %v3090
        %v3132 = vpack.c.bf16 %v3093, %v3092
        %v3133 = vpack.c.bf16 %v3095, %v3094
        %v3134 = vpack.c.bf16 %v3097, %v3096
        %v3135 = vpack.c.bf16 %v3099, %v3098
        %v3136 = vpack.c.bf16 %v3101, %v3100
        %v3137 = vpack.c.bf16 %v3103, %v3102
        %v3138 = vpack.c.bf16 %v3105, %v3104
        %v3139 = vpack.c.bf16 %v3107, %v3106
        %v3140 = vunpack.c.l.bf16 %v3108
        %v3141 = vunpack.c.h.bf16 %v3108
        %v3142 = vunpack.c.l.bf16 %v3109
        %v3143 = vunpack.c.h.bf16 %v3109
        %v3144 = vunpack.c.l.bf16 %v3110
        %v3145 = vunpack.c.h.bf16 %v3110
        %v3146 = vunpack.c.l.bf16 %v3111
        %v3147 = vunpack.c.h.bf16 %v3111
        %v3148 = vunpack.c.l.bf16 %v3112
        %v3149 = vunpack.c.h.bf16 %v3112
        %v3150 = vunpack.c.l.bf16 %v3113
        %v3151 = vunpack.c.h.bf16 %v3113
        %v3152 = vunpack.c.l.bf16 %v3114
        %v3153 = vunpack.c.h.bf16 %v3114
        %v3154 = vunpack.c.l.bf16 %v3115
        %v3155 = vunpack.c.h.bf16 %v3115
        %v3156 = vunpack.c.l.bf16 %v3116
        %v3157 = vunpack.c.h.bf16 %v3116
        %v3158 = vunpack.c.l.bf16 %v3117
        %v3159 = vunpack.c.h.bf16 %v3117
        %v3160 = vunpack.c.l.bf16 %v3118
        %v3161 = vunpack.c.h.bf16 %v3118
        %v3162 = vunpack.c.l.bf16 %v3119
        %v3163 = vunpack.c.h.bf16 %v3119
        %v3164 = vunpack.c.l.bf16 %v3120
        %v3165 = vunpack.c.h.bf16 %v3120
        %v3166 = vunpack.c.l.bf16 %v3121
        %v3167 = vunpack.c.h.bf16 %v3121
        %v3168 = vunpack.c.l.bf16 %v3122
        %v3169 = vunpack.c.h.bf16 %v3122
        %v3170 = vunpack.c.l.bf16 %v3123
        %v3171 = vunpack.c.h.bf16 %v3123
        %v3172 = vunpack.c.l.bf16 %v3124
        %v3173 = vunpack.c.h.bf16 %v3124
        %v3174 = vunpack.c.l.bf16 %v3125
        %v3175 = vunpack.c.h.bf16 %v3125
        %v3176 = vunpack.c.l.bf16 %v3126
        %v3177 = vunpack.c.h.bf16 %v3126
        %v3178 = vunpack.c.l.bf16 %v3127
        %v3179 = vunpack.c.h.bf16 %v3127
        %v3180 = vunpack.c.l.bf16 %v3128
        %v3181 = vunpack.c.h.bf16 %v3128
        %v3182 = vunpack.c.l.bf16 %v3129
        %v3183 = vunpack.c.h.bf16 %v3129
        %v3184 = vunpack.c.l.bf16 %v3130
        %v3185 = vunpack.c.h.bf16 %v3130
        %v3186 = vunpack.c.l.bf16 %v3131
        %v3187 = vunpack.c.h.bf16 %v3131
        %v3188 = vunpack.c.l.bf16 %v3132
        %v3189 = vunpack.c.h.bf16 %v3132
        %v3190 = vunpack.c.l.bf16 %v3133
        %v3191 = vunpack.c.h.bf16 %v3133
        %v3192 = vunpack.c.l.bf16 %v3134
        %v3193 = vunpack.c.h.bf16 %v3134
        %v3194 = vunpack.c.l.bf16 %v3135
        %v3195 = vunpack.c.h.bf16 %v3135
        %v3196 = vunpack.c.l.bf16 %v3136
        %v3197 = vunpack.c.h.bf16 %v3136
        %v3198 = vunpack.c.l.bf16 %v3137
        %v3199 = vunpack.c.h.bf16 %v3137
        %v3200 = vunpack.c.l.bf16 %v3138
        %v3201 = vunpack.c.h.bf16 %v3138
        %v3202 = vunpack.c.l.bf16 %v3139
        %v3203 = vunpack.c.h.bf16 %v3139
        %v3204 = vmax.f32 %v3140, 0.0
        %v3205 = vmax.f32 %v3141, 0.0
        %v3206 = vmax.f32 %v3142, 0.0
        %v3207 = vmax.f32 %v3143, 0.0
        %v3208 = vmax.f32 %v3144, 0.0
        %v3209 = vmax.f32 %v3145, 0.0
        %v3210 = vmax.f32 %v3146, 0.0
        %v3211 = vmax.f32 %v3147, 0.0
        %v3212 = vmax.f32 %v3148, 0.0
        %v3213 = vmax.f32 %v3149, 0.0
        %v3214 = vmax.f32 %v3150, 0.0
        %v3215 = vmax.f32 %v3151, 0.0
        %v3216 = vmax.f32 %v3152, 0.0
        %v3217 = vmax.f32 %v3153, 0.0
        %v3218 = vmax.f32 %v3154, 0.0
        %v3219 = vmax.f32 %v3155, 0.0
        %v3220 = vmax.f32 %v3156, 0.0
        %v3221 = vmax.f32 %v3157, 0.0
        %v3222 = vmax.f32 %v3158, 0.0
        %v3223 = vmax.f32 %v3159, 0.0
        %v3224 = vmax.f32 %v3160, 0.0
        %v3225 = vmax.f32 %v3161, 0.0
        %v3226 = vmax.f32 %v3162, 0.0
        %v3227 = vmax.f32 %v3163, 0.0
        %v3228 = vmax.f32 %v3164, 0.0
        %v3229 = vmax.f32 %v3165, 0.0
        %v3230 = vmax.f32 %v3166, 0.0
        %v3231 = vmax.f32 %v3167, 0.0
        %v3232 = vmax.f32 %v3168, 0.0
        %v3233 = vmax.f32 %v3169, 0.0
        %v3234 = vmax.f32 %v3170, 0.0
        %v3235 = vmax.f32 %v3171, 0.0
        %v3236 = vmax.f32 %v3172, 0.0
        %v3237 = vmax.f32 %v3173, 0.0
        %v3238 = vmax.f32 %v3174, 0.0
        %v3239 = vmax.f32 %v3175, 0.0
        %v3240 = vmax.f32 %v3176, 0.0
        %v3241 = vmax.f32 %v3177, 0.0
        %v3242 = vmax.f32 %v3178, 0.0
        %v3243 = vmax.f32 %v3179, 0.0
        %v3244 = vmax.f32 %v3180, 0.0
        %v3245 = vmax.f32 %v3181, 0.0
        %v3246 = vmax.f32 %v3182, 0.0
        %v3247 = vmax.f32 %v3183, 0.0
        %v3248 = vmax.f32 %v3184, 0.0
        %v3249 = vmax.f32 %v3185, 0.0
        %v3250 = vmax.f32 %v3186, 0.0
        %v3251 = vmax.f32 %v3187, 0.0
        %v3252 = vmax.f32 %v3188, 0.0
        %v3253 = vmax.f32 %v3189, 0.0
        %v3254 = vmax.f32 %v3190, 0.0
        %v3255 = vmax.f32 %v3191, 0.0
        %v3256 = vmax.f32 %v3192, 0.0
        %v3257 = vmax.f32 %v3193, 0.0
        %v3258 = vmax.f32 %v3194, 0.0
        %v3259 = vmax.f32 %v3195, 0.0
        %v3260 = vmax.f32 %v3196, 0.0
        %v3261 = vmax.f32 %v3197, 0.0
        %v3262 = vmax.f32 %v3198, 0.0
        %v3263 = vmax.f32 %v3199, 0.0
        %v3264 = vmax.f32 %v3200, 0.0
        %v3265 = vmax.f32 %v3201, 0.0
        %v3266 = vmax.f32 %v3202, 0.0
        %v3267 = vmax.f32 %v3203, 0.0
        %v3268 = vpack.c.bf16 %v3206, %v3204
        %v3269 = vpack.c.bf16 %v3207, %v3205
        %v3270 = vpack.c.bf16 %v3210, %v3208
        %v3271 = vpack.c.bf16 %v3211, %v3209
        %v3272 = vpack.c.bf16 %v3214, %v3212
        %v3273 = vpack.c.bf16 %v3215, %v3213
        %v3274 = vpack.c.bf16 %v3218, %v3216
        %v3275 = vpack.c.bf16 %v3219, %v3217
        %v3276 = vpack.c.bf16 %v3222, %v3220
        %v3277 = vpack.c.bf16 %v3223, %v3221
        %v3278 = vpack.c.bf16 %v3226, %v3224
        %v3279 = vpack.c.bf16 %v3227, %v3225
        %v3280 = vpack.c.bf16 %v3230, %v3228
        %v3281 = vpack.c.bf16 %v3231, %v3229
        %v3282 = vpack.c.bf16 %v3234, %v3232
        %v3283 = vpack.c.bf16 %v3235, %v3233
        %v3284 = vpack.c.bf16 %v3238, %v3236
        %v3285 = vpack.c.bf16 %v3239, %v3237
        %v3286 = vpack.c.bf16 %v3242, %v3240
        %v3287 = vpack.c.bf16 %v3243, %v3241
        %v3288 = vpack.c.bf16 %v3246, %v3244
        %v3289 = vpack.c.bf16 %v3247, %v3245
        %v3290 = vpack.c.bf16 %v3250, %v3248
        %v3291 = vpack.c.bf16 %v3251, %v3249
        %v3292 = vpack.c.bf16 %v3254, %v3252
        %v3293 = vpack.c.bf16 %v3255, %v3253
        %v3294 = vpack.c.bf16 %v3258, %v3256
        %v3295 = vpack.c.bf16 %v3259, %v3257
        %v3296 = vpack.c.bf16 %v3262, %v3260
        %v3297 = vpack.c.bf16 %v3263, %v3261
        %v3298 = vpack.c.bf16 %v3266, %v3264
        %v3299 = vpack.c.bf16 %v3267, %v3265
        %v3300 = vld [vmem:[#allocation10] sm:$0xf]
        %v3301 = vld [vmem:[#allocation10 + $0x4] sm:$0xf]
        %v3302 = vld [vmem:[#allocation10 + $0x8] sm:$0xf]
        %v3303 = vld [vmem:[#allocation10 + $0xc] sm:$0xf]
        %v3304 = vld [vmem:[#allocation10 + $0x10] sm:$0xf]
        %v3305 = vld [vmem:[#allocation10 + $0x14] sm:$0xf]
        %v3306 = vld [vmem:[#allocation10 + $0x18] sm:$0xf]
        %v3307 = vld [vmem:[#allocation10 + $0x1c] sm:$0xf]
        %v3308 = vld [vmem:[#allocation10 + $0x20] sm:$0xf]
        %v3309 = vld [vmem:[#allocation10 + $0x24] sm:$0xf]
        %v3310 = vld [vmem:[#allocation10 + $0x28] sm:$0xf]
        %v3311 = vld [vmem:[#allocation10 + $0x2c] sm:$0xf]
        %v3312 = vld [vmem:[#allocation10 + $0x30] sm:$0xf]
        %v3313 = vld [vmem:[#allocation10 + $0x34] sm:$0xf]
        %v3314 = vld [vmem:[#allocation10 + $0x38] sm:$0xf]
        %v3315 = vld [vmem:[#allocation10 + $0x3c] sm:$0xf]
        %v3316 = vld [vmem:[#allocation10 + $0x40] sm:$0xf]
        %v3317 = vld [vmem:[#allocation10 + $0x44] sm:$0xf]
        %v3318 = vld [vmem:[#allocation10 + $0x48] sm:$0xf]
        %v3319 = vld [vmem:[#allocation10 + $0x4c] sm:$0xf]
        %v3320 = vld [vmem:[#allocation10 + $0x50] sm:$0xf]
        %v3321 = vld [vmem:[#allocation10 + $0x54] sm:$0xf]
        %v3322 = vld [vmem:[#allocation10 + $0x58] sm:$0xf]
        %v3323 = vld [vmem:[#allocation10 + $0x5c] sm:$0xf]
        %v3324 = vld [vmem:[#allocation10 + $0x60] sm:$0xf]
        %v3325 = vld [vmem:[#allocation10 + $0x64] sm:$0xf]
        %v3326 = vld [vmem:[#allocation10 + $0x68] sm:$0xf]
        %v3327 = vld [vmem:[#allocation10 + $0x6c] sm:$0xf]
        %v3328 = vld [vmem:[#allocation10 + $0x70] sm:$0xf]
        %v3329 = vld [vmem:[#allocation10 + $0x74] sm:$0xf]
        %v3330 = vld [vmem:[#allocation10 + $0x78] sm:$0xf]
        %v3331 = vld [vmem:[#allocation10 + $0x7c] sm:$0xf]
        %v3364 = vunpack.c.l.b16 %v3300
        %v3365 = vunpack.c.l.b16 %v3301
        %v3366 = vunpack.c.l.b16 %v3302
        %v3367 = vunpack.c.l.b16 %v3303
        %v3368 = vunpack.c.l.b16 %v3304
        %v3369 = vunpack.c.l.b16 %v3305
        %v3370 = vunpack.c.l.b16 %v3306
        %v3371 = vunpack.c.l.b16 %v3307
        %v3372 = vunpack.c.l.b16 %v3308
        %v3373 = vunpack.c.l.b16 %v3309
        %v3374 = vunpack.c.l.b16 %v3310
        %v3375 = vunpack.c.l.b16 %v3311
        %v3376 = vunpack.c.l.b16 %v3312
        %v3377 = vunpack.c.l.b16 %v3313
        %v3378 = vunpack.c.l.b16 %v3314
        %v3379 = vunpack.c.l.b16 %v3315
        %v3380 = vunpack.c.l.b16 %v3316
        %v3381 = vunpack.c.l.b16 %v3317
        %v3382 = vunpack.c.l.b16 %v3318
        %v3383 = vunpack.c.l.b16 %v3319
        %v3384 = vunpack.c.l.b16 %v3320
        %v3385 = vunpack.c.l.b16 %v3321
        %v3386 = vunpack.c.l.b16 %v3322
        %v3387 = vunpack.c.l.b16 %v3323
        %v3388 = vunpack.c.l.b16 %v3324
        %v3389 = vunpack.c.l.b16 %v3325
        %v3390 = vunpack.c.l.b16 %v3326
        %v3391 = vunpack.c.l.b16 %v3327
        %v3392 = vunpack.c.l.b16 %v3328
        %v3393 = vunpack.c.l.b16 %v3329
        %v3394 = vunpack.c.l.b16 %v3330
        %v3395 = vunpack.c.l.b16 %v3331
        %v3396 = vpack.c.b16 %v3365, %v3364
        %v3397 = vpack.c.b16 %v3367, %v3366
        %v3398 = vpack.c.b16 %v3369, %v3368
        %v3399 = vpack.c.b16 %v3371, %v3370
        %v3400 = vpack.c.b16 %v3373, %v3372
        %v3401 = vpack.c.b16 %v3375, %v3374
        %v3402 = vpack.c.b16 %v3377, %v3376
        %v3403 = vpack.c.b16 %v3379, %v3378
        %v3404 = vpack.c.b16 %v3381, %v3380
        %v3405 = vpack.c.b16 %v3383, %v3382
        %v3406 = vpack.c.b16 %v3385, %v3384
        %v3407 = vpack.c.b16 %v3387, %v3386
        %v3408 = vpack.c.b16 %v3389, %v3388
        %v3409 = vpack.c.b16 %v3391, %v3390
        %v3410 = vpack.c.b16 %v3393, %v3392
        %v3411 = vpack.c.b16 %v3395, %v3394
        %3428 = vmatpush.bf16.msra.mxu0 %v3403
        %3429 = vmatpush.bf16.msra.mxu0 %v3402
        %3430 = vmatpush.bf16.msra.mxu0 %v3401
        %3431 = vmatpush.bf16.msra.mxu0 %v3400
        %3432 = vmatpush.bf16.msra.mxu0 %v3399
        %3433 = vmatpush.bf16.msra.mxu0 %v3398
        %3434 = vmatpush.bf16.msra.mxu0 %v3397
        %3435 = vmatpush.bf16.msra.mxu0 %v3396
        %3436 = vmatmul.bf16.gmra.mxu0 %v3268
        %v3437 = vpop.f32.mrf.mxu0
        %v3438 = vadd.f32 0.0, %v3437
        %v3439 = vpop.f32.mrf.mxu0
        %v3440 = vadd.f32 0.0, %v3439
        %3441 = vmatmul.bf16.gmra.mxu0 %v3270
        %v3442 = vpop.f32.mrf.mxu0
        %v3443 = vadd.f32 0.0, %v3442
        %v3444 = vpop.f32.mrf.mxu0
        %v3445 = vadd.f32 0.0, %v3444
        %3446 = vmatmul.bf16.gmra.mxu0 %v3272
        %v3447 = vpop.f32.mrf.mxu0
        %v3448 = vadd.f32 0.0, %v3447
        %v3449 = vpop.f32.mrf.mxu0
        %v3450 = vadd.f32 0.0, %v3449
        %3451 = vmatmul.bf16.gmra.mxu0 %v3274
        %v3452 = vpop.f32.mrf.mxu0
        %v3453 = vadd.f32 0.0, %v3452
        %v3454 = vpop.f32.mrf.mxu0
        %v3455 = vadd.f32 0.0, %v3454
        %3456 = vmatmul.bf16.gmra.mxu0 %v3276
        %v3457 = vpop.f32.mrf.mxu0
        %v3458 = vadd.f32 0.0, %v3457
        %v3459 = vpop.f32.mrf.mxu0
        %v3460 = vadd.f32 0.0, %v3459
        %3461 = vmatmul.bf16.gmra.mxu0 %v3278
        %v3462 = vpop.f32.mrf.mxu0
        %v3463 = vadd.f32 0.0, %v3462
        %v3464 = vpop.f32.mrf.mxu0
        %v3465 = vadd.f32 0.0, %v3464
        %3466 = vmatmul.bf16.gmra.mxu0 %v3280
        %v3467 = vpop.f32.mrf.mxu0
        %v3468 = vadd.f32 0.0, %v3467
        %v3469 = vpop.f32.mrf.mxu0
        %v3470 = vadd.f32 0.0, %v3469
        %3471 = vmatmul.bf16.gmra.mxu0 %v3282
        %v3472 = vpop.f32.mrf.mxu0
        %v3473 = vadd.f32 0.0, %v3472
        %v3474 = vpop.f32.mrf.mxu0
        %v3475 = vadd.f32 0.0, %v3474
        %3476 = vmatmul.bf16.gmra.mxu0 %v3284
        %v3477 = vpop.f32.mrf.mxu0
        %v3478 = vadd.f32 0.0, %v3477
        %v3479 = vpop.f32.mrf.mxu0
        %v3480 = vadd.f32 0.0, %v3479
        %3481 = vmatmul.bf16.gmra.mxu0 %v3286
        %v3482 = vpop.f32.mrf.mxu0
        %v3483 = vadd.f32 0.0, %v3482
        %v3484 = vpop.f32.mrf.mxu0
        %v3485 = vadd.f32 0.0, %v3484
        %3486 = vmatmul.bf16.gmra.mxu0 %v3288
        %v3487 = vpop.f32.mrf.mxu0
        %v3488 = vadd.f32 0.0, %v3487
        %v3489 = vpop.f32.mrf.mxu0
        %v3490 = vadd.f32 0.0, %v3489
        %3491 = vmatmul.bf16.gmra.mxu0 %v3290
        %v3492 = vpop.f32.mrf.mxu0
        %v3493 = vadd.f32 0.0, %v3492
        %v3494 = vpop.f32.mrf.mxu0
        %v3495 = vadd.f32 0.0, %v3494
        %3496 = vmatmul.bf16.gmra.mxu0 %v3292
        %v3497 = vpop.f32.mrf.mxu0
        %v3498 = vadd.f32 0.0, %v3497
        %v3499 = vpop.f32.mrf.mxu0
        %v3500 = vadd.f32 0.0, %v3499
        %3501 = vmatmul.bf16.gmra.mxu0 %v3294
        %v3502 = vpop.f32.mrf.mxu0
        %v3503 = vadd.f32 0.0, %v3502
        %v3504 = vpop.f32.mrf.mxu0
        %v3505 = vadd.f32 0.0, %v3504
        %3506 = vmatmul.bf16.gmra.mxu0 %v3296
        %v3507 = vpop.f32.mrf.mxu0
        %v3508 = vadd.f32 0.0, %v3507
        %v3509 = vpop.f32.mrf.mxu0
        %v3510 = vadd.f32 0.0, %v3509
        %3511 = vmatmul.bf16.gmra.mxu0 %v3298
        %v3512 = vpop.f32.mrf.mxu0
        %v3513 = vadd.f32 0.0, %v3512
        %v3514 = vpop.f32.mrf.mxu0
        %v3515 = vadd.f32 0.0, %v3514
        %3516 = vdwg.mxu0
        %3517 = vmatpush.bf16.msra.mxu0 %v3411
        %3518 = vmatpush.bf16.msra.mxu0 %v3410
        %3519 = vmatpush.bf16.msra.mxu0 %v3409
        %3520 = vmatpush.bf16.msra.mxu0 %v3408
        %3521 = vmatpush.bf16.msra.mxu0 %v3407
        %3522 = vmatpush.bf16.msra.mxu0 %v3406
        %3523 = vmatpush.bf16.msra.mxu0 %v3405
        %3524 = vmatpush.bf16.msra.mxu0 %v3404
        %3525 = vmatmul.bf16.gmra.mxu0 %v3269
        %v3526 = vpop.f32.mrf.mxu0
        %v3527 = vadd.f32 %v3438, %v3526
        %v3528 = vpop.f32.mrf.mxu0
        %v3529 = vadd.f32 %v3440, %v3528
        %3530 = vmatmul.bf16.gmra.mxu0 %v3271
        %v3531 = vpop.f32.mrf.mxu0
        %v3532 = vadd.f32 %v3443, %v3531
        %v3533 = vpop.f32.mrf.mxu0
        %v3534 = vadd.f32 %v3445, %v3533
        %3535 = vmatmul.bf16.gmra.mxu0 %v3273
        %v3536 = vpop.f32.mrf.mxu0
        %v3537 = vadd.f32 %v3448, %v3536
        %v3538 = vpop.f32.mrf.mxu0
        %v3539 = vadd.f32 %v3450, %v3538
        %3540 = vmatmul.bf16.gmra.mxu0 %v3275
        %v3541 = vpop.f32.mrf.mxu0
        %v3542 = vadd.f32 %v3453, %v3541
        %v3543 = vpop.f32.mrf.mxu0
        %v3544 = vadd.f32 %v3455, %v3543
        %3545 = vmatmul.bf16.gmra.mxu0 %v3277
        %v3546 = vpop.f32.mrf.mxu0
        %v3547 = vadd.f32 %v3458, %v3546
        %v3548 = vpop.f32.mrf.mxu0
        %v3549 = vadd.f32 %v3460, %v3548
        %3550 = vmatmul.bf16.gmra.mxu0 %v3279
        %v3551 = vpop.f32.mrf.mxu0
        %v3552 = vadd.f32 %v3463, %v3551
        %v3553 = vpop.f32.mrf.mxu0
        %v3554 = vadd.f32 %v3465, %v3553
        %3555 = vmatmul.bf16.gmra.mxu0 %v3281
        %v3556 = vpop.f32.mrf.mxu0
        %v3557 = vadd.f32 %v3468, %v3556
        %v3558 = vpop.f32.mrf.mxu0
        %v3559 = vadd.f32 %v3470, %v3558
        %3560 = vmatmul.bf16.gmra.mxu0 %v3283
        %v3561 = vpop.f32.mrf.mxu0
        %v3562 = vadd.f32 %v3473, %v3561
        %v3563 = vpop.f32.mrf.mxu0
        %v3564 = vadd.f32 %v3475, %v3563
        %3565 = vmatmul.bf16.gmra.mxu0 %v3285
        %v3566 = vpop.f32.mrf.mxu0
        %v3567 = vadd.f32 %v3478, %v3566
        %v3568 = vpop.f32.mrf.mxu0
        %v3569 = vadd.f32 %v3480, %v3568
        %3570 = vmatmul.bf16.gmra.mxu0 %v3287
        %v3571 = vpop.f32.mrf.mxu0
        %v3572 = vadd.f32 %v3483, %v3571
        %v3573 = vpop.f32.mrf.mxu0
        %v3574 = vadd.f32 %v3485, %v3573
        %3575 = vmatmul.bf16.gmra.mxu0 %v3289
        %v3576 = vpop.f32.mrf.mxu0
        %v3577 = vadd.f32 %v3488, %v3576
        %v3578 = vpop.f32.mrf.mxu0
        %v3579 = vadd.f32 %v3490, %v3578
        %3580 = vmatmul.bf16.gmra.mxu0 %v3291
        %v3581 = vpop.f32.mrf.mxu0
        %v3582 = vadd.f32 %v3493, %v3581
        %v3583 = vpop.f32.mrf.mxu0
        %v3584 = vadd.f32 %v3495, %v3583
        %3585 = vmatmul.bf16.gmra.mxu0 %v3293
        %v3586 = vpop.f32.mrf.mxu0
        %v3587 = vadd.f32 %v3498, %v3586
        %v3588 = vpop.f32.mrf.mxu0
        %v3589 = vadd.f32 %v3500, %v3588
        %3590 = vmatmul.bf16.gmra.mxu0 %v3295
        %v3591 = vpop.f32.mrf.mxu0
        %v3592 = vadd.f32 %v3503, %v3591
        %v3593 = vpop.f32.mrf.mxu0
        %v3594 = vadd.f32 %v3505, %v3593
        %3595 = vmatmul.bf16.gmra.mxu0 %v3297
        %v3596 = vpop.f32.mrf.mxu0
        %v3597 = vadd.f32 %v3508, %v3596
        %v3598 = vpop.f32.mrf.mxu0
        %v3599 = vadd.f32 %v3510, %v3598
        %3600 = vmatmul.bf16.gmra.mxu0 %v3299
        %v3601 = vpop.f32.mrf.mxu0
        %v3602 = vadd.f32 %v3513, %v3601
        %v3603 = vpop.f32.mrf.mxu0
        %v3604 = vadd.f32 %v3515, %v3603
        %3605 = vdwg.mxu0
        %v3606 = vpack.c.bf16 %v3527, %v3527
        %v3607 = vpack.c.bf16 %v3529, %v3529
        %v3608 = vpack.c.bf16 %v3532, %v3532
        %v3609 = vpack.c.bf16 %v3534, %v3534
        %v3610 = vpack.c.bf16 %v3537, %v3537
        %v3611 = vpack.c.bf16 %v3539, %v3539
        %v3612 = vpack.c.bf16 %v3542, %v3542
        %v3613 = vpack.c.bf16 %v3544, %v3544
        %v3614 = vpack.c.bf16 %v3547, %v3547
        %v3615 = vpack.c.bf16 %v3549, %v3549
        %v3616 = vpack.c.bf16 %v3552, %v3552
        %v3617 = vpack.c.bf16 %v3554, %v3554
        %v3618 = vpack.c.bf16 %v3557, %v3557
        %v3619 = vpack.c.bf16 %v3559, %v3559
        %v3620 = vpack.c.bf16 %v3562, %v3562
        %v3621 = vpack.c.bf16 %v3564, %v3564
        %v3622 = vpack.c.bf16 %v3567, %v3567
        %v3623 = vpack.c.bf16 %v3569, %v3569
        %v3624 = vpack.c.bf16 %v3572, %v3572
        %v3625 = vpack.c.bf16 %v3574, %v3574
        %v3626 = vpack.c.bf16 %v3577, %v3577
        %v3627 = vpack.c.bf16 %v3579, %v3579
        %v3628 = vpack.c.bf16 %v3582, %v3582
        %v3629 = vpack.c.bf16 %v3584, %v3584
        %v3630 = vpack.c.bf16 %v3587, %v3587
        %v3631 = vpack.c.bf16 %v3589, %v3589
        %v3632 = vpack.c.bf16 %v3592, %v3592
        %v3633 = vpack.c.bf16 %v3594, %v3594
        %v3634 = vpack.c.bf16 %v3597, %v3597
        %v3635 = vpack.c.bf16 %v3599, %v3599
        %v3636 = vpack.c.bf16 %v3602, %v3602
        %v3637 = vpack.c.bf16 %v3604, %v3604
        %v3638 = vld [vmem:[%s6] sm:$0x1]
        %v3640 = vpack.i.b16 %v3638, %v3638
        %v3642 = vperm.slane %v3640, 0
        %v3643 = vunpack.c.l.bf16 %v3606
        %v3644 = vunpack.c.l.bf16 %v3607
        %v3645 = vunpack.c.l.bf16 %v3608
        %v3646 = vunpack.c.l.bf16 %v3609
        %v3647 = vunpack.c.l.bf16 %v3610
        %v3648 = vunpack.c.l.bf16 %v3611
        %v3649 = vunpack.c.l.bf16 %v3612
        %v3650 = vunpack.c.l.bf16 %v3613
        %v3651 = vunpack.c.l.bf16 %v3614
        %v3652 = vunpack.c.l.bf16 %v3615
        %v3653 = vunpack.c.l.bf16 %v3616
        %v3654 = vunpack.c.l.bf16 %v3617
        %v3655 = vunpack.c.l.bf16 %v3618
        %v3656 = vunpack.c.l.bf16 %v3619
        %v3657 = vunpack.c.l.bf16 %v3620
        %v3658 = vunpack.c.l.bf16 %v3621
        %v3659 = vunpack.c.l.bf16 %v3622
        %v3660 = vunpack.c.l.bf16 %v3623
        %v3661 = vunpack.c.l.bf16 %v3624
        %v3662 = vunpack.c.l.bf16 %v3625
        %v3663 = vunpack.c.l.bf16 %v3626
        %v3664 = vunpack.c.l.bf16 %v3627
        %v3665 = vunpack.c.l.bf16 %v3628
        %v3666 = vunpack.c.l.bf16 %v3629
        %v3667 = vunpack.c.l.bf16 %v3630
        %v3668 = vunpack.c.l.bf16 %v3631
        %v3669 = vunpack.c.l.bf16 %v3632
        %v3670 = vunpack.c.l.bf16 %v3633
        %v3671 = vunpack.c.l.bf16 %v3634
        %v3672 = vunpack.c.l.bf16 %v3635
        %v3673 = vunpack.c.l.bf16 %v3636
        %v3674 = vunpack.c.l.bf16 %v3637
        %v3675 = vunpack.c.l.bf16 %v3642
        %v3676 = vadd.f32 %v3643, %v3675
        %v3677 = vadd.f32 %v3644, %v3675
        %v3678 = vadd.f32 %v3645, %v3675
        %v3679 = vadd.f32 %v3646, %v3675
        %v3680 = vadd.f32 %v3647, %v3675
        %v3681 = vadd.f32 %v3648, %v3675
        %v3682 = vadd.f32 %v3649, %v3675
        %v3683 = vadd.f32 %v3650, %v3675
        %v3684 = vadd.f32 %v3651, %v3675
        %v3685 = vadd.f32 %v3652, %v3675
        %v3686 = vadd.f32 %v3653, %v3675
        %v3687 = vadd.f32 %v3654, %v3675
        %v3688 = vadd.f32 %v3655, %v3675
        %v3689 = vadd.f32 %v3656, %v3675
        %v3690 = vadd.f32 %v3657, %v3675
        %v3691 = vadd.f32 %v3658, %v3675
        %v3692 = vadd.f32 %v3659, %v3675
        %v3693 = vadd.f32 %v3660, %v3675
        %v3694 = vadd.f32 %v3661, %v3675
        %v3695 = vadd.f32 %v3662, %v3675
        %v3696 = vadd.f32 %v3663, %v3675
        %v3697 = vadd.f32 %v3664, %v3675
        %v3698 = vadd.f32 %v3665, %v3675
        %v3699 = vadd.f32 %v3666, %v3675
        %v3700 = vadd.f32 %v3667, %v3675
        %v3701 = vadd.f32 %v3668, %v3675
        %v3702 = vadd.f32 %v3669, %v3675
        %v3703 = vadd.f32 %v3670, %v3675
        %v3704 = vadd.f32 %v3671, %v3675
        %v3705 = vadd.f32 %v3672, %v3675
        %v3706 = vadd.f32 %v3673, %v3675
        %v3707 = vadd.f32 %v3674, %v3675
        %v3708 = vpack.c.bf16 %v3676, %v3676
        %v3709 = vpack.c.bf16 %v3677, %v3677
        %v3710 = vpack.c.bf16 %v3678, %v3678
        %v3711 = vpack.c.bf16 %v3679, %v3679
        %v3712 = vpack.c.bf16 %v3680, %v3680
        %v3713 = vpack.c.bf16 %v3681, %v3681
        %v3714 = vpack.c.bf16 %v3682, %v3682
        %v3715 = vpack.c.bf16 %v3683, %v3683
        %v3716 = vpack.c.bf16 %v3684, %v3684
        %v3717 = vpack.c.bf16 %v3685, %v3685
        %v3718 = vpack.c.bf16 %v3686, %v3686
        %v3719 = vpack.c.bf16 %v3687, %v3687
        %v3720 = vpack.c.bf16 %v3688, %v3688
        %v3721 = vpack.c.bf16 %v3689, %v3689
        %v3722 = vpack.c.bf16 %v3690, %v3690
        %v3723 = vpack.c.bf16 %v3691, %v3691
        %v3724 = vpack.c.bf16 %v3692, %v3692
        %v3725 = vpack.c.bf16 %v3693, %v3693
        %v3726 = vpack.c.bf16 %v3694, %v3694
        %v3727 = vpack.c.bf16 %v3695, %v3695
        %v3728 = vpack.c.bf16 %v3696, %v3696
        %v3729 = vpack.c.bf16 %v3697, %v3697
        %v3730 = vpack.c.bf16 %v3698, %v3698
        %v3731 = vpack.c.bf16 %v3699, %v3699
        %v3732 = vpack.c.bf16 %v3700, %v3700
        %v3733 = vpack.c.bf16 %v3701, %v3701
        %v3734 = vpack.c.bf16 %v3702, %v3702
        %v3735 = vpack.c.bf16 %v3703, %v3703
        %v3736 = vpack.c.bf16 %v3704, %v3704
        %v3737 = vpack.c.bf16 %v3705, %v3705
        %v3738 = vpack.c.bf16 %v3706, %v3706
        %v3739 = vpack.c.bf16 %v3707, %v3707
        %v3740 = vunpack.c.l.bf16 %v3708
        %v3741 = vunpack.c.l.bf16 %v3709
        %v3742 = vunpack.c.l.bf16 %v3710
        %v3743 = vunpack.c.l.bf16 %v3711
        %v3744 = vunpack.c.l.bf16 %v3712
        %v3745 = vunpack.c.l.bf16 %v3713
        %v3746 = vunpack.c.l.bf16 %v3714
        %v3747 = vunpack.c.l.bf16 %v3715
        %v3748 = vunpack.c.l.bf16 %v3716
        %v3749 = vunpack.c.l.bf16 %v3717
        %v3750 = vunpack.c.l.bf16 %v3718
        %v3751 = vunpack.c.l.bf16 %v3719
        %v3752 = vunpack.c.l.bf16 %v3720
        %v3753 = vunpack.c.l.bf16 %v3721
        %v3754 = vunpack.c.l.bf16 %v3722
        %v3755 = vunpack.c.l.bf16 %v3723
        %v3756 = vunpack.c.l.bf16 %v3724
        %v3757 = vunpack.c.l.bf16 %v3725
        %v3758 = vunpack.c.l.bf16 %v3726
        %v3759 = vunpack.c.l.bf16 %v3727
        %v3760 = vunpack.c.l.bf16 %v3728
        %v3761 = vunpack.c.l.bf16 %v3729
        %v3762 = vunpack.c.l.bf16 %v3730
        %v3763 = vunpack.c.l.bf16 %v3731
        %v3764 = vunpack.c.l.bf16 %v3732
        %v3765 = vunpack.c.l.bf16 %v3733
        %v3766 = vunpack.c.l.bf16 %v3734
        %v3767 = vunpack.c.l.bf16 %v3735
        %v3768 = vunpack.c.l.bf16 %v3736
        %v3769 = vunpack.c.l.bf16 %v3737
        %v3770 = vunpack.c.l.bf16 %v3738
        %v3771 = vunpack.c.l.bf16 %v3739
        %v3772 = vmax.f32 %v3740, 0.0
        %v3773 = vmax.f32 %v3741, 0.0
        %v3774 = vmax.f32 %v3742, 0.0
        %v3775 = vmax.f32 %v3743, 0.0
        %v3776 = vmax.f32 %v3744, 0.0
        %v3777 = vmax.f32 %v3745, 0.0
        %v3778 = vmax.f32 %v3746, 0.0
        %v3779 = vmax.f32 %v3747, 0.0
        %v3780 = vmax.f32 %v3748, 0.0
        %v3781 = vmax.f32 %v3749, 0.0
        %v3782 = vmax.f32 %v3750, 0.0
        %v3783 = vmax.f32 %v3751, 0.0
        %v3784 = vmax.f32 %v3752, 0.0
        %v3785 = vmax.f32 %v3753, 0.0
        %v3786 = vmax.f32 %v3754, 0.0
        %v3787 = vmax.f32 %v3755, 0.0
        %v3788 = vmax.f32 %v3756, 0.0
        %v3789 = vmax.f32 %v3757, 0.0
        %v3790 = vmax.f32 %v3758, 0.0
        %v3791 = vmax.f32 %v3759, 0.0
        %v3792 = vmax.f32 %v3760, 0.0
        %v3793 = vmax.f32 %v3761, 0.0
        %v3794 = vmax.f32 %v3762, 0.0
        %v3795 = vmax.f32 %v3763, 0.0
        %v3796 = vmax.f32 %v3764, 0.0
        %v3797 = vmax.f32 %v3765, 0.0
        %v3798 = vmax.f32 %v3766, 0.0
        %v3799 = vmax.f32 %v3767, 0.0
        %v3800 = vmax.f32 %v3768, 0.0
        %v3801 = vmax.f32 %v3769, 0.0
        %v3802 = vmax.f32 %v3770, 0.0
        %v3803 = vmax.f32 %v3771, 0.0
        %v3804 = vpack.c.bf16 %v3773, %v3772
        %v3805 = vpack.c.bf16 %v3775, %v3774
        %v3806 = vpack.c.bf16 %v3777, %v3776
        %v3807 = vpack.c.bf16 %v3779, %v3778
        %v3808 = vpack.c.bf16 %v3781, %v3780
        %v3809 = vpack.c.bf16 %v3783, %v3782
        %v3810 = vpack.c.bf16 %v3785, %v3784
        %v3811 = vpack.c.bf16 %v3787, %v3786
        %v3812 = vpack.c.bf16 %v3789, %v3788
        %v3813 = vpack.c.bf16 %v3791, %v3790
        %v3814 = vpack.c.bf16 %v3793, %v3792
        %v3815 = vpack.c.bf16 %v3795, %v3794
        %v3816 = vpack.c.bf16 %v3797, %v3796
        %v3817 = vpack.c.bf16 %v3799, %v3798
        %v3818 = vpack.c.bf16 %v3801, %v3800
        %v3819 = vpack.c.bf16 %v3803, %v3802
        %v3820 = vld [vmem:[#allocation11] sm:$0xf]
        %v3821 = vld [vmem:[#allocation11 + $0x4] sm:$0xf]
        %v3822 = vld [vmem:[#allocation11 + $0x8] sm:$0xf]
        %v3823 = vld [vmem:[#allocation11 + $0xc] sm:$0xf]
        %v3824 = vld [vmem:[#allocation11 + $0x10] sm:$0xf]
        %v3825 = vld [vmem:[#allocation11 + $0x14] sm:$0xf]
        %v3826 = vld [vmem:[#allocation11 + $0x18] sm:$0xf]
        %v3827 = vld [vmem:[#allocation11 + $0x1c] sm:$0xf]
        %v3828 = vld [vmem:[#allocation11 + $0x20] sm:$0xf]
        %v3829 = vld [vmem:[#allocation11 + $0x24] sm:$0xf]
        %v3830 = vld [vmem:[#allocation11 + $0x28] sm:$0xf]
        %v3831 = vld [vmem:[#allocation11 + $0x2c] sm:$0xf]
        %v3832 = vld [vmem:[#allocation11 + $0x30] sm:$0xf]
        %v3833 = vld [vmem:[#allocation11 + $0x34] sm:$0xf]
        %v3834 = vld [vmem:[#allocation11 + $0x38] sm:$0xf]
        %v3835 = vld [vmem:[#allocation11 + $0x3c] sm:$0xf]
        %v3836 = vld [vmem:[%s8] sm:$0x1]
        %v3838 = vperm.slane %v3836, 0
        %v3856 = vunpack.c.l.b16 %v3820
        %v3857 = vunpack.c.l.b16 %v3821
        %v3858 = vunpack.c.l.b16 %v3822
        %v3859 = vunpack.c.l.b16 %v3823
        %v3860 = vunpack.c.l.b16 %v3824
        %v3861 = vunpack.c.l.b16 %v3825
        %v3862 = vunpack.c.l.b16 %v3826
        %v3863 = vunpack.c.l.b16 %v3827
        %v3864 = vunpack.c.l.b16 %v3828
        %v3865 = vunpack.c.l.b16 %v3829
        %v3866 = vunpack.c.l.b16 %v3830
        %v3867 = vunpack.c.l.b16 %v3831
        %v3868 = vunpack.c.l.b16 %v3832
        %v3869 = vunpack.c.l.b16 %v3833
        %v3870 = vunpack.c.l.b16 %v3834
        %v3871 = vunpack.c.l.b16 %v3835
        %v3872 = vpack.c.b16 %v3857, %v3856
        %v3873 = vpack.c.b16 %v3859, %v3858
        %v3874 = vpack.c.b16 %v3861, %v3860
        %v3875 = vpack.c.b16 %v3863, %v3862
        %v3876 = vpack.c.b16 %v3865, %v3864
        %v3877 = vpack.c.b16 %v3867, %v3866
        %v3878 = vpack.c.b16 %v3869, %v3868
        %v3879 = vpack.c.b16 %v3871, %v3870
        %3888 = vmatpush.bf16.msra.mxu0 %v3879
        %3889 = vmatpush.bf16.msra.mxu0 %v3878
        %3890 = vmatpush.bf16.msra.mxu0 %v3877
        %3891 = vmatpush.bf16.msra.mxu0 %v3876
        %3892 = vmatpush.bf16.msra.mxu0 %v3875
        %3893 = vmatpush.bf16.msra.mxu0 %v3874
        %3894 = vmatpush.bf16.msra.mxu0 %v3873
        %3895 = vmatpush.bf16.msra.mxu0 %v3872
        %3896 = vmatmul.bf16.gmra.mxu0 %v3804
        %v3897 = vpop.f32.mrf.mxu0
        %v3898 = vadd.f32 %v3838, %v3897
        %v3899 = vpop.f32.mrf.mxu0
        %v3900 = vadd.f32 %v3838, %v3899
        %3901 = vmatmul.bf16.gmra.mxu0 %v3805
        %v3902 = vpop.f32.mrf.mxu0
        %v3903 = vadd.f32 %v3838, %v3902
        %v3904 = vpop.f32.mrf.mxu0
        %v3905 = vadd.f32 %v3838, %v3904
        %3906 = vmatmul.bf16.gmra.mxu0 %v3806
        %v3907 = vpop.f32.mrf.mxu0
        %v3908 = vadd.f32 %v3838, %v3907
        %v3909 = vpop.f32.mrf.mxu0
        %v3910 = vadd.f32 %v3838, %v3909
        %3911 = vmatmul.bf16.gmra.mxu0 %v3807
        %v3912 = vpop.f32.mrf.mxu0
        %v3913 = vadd.f32 %v3838, %v3912
        %v3914 = vpop.f32.mrf.mxu0
        %v3915 = vadd.f32 %v3838, %v3914
        %3916 = vmatmul.bf16.gmra.mxu0 %v3808
        %v3917 = vpop.f32.mrf.mxu0
        %v3918 = vadd.f32 %v3838, %v3917
        %v3919 = vpop.f32.mrf.mxu0
        %v3920 = vadd.f32 %v3838, %v3919
        %3921 = vmatmul.bf16.gmra.mxu0 %v3809
        %v3922 = vpop.f32.mrf.mxu0
        %v3923 = vadd.f32 %v3838, %v3922
        %v3924 = vpop.f32.mrf.mxu0
        %v3925 = vadd.f32 %v3838, %v3924
        %3926 = vmatmul.bf16.gmra.mxu0 %v3810
        %v3927 = vpop.f32.mrf.mxu0
        %v3928 = vadd.f32 %v3838, %v3927
        %v3929 = vpop.f32.mrf.mxu0
        %v3930 = vadd.f32 %v3838, %v3929
        %3931 = vmatmul.bf16.gmra.mxu0 %v3811
        %v3932 = vpop.f32.mrf.mxu0
        %v3933 = vadd.f32 %v3838, %v3932
        %v3934 = vpop.f32.mrf.mxu0
        %v3935 = vadd.f32 %v3838, %v3934
        %3936 = vmatmul.bf16.gmra.mxu0 %v3812
        %v3937 = vpop.f32.mrf.mxu0
        %v3938 = vadd.f32 %v3838, %v3937
        %v3939 = vpop.f32.mrf.mxu0
        %v3940 = vadd.f32 %v3838, %v3939
        %3941 = vmatmul.bf16.gmra.mxu0 %v3813
        %v3942 = vpop.f32.mrf.mxu0
        %v3943 = vadd.f32 %v3838, %v3942
        %v3944 = vpop.f32.mrf.mxu0
        %v3945 = vadd.f32 %v3838, %v3944
        %3946 = vmatmul.bf16.gmra.mxu0 %v3814
        %v3947 = vpop.f32.mrf.mxu0
        %v3948 = vadd.f32 %v3838, %v3947
        %v3949 = vpop.f32.mrf.mxu0
        %v3950 = vadd.f32 %v3838, %v3949
        %3951 = vmatmul.bf16.gmra.mxu0 %v3815
        %v3952 = vpop.f32.mrf.mxu0
        %v3953 = vadd.f32 %v3838, %v3952
        %v3954 = vpop.f32.mrf.mxu0
        %v3955 = vadd.f32 %v3838, %v3954
        %3956 = vmatmul.bf16.gmra.mxu0 %v3816
        %v3957 = vpop.f32.mrf.mxu0
        %v3958 = vadd.f32 %v3838, %v3957
        %v3959 = vpop.f32.mrf.mxu0
        %v3960 = vadd.f32 %v3838, %v3959
        %3961 = vmatmul.bf16.gmra.mxu0 %v3817
        %v3962 = vpop.f32.mrf.mxu0
        %v3963 = vadd.f32 %v3838, %v3962
        %v3964 = vpop.f32.mrf.mxu0
        %v3965 = vadd.f32 %v3838, %v3964
        %3966 = vmatmul.bf16.gmra.mxu0 %v3818
        %v3967 = vpop.f32.mrf.mxu0
        %v3968 = vadd.f32 %v3838, %v3967
        %v3969 = vpop.f32.mrf.mxu0
        %v3970 = vadd.f32 %v3838, %v3969
        %3971 = vmatmul.bf16.gmra.mxu0 %v3819
        %v3972 = vpop.f32.mrf.mxu0
        %v3973 = vadd.f32 %v3838, %v3972
        %v3974 = vpop.f32.mrf.mxu0
        %v3975 = vadd.f32 %v3838, %v3974
        %3976 = vdwg.mxu0
        %3977 = vst [vmem:[%s433] sm:$0xff] %v3898
        %3978 = vst [vmem:[%s433 + $0x8] sm:$0xff] %v3900
        %3979 = vst [vmem:[%s433 + $0x10] sm:$0xff] %v3903
        %3980 = vst [vmem:[%s433 + $0x18] sm:$0xff] %v3905
        %3981 = vst [vmem:[%s433 + $0x20] sm:$0xff] %v3908
        %3982 = vst [vmem:[%s433 + $0x28] sm:$0xff] %v3910
        %3983 = vst [vmem:[%s433 + $0x30] sm:$0xff] %v3913
        %3984 = vst [vmem:[%s433 + $0x38] sm:$0xff] %v3915
        %3985 = vst [vmem:[%s433 + $0x40] sm:$0xff] %v3918
        %3986 = vst [vmem:[%s433 + $0x48] sm:$0xff] %v3920
        %3987 = vst [vmem:[%s433 + $0x50] sm:$0xff] %v3923
        %3988 = vst [vmem:[%s433 + $0x58] sm:$0xff] %v3925
        %3989 = vst [vmem:[%s433 + $0x60] sm:$0xff] %v3928
        %3990 = vst [vmem:[%s433 + $0x68] sm:$0xff] %v3930
        %3991 = vst [vmem:[%s433 + $0x70] sm:$0xff] %v3933
        %3992 = vst [vmem:[%s433 + $0x78] sm:$0xff] %v3935
        %3993 = vst [vmem:[%s433 + $0x80] sm:$0xff] %v3938
        %3994 = vst [vmem:[%s433 + $0x88] sm:$0xff] %v3940
        %3995 = vst [vmem:[%s433 + $0x90] sm:$0xff] %v3943
        %3996 = vst [vmem:[%s433 + $0x98] sm:$0xff] %v3945
        %3997 = vst [vmem:[%s433 + $0xa0] sm:$0xff] %v3948
        %3998 = vst [vmem:[%s433 + $0xa8] sm:$0xff] %v3950
        %3999 = vst [vmem:[%s433 + $0xb0] sm:$0xff] %v3953
        %4000 = vst [vmem:[%s433 + $0xb8] sm:$0xff] %v3955
        %4001 = vst [vmem:[%s433 + $0xc0] sm:$0xff] %v3958
        %4002 = vst [vmem:[%s433 + $0xc8] sm:$0xff] %v3960
        %4003 = vst [vmem:[%s433 + $0xd0] sm:$0xff] %v3963
        %4004 = vst [vmem:[%s433 + $0xd8] sm:$0xff] %v3965
        %4005 = vst [vmem:[%s433 + $0xe0] sm:$0xff] %v3968
        %4006 = vst [vmem:[%s433 + $0xe8] sm:$0xff] %v3970
        %4007 = vst [vmem:[%s433 + $0xf0] sm:$0xff] %v3973
        %4008 = vst [vmem:[%s433 + $0xf8] sm:$0xff] %v3975
        %s4009 = sand.u32 %s231, 1
        %s4010 = scalar_lea.sflag [#allocation4], %s4009
        %s4011 = sand.u32 %s231, 1
        %s4012 = smul.addr %s4011, 256
        %s4013 = scalar_lea.vmem [#allocation13], %s4012
        // Predicated region
        $region81: #{tpu_custom_call.1} parent=55 // pred_check
          %p4014 = pneg %p241
        $region82: #{tpu_custom_call.1} parent=55 // pred_check_branch
          %4016 = sbr.rel (%p4014) target = $region84
        $region83: #{tpu_custom_call.1} parent=55 // pred_region
          %s4017 = smul.u32 32, %s29
          %4019 = vsyncadd %s4010, 0
          %s4020 = smul.addr %s4017, 8
          %s4021 = scalar_lea.hbm %s9, %s4020
          %s4022 = sshll.u32 %s4013, 4
          %s4023 = int_to_ptr.vmem [resolvable:$true] %s4022
          %s4024 = sshll.u32 %s4021, 4
          %s4025 = int_to_ptr.hbm [resolvable:$true] %s4024
          %4030 = dma.vmem_to_hbm [thread:$0]  %s4023, 4096, %s4025, %s4010, 128, 128, 8
        $region84: #{tpu_custom_call.1} parent=55 // pred_fallthru
          _
      $region56: #{tpu_custom_call.1} parent=5 // pred_fallthru
        _
      %p4031 = scmp.le.s32.totalorder 2, %s24
      // Predicated region
      $region85: #{tpu_custom_call.1} parent=5 // pred_check
        %p4032 = pneg %p4031
      $region86: #{tpu_custom_call.1} parent=5 // pred_check_branch
        %4034 = sbr.rel (%p4032) target = $region88
      $region87: #{tpu_custom_call.1} parent=5 // pred_region
        %s4035 = ssub.s32 %s24, 2
        // Predicated region
        $region89: #{tpu_custom_call.1} parent=87 // pred_check
          %p4036 = pneg %p247
        $region90: #{tpu_custom_call.1} parent=87 // pred_check_branch
          %4038 = sbr.rel (%p4036) target = $region92
        $region91: #{tpu_custom_call.1} parent=87 // pred_region
          %s4039 = sand.u32 %s232, 1
          %s4040 = scalar_lea.sflag [#allocation4], %s4039
          %s4041 = sand.u32 %s232, 1
          %s4042 = smul.addr %s4041, 256
          %s4043 = scalar_lea.vmem [#allocation13], %s4042
          %4045 = dma.done %s4040, 4096
        $region92: #{tpu_custom_call.1} parent=87 // pred_fallthru
          _
      $region88: #{tpu_custom_call.1} parent=5 // pred_fallthru
        _
    $region6: #{tpu_custom_call.1} parent=1 // loop_footer
      %s28 = sadd.s32 1, %s24
    $region7: #{tpu_custom_call.1} parent=1 // loop_footer_branch
      %23 = sbr.rel target = $region3
    $region8: #{tpu_custom_call.1} parent=1 // loop_exit
      _
    %4046 = vsyncpa [#allocation3], 1
    %s4047 = scalar_lea.sflag [#allocation3], 1
    %4048 = vsyncpa %s4047, 1
    %4049 = vsyncpa [#allocation6], 1
    %4050 = vsyncpa [#allocation9], 1
    %4051 = vsyncpa [#allocation12], 1
    %4052 = vsyncpa [#allocation4], 1
    %s4053 = scalar_lea.sflag [#allocation4], 1
    %4054 = vsyncpa %s4053, 1

</llo_original>
